<compile_context>
chip_gen: v6e
topology: v6e:2x2x1
jax: 0.10.0
libtpu: 0.0.40
codegen_flags: <defaults>
</compile_context>

<pallas_src>
import functools
import math

import jax
import jax.numpy as jnp
from jax import lax
from jax.experimental import pallas as pl
from jax.experimental.pallas import tpu as pltpu


# --------------------------- rotary tables (module buffers, plain JAX) ------

def make_axial_pos(h, w, dtype=jnp.float32):
    h_pos = jnp.linspace(-1.0, 1.0, h + 1, dtype=dtype)
    w_pos = jnp.linspace(-1.0, 1.0, w + 1, dtype=dtype)
    h_pos = (h_pos[:-1] + h_pos[1:]) / 2
    w_pos = (w_pos[:-1] + w_pos[1:]) / 2
    hh, ww = jnp.meshgrid(h_pos, w_pos, indexing="ij")
    return jnp.stack([hh, ww], axis=-1).reshape(h * w, 2)


def make_rotary_tables(head_dim):
    """cos/sin buffers of shape (3073, head_dim // 4), exactly as the module."""
    log_min = math.log(math.pi)
    log_max = math.log(10 * math.pi)
    freqs = jnp.exp(jnp.linspace(log_min, log_max, head_dim // 8))
    pos = make_axial_pos(32, 32 * 3)                       # (3072, 2)
    pos = jnp.concatenate([jnp.zeros((1, 2), jnp.float32), pos], axis=0)
    theta_h = pos[:, 0:1] * freqs
    theta_w = pos[:, 1:2] * freqs
    theta = jnp.concatenate([theta_h, theta_w], axis=-1)   # (3073, head_dim//4)
    return jnp.cos(theta), jnp.sin(theta)


# ----------------- kernel 1: LayerNorm + fused qkv proj + rotary ------------

def _ln_qkv_rope_kernel(x_ref, g_ref, b_ref, w_ref, cos_ref, sin_ref,
                        q_ref, k_ref, v_ref, *, n_heads, head_dim, rot_half):
    """One (1, block_r, dim) slab: LN -> one (dim,3dim) GEMM -> rotary ->
    head-major (H, block_r, head_dim) writeback."""
    block_r = x_ref.shape[1]
    dim = n_heads * head_dim

    x = x_ref[0].astype(jnp.float32)                       # (block_r, dim)

    # LayerNorm (eps = 1e-5, nn.LayerNorm default), f32 math.
    mean = jnp.mean(x, axis=-1, keepdims=True)
    xc = x - mean
    var = jnp.mean(xc * xc, axis=-1, keepdims=True)
    xn = xc * lax.rsqrt(var + 1e-5)
    xn = (xn * g_ref[...] + b_ref[...]).astype(jnp.bfloat16)

    # One fused qkv projection (softmax scale pre-folded into the q columns).
    qkv = jnp.dot(xn, w_ref[...], preferred_element_type=jnp.float32)  # (br,3dim)

    def to_heads(t):      # (block_r, dim) -> (H, block_r, head_dim)
        return jnp.transpose(t.reshape(block_r, n_heads, head_dim), (1, 0, 2))

    cos = cos_ref[...][None, :, :]                          # (1, block_r, rh)
    sin = sin_ref[...][None, :, :]

    def rope(t):          # (H, block_r, head_dim), f32
        t1 = t[:, :, :rot_half]
        t2 = t[:, :, rot_half:2 * rot_half]
        rest = t[:, :, 2 * rot_half:]
        return jnp.concatenate(
            [t1 * cos - t2 * sin, t1 * sin + t2 * cos, rest], axis=-1)

    q_ref[0] = rope(to_heads(qkv[:, :dim])).astype(q_ref.dtype)
    k_ref[0] = rope(to_heads(qkv[:, dim:2 * dim])).astype(k_ref.dtype)
    v_ref[0] = to_heads(qkv[:, 2 * dim:]).astype(v_ref.dtype)


# ------- kernel 2: causal flash attention (triangular grid) + out proj ------

def _flash_attn_kernel(qi_tab, ki_tab, q_ref, k_ref, v_ref, wout_ref, o_ref,
                       m_sc, l_sc, acc_sc, *, block_q, block_kv,
                       n_heads, head_dim):
    """Online-softmax causal attention over lower-triangular tile pairs.

    grid = (batch, step); (qi, ki) come from scalar-prefetched SMEM tables so
    only causally-live kv tiles are DMA'd / iterated.
    """
    step = pl.program_id(1)
    qi = qi_tab[step]
    ki = ki_tab[step]
    q_start = qi * block_q
    kv_start = ki * block_kv
    is_first = ki == 0
    # last kv tile of this q tile == first one whose end reaches the q tile end
    is_last = (kv_start + block_kv) >= (q_start + block_q)
    # tiles crossing the causal diagonal need the mask; strictly-below don't
    needs_mask = (kv_start + block_kv - 1) > q_start

    @pl.when(is_first)
    def _init():
        m_sc[...] = jnp.full(m_sc.shape, -1e30, m_sc.dtype)
        l_sc[...] = jnp.zeros(l_sc.shape, l_sc.dtype)
        acc_sc[...] = jnp.zeros(acc_sc.shape, acc_sc.dtype)

    q = q_ref[0]                                            # (H, bq, hd) bf16
    k = k_ref[0]                                            # (H, bk, hd) bf16
    v = v_ref[0]
    # scale already folded into q; f32 accumulation on the MXU.
    s = jnp.einsum("hqd,hkd->hqk", q, k, preferred_element_type=jnp.float32)

    def online_softmax_update(scores):
        m_prev = m_sc[...]
        m_new = jnp.maximum(m_prev, jnp.max(scores, axis=-1, keepdims=True))
        alpha = jnp.exp(m_prev - m_new)
        p = jnp.exp(scores - m_new)
        l_sc[...] = alpha * l_sc[...] + jnp.sum(p, axis=-1, keepdims=True)
        acc_sc[...] = alpha * acc_sc[...] + jnp.einsum(
            "hqk,hkd->hqd", p.astype(jnp.bfloat16), v,
            preferred_element_type=jnp.float32)
        m_sc[...] = m_new

    @pl.when(needs_mask)                       # diagonal-crossing tiles
    def _masked():
        rows = q_start + lax.broadcasted_iota(jnp.int32, (block_q, block_kv), 0)
        cols = kv_start + lax.broadcasted_iota(jnp.int32, (block_q, block_kv), 1)
        online_softmax_update(jnp.where((rows >= cols)[None, :, :], s, -1e30))

    @pl.when(jnp.logical_not(needs_mask))      # mask-free fast path
    def _unmasked():
        online_softmax_update(s)

    @pl.when(is_last)
    def _finalize():
        attn = acc_sc[...] * pl.reciprocal(l_sc[...], approx=True)  # (H,bq,hd)
        attn = jnp.transpose(attn.astype(jnp.bfloat16), (1, 0, 2))  # (bq,H,hd)
        attn = attn.reshape(block_q, n_heads * head_dim)            # (bq, dim)
        out = jnp.dot(attn, wout_ref[...],                          # K = dim
                      preferred_element_type=jnp.float32)
        o_ref[0] = out.astype(o_ref.dtype)


# ---------------------------------- wrapper ----------------------------------

def _round_up(x, m):
    return (x + m - 1) // m * m


def self_attention_forward(x, ln_gamma, ln_beta, w_qkv, w_out, cos, sin, *,
                           head_dim, block_r=256, block_q=256, block_kv=256):
    """SelfAttention forward (cache=None path).

    x:       (B, L, dim)
    w_qkv:   (3*dim, dim)   nn.Linear weight (out_features, in_features)
    w_out:   (dim, dim)     nn.Linear weight
    cos/sin: (>=L, head_dim//4) module rotary buffers
    Tile defaults target v6e/v7x (256x256 MXU); on v5e use block_kv=128.
    """
    B, L, dim = x.shape
    assert dim % head_dim == 0 and head_dim % 8 == 0
    n_heads = dim // head_dim
    rot_half = head_dim // 4
    assert cos.shape[0] >= L and sin.shape[0] >= L

    f32, bf16 = jnp.float32, jnp.bfloat16

    # Clamp tiles for short sequences, then pad L to a common tile multiple.
    lim = _round_up(L, 8)
    block_r, block_q, block_kv = (min(b, lim) for b in (block_r, block_q, block_kv))
    L_pad = _round_up(L, math.lcm(block_r, block_q, block_kv))
    if L_pad != L:
        # zero padding: padded keys are causally masked for all real rows and
        # padded query rows are sliced off below.
        x = jnp.pad(x, ((0, 0), (0, L_pad - L), (0, 0)))
    cos_p = cos[:L].astype(f32)
    sin_p = sin[:L].astype(f32)
    if L_pad != L:
        cos_p = jnp.pad(cos_p, ((0, L_pad - L), (0, 0)))
        sin_p = jnp.pad(sin_p, ((0, L_pad - L), (0, 0)))

    # ---- one-time weight prep (layout plumbing, plain JAX) ------------------
    scale = 1.0 / math.sqrt(head_dim)          # folded into the q projection
    wq_t = w_qkv[0 * dim:1 * dim].astype(f32).T * scale
    wk_t = w_qkv[1 * dim:2 * dim].astype(f32).T
    wv_t = w_qkv[2 * dim:3 * dim].astype(f32).T
    w_fused = jnp.concatenate([wq_t, wk_t, wv_t], axis=1).astype(bf16)  # (dim,3dim)
    w_out_t = w_out.astype(f32).T.astype(bf16)                          # (dim,dim)

    # ---- kernel 1: LayerNorm + fused qkv projection + rotary (head-major) ---
    qkv_shape = jax.ShapeDtypeStruct((B, n_heads, L_pad, head_dim), bf16)
    kernel1 = functools.partial(_ln_qkv_rope_kernel, n_heads=n_heads,
                                head_dim=head_dim, rot_half=rot_half)
    hm_spec = pl.BlockSpec((1, n_heads, block_r, head_dim),
                           lambda b, r: (b, 0, r, 0))
    q_h, k_h, v_h = pl.pallas_call(
        kernel1,
        out_shape=(qkv_shape, qkv_shape, qkv_shape),
        grid=(B, L_pad // block_r),
        in_specs=[
            pl.BlockSpec((1, block_r, dim), lambda b, r: (b, r, 0)),
            pl.BlockSpec((1, dim), lambda b, r: (0, 0)),
            pl.BlockSpec((1, dim), lambda b, r: (0, 0)),
            pl.BlockSpec((dim, 3 * dim), lambda b, r: (0, 0)),
            pl.BlockSpec((block_r, rot_half), lambda b, r: (r, 0)),
            pl.BlockSpec((block_r, rot_half), lambda b, r: (r, 0)),
        ],
        out_specs=(hm_spec, hm_spec, hm_spec),
        compiler_params=pltpu.CompilerParams(
            dimension_semantics=("parallel", "parallel"),
            vmem_limit_bytes=32 * 1024 * 1024),
    )(x,
      ln_gamma.reshape(1, dim).astype(f32),
      ln_beta.reshape(1, dim).astype(f32),
      w_fused, cos_p, sin_p)

    # ---- kernel 2: causal flash attention over lower-triangular tiles -------
    n_q, n_kv = L_pad // block_q, L_pad // block_kv
    pairs = [(qi, ki)
             for qi in range(n_q)
             for ki in range(min(n_kv,
                                 (qi * block_q + block_q - 1) // block_kv + 1))]
    qi_tab = jnp.asarray([p[0] for p in pairs], jnp.int32)
    ki_tab = jnp.asarray([p[1] for p in pairs], jnp.int32)
    n_steps = len(pairs)

    kernel2 = functools.partial(_flash_attn_kernel, block_q=block_q,
                                block_kv=block_kv, n_heads=n_heads,
                                head_dim=head_dim)
    out = pl.pallas_call(
        kernel2,
        out_shape=jax.ShapeDtypeStruct((B, L_pad, dim), x.dtype),
        grid_spec=pltpu.PrefetchScalarGridSpec(
            num_scalar_prefetch=2,
            grid=(B, n_steps),
            in_specs=[
                pl.BlockSpec((1, n_heads, block_q, head_dim),
                             lambda b, s, qt, kt: (b, 0, qt[s], 0)),
                pl.BlockSpec((1, n_heads, block_kv, head_dim),
                             lambda b, s, qt, kt: (b, 0, kt[s], 0)),
                pl.BlockSpec((1, n_heads, block_kv, head_dim),
                             lambda b, s, qt, kt: (b, 0, kt[s], 0)),
                pl.BlockSpec((dim, dim), lambda b, s, qt, kt: (0, 0)),
            ],
            out_specs=pl.BlockSpec((1, block_q, dim),
                                   lambda b, s, qt, kt: (b, qt[s], 0)),
            scratch_shapes=[
                pltpu.VMEM((n_heads, block_q, 1), jnp.float32),          # max
                pltpu.VMEM((n_heads, block_q, 1), jnp.float32),          # sum
                pltpu.VMEM((n_heads, block_q, head_dim), jnp.float32),   # acc
            ]),
        compiler_params=pltpu.CompilerParams(
            dimension_semantics=("parallel", "arbitrary"),
            vmem_limit_bytes=32 * 1024 * 1024),
    )(qi_tab, ki_tab, q_h, k_h, v_h, w_out_t)

    return out[:, :L] if L_pad != L else out


# ------------------------------ pure-JAX reference ---------------------------

def reference_forward(x, ln_gamma, ln_beta, w_qkv, w_out, cos, sin, *, head_dim):
    B, L, dim = x.shape
    n_heads = dim // head_dim
    rot_half = head_dim // 4
    mean = jnp.mean(x, -1, keepdims=True)
    var = jnp.mean((x - mean) ** 2, -1, keepdims=True)
    xn = (x - mean) / jnp.sqrt(var + 1e-5) * ln_gamma + ln_beta
    qkv = (xn @ w_qkv.T).reshape(B, L, 3, n_heads, head_dim)
    c = cos[:L][None, :, None, :]
    s = sin[:L][None, :, None, :]

    def rope(t):
        t1 = t[..., :rot_half]
        t2 = t[..., rot_half:2 * rot_half]
        rest = t[..., 2 * rot_half:]
        return jnp.concatenate([t1 * c - t2 * s, t1 * s + t2 * c, rest], -1)

    q, k, v = rope(qkv[:, :, 0]), rope(qkv[:, :, 1]), qkv[:, :, 2]
    att = jnp.einsum("bqhd,bkhd->bhqk", q, k) / math.sqrt(head_dim)
    mask = jnp.tril(jnp.ones((L, L), bool))
    att = jnp.where(mask[None, None], att, -jnp.inf)
    p = jax.nn.softmax(att, axis=-1)
    o = jnp.einsum("bhqk,bkhd->bqhd", p, v).reshape(B, L, dim)
    return o @ w_out.T


# ------------------------------------ main ------------------------------------

if __name__ == "__main__":
    # Small module-consistent shapes: dim=256, head_dim=128 (=> 2 heads,
    # head_dim//8 = 16 rotary freqs), L=64, B=2.  head_dim=128 keeps all
    # in-kernel head reshapes/transposes lane-aligned.
    B, L, dim, head_dim = 2, 64, 256, 128

    key = jax.random.PRNGKey(0)
    kx, kqkv, kout = jax.random.split(key, 3)
    x = jax.random.normal(kx, (B, L, dim), jnp.float32)

    ln_gamma = jnp.ones((dim,), jnp.float32)               # nn.LayerNorm defaults
    ln_beta = jnp.zeros((dim,), jnp.float32)
    bound = 1.0 / math.sqrt(dim)
    w_qkv = jax.random.uniform(kqkv, (3 * dim, dim), jnp.float32, -bound, bound)
    # NOTE: the module zero-inits out_proj; a random weight is used here so the
    # numerical check actually exercises the attention path.
    w_out = jax.random.uniform(kout, (dim, dim), jnp.float32, -bound, bound)

    cos_buf, sin_buf = make_rotary_tables(head_dim)        # (3073, head_dim//4)

    fwd = jax.jit(functools.partial(self_attention_forward, head_dim=head_dim,
                                    block_r=32, block_q=32, block_kv=32))
    out = jax.block_until_ready(fwd(x, ln_gamma, ln_beta, w_qkv, w_out,
                                    cos_buf, sin_buf))

    assert out.shape == (B, L, dim)
    assert bool(jnp.all(jnp.isfinite(out)))

    ref = reference_forward(x, ln_gamma, ln_beta, w_qkv, w_out,
                            cos_buf, sin_buf, head_dim=head_dim)
    max_err = float(jnp.max(jnp.abs(out - ref)))
    assert max_err < 3e-2, f"mismatch vs reference: max|err|={max_err}"
    print("KERNEL_OK")
</pallas_src>

<mosaic_0001>
module attributes {stable_mosaic.version = 11 : i64} {
  func.func @_ln_qkv_rope_kernel(%arg0: i32, %arg1: i32, %arg2: memref<1x32x256xf32, #tpu.memory_space<vmem>>, %arg3: memref<1x256xf32, #tpu.memory_space<vmem>>, %arg4: memref<1x256xf32, #tpu.memory_space<vmem>>, %arg5: memref<256x768xbf16, #tpu.memory_space<vmem>>, %arg6: memref<32x32xf32, #tpu.memory_space<vmem>>, %arg7: memref<32x32xf32, #tpu.memory_space<vmem>>, %arg8: memref<1x2x32x128xbf16, #tpu.memory_space<vmem>>, %arg9: memref<1x2x32x128xbf16, #tpu.memory_space<vmem>>, %arg10: memref<1x2x32x128xbf16, #tpu.memory_space<vmem>>) attributes {dimension_semantics = [#tpu.dimension_semantics<parallel>, #tpu.dimension_semantics<parallel>], iteration_bounds = array<i64: 2, 2>, scalar_prefetch = 0 : i64, scratch_operands = 0 : i64, tpu.core_type = #tpu.core_type<tc>, window_params = [{transform_indices = @transform_0, window_bounds = array<i64: 1, 32, 256>}, {pipeline_mode = #tpu.pipeline_mode<synchronous>, transform_indices = @transform_1, window_bounds = array<i64: 1, 256>}, {pipeline_mode = #tpu.pipeline_mode<synchronous>, transform_indices = @transform_2, window_bounds = array<i64: 1, 256>}, {pipeline_mode = #tpu.pipeline_mode<synchronous>, transform_indices = @transform_3, window_bounds = array<i64: 256, 768>}, {transform_indices = @transform_4, window_bounds = array<i64: 32, 32>}, {transform_indices = @transform_5, window_bounds = array<i64: 32, 32>}, {transform_indices = @transform_6, window_bounds = array<i64: 1, 2, 32, 128>}, {transform_indices = @transform_7, window_bounds = array<i64: 1, 2, 32, 128>}, {transform_indices = @transform_8, window_bounds = array<i64: 1, 2, 32, 128>}]} {
    %c0 = arith.constant 0 : index
    %c0_0 = arith.constant 0 : index
    %c0_1 = arith.constant 0 : index
    %0 = vector.load %arg2[%c0, %c0_0, %c0_1] : memref<1x32x256xf32, #tpu.memory_space<vmem>>, vector<1x32x256xf32>
    %1 = vector.shape_cast %0 : vector<1x32x256xf32> to vector<32x256xf32>
    %cst = arith.constant dense<0.000000e+00> : vector<32xf32>
    %2 = vector.multi_reduction <add>, %1, %cst [1] : vector<32x256xf32> to vector<32xf32>
    %3 = vector.shape_cast %2 : vector<32xf32> to vector<32x1xf32>
    %cst_2 = arith.constant 2.560000e+02 : f32
    %4 = vector.broadcast %cst_2 : f32 to vector<32x1xf32>
    %5 = arith.divf %3, %4 : vector<32x1xf32>
    %6 = vector.broadcast %5 : vector<32x1xf32> to vector<32x256xf32>
    %7 = arith.subf %1, %6 : vector<32x256xf32>
    %8 = arith.mulf %7, %7 : vector<32x256xf32>
    %cst_3 = arith.constant dense<0.000000e+00> : vector<32xf32>
    %9 = vector.multi_reduction <add>, %8, %cst_3 [1] : vector<32x256xf32> to vector<32xf32>
    %10 = vector.shape_cast %9 : vector<32xf32> to vector<32x1xf32>
    %cst_4 = arith.constant 2.560000e+02 : f32
    %11 = vector.broadcast %cst_4 : f32 to vector<32x1xf32>
    %12 = arith.divf %10, %11 : vector<32x1xf32>
    %cst_5 = arith.constant 9.99999974E-6 : f32
    %13 = vector.broadcast %cst_5 : f32 to vector<32x1xf32>
    %14 = arith.addf %12, %13 : vector<32x1xf32>
    %15 = math.rsqrt %14 : vector<32x1xf32>
    %16 = vector.broadcast %15 : vector<32x1xf32> to vector<32x256xf32>
    %17 = arith.mulf %7, %16 : vector<32x256xf32>
    %c0_6 = arith.constant 0 : index
    %c0_7 = arith.constant 0 : index
    %18 = vector.load %arg3[%c0_6, %c0_7] : memref<1x256xf32, #tpu.memory_space<vmem>>, vector<1x256xf32>
    %19 = vector.broadcast %18 : vector<1x256xf32> to vector<32x256xf32>
    %20 = arith.mulf %17, %19 : vector<32x256xf32>
    %c0_8 = arith.constant 0 : index
    %c0_9 = arith.constant 0 : index
    %21 = vector.load %arg4[%c0_8, %c0_9] : memref<1x256xf32, #tpu.memory_space<vmem>>, vector<1x256xf32>
    %22 = vector.broadcast %21 : vector<1x256xf32> to vector<32x256xf32>
    %23 = arith.addf %20, %22 : vector<32x256xf32>
    %24 = arith.truncf %23 : vector<32x256xf32> to vector<32x256xbf16>
    %c0_10 = arith.constant 0 : index
    %c0_11 = arith.constant 0 : index
    %25 = vector.load %arg5[%c0_10, %c0_11] : memref<256x768xbf16, #tpu.memory_space<vmem>>, vector<256x768xbf16>
    %cst_12 = arith.constant dense<0.000000e+00> : vector<32x768xf32>
    %26 = tpu.matmul %24, %25, %cst_12 {dimension_numbers = #tpu.dot_dimension_numbers<[1], [0], [0], [1], [0, 0, 1, 1], [], []>} : vector<32x256xbf16>, vector<256x768xbf16>, vector<32x768xf32> -> vector<32x768xf32>
    %c0_13 = arith.constant 0 : index
    %c0_14 = arith.constant 0 : index
    %27 = vector.load %arg6[%c0_13, %c0_14] : memref<32x32xf32, #tpu.memory_space<vmem>>, vector<32x32xf32>
    %28 = vector.shape_cast %27 : vector<32x32xf32> to vector<1x32x32xf32>
    %c0_15 = arith.constant 0 : index
    %c0_16 = arith.constant 0 : index
    %29 = vector.load %arg7[%c0_15, %c0_16] : memref<32x32xf32, #tpu.memory_space<vmem>>, vector<32x32xf32>
    %30 = vector.shape_cast %29 : vector<32x32xf32> to vector<1x32x32xf32>
    %31 = vector.extract_strided_slice %26 {offsets = [0, 0], sizes = [32, 256], strides = [1, 1]} : vector<32x768xf32> to vector<32x256xf32>
    %32 = vector.shape_cast %31 : vector<32x256xf32> to vector<32x2x128xf32>
    %33 = tpu.transpose %32, [1, 0, 2] : vector<32x2x128xf32> -> vector<2x32x128xf32>
    %34 = vector.extract_strided_slice %33 {offsets = [0, 0, 0], sizes = [2, 32, 32], strides = [1, 1, 1]} : vector<2x32x128xf32> to vector<2x32x32xf32>
    %35 = vector.extract_strided_slice %33 {offsets = [0, 0, 32], sizes = [2, 32, 32], strides = [1, 1, 1]} : vector<2x32x128xf32> to vector<2x32x32xf32>
    %36 = vector.extract_strided_slice %33 {offsets = [0, 0, 64], sizes = [2, 32, 64], strides = [1, 1, 1]} : vector<2x32x128xf32> to vector<2x32x64xf32>
    %37 = vector.broadcast %28 : vector<1x32x32xf32> to vector<2x32x32xf32>
    %38 = arith.mulf %34, %37 : vector<2x32x32xf32>
    %39 = vector.broadcast %30 : vector<1x32x32xf32> to vector<2x32x32xf32>
    %40 = arith.mulf %35, %39 : vector<2x32x32xf32>
    %41 = arith.subf %38, %40 : vector<2x32x32xf32>
    %42 = vector.broadcast %30 : vector<1x32x32xf32> to vector<2x32x32xf32>
    %43 = arith.mulf %34, %42 : vector<2x32x32xf32>
    %44 = vector.broadcast %28 : vector<1x32x32xf32> to vector<2x32x32xf32>
    %45 = arith.mulf %35, %44 : vector<2x32x32xf32>
    %46 = arith.addf %43, %45 : vector<2x32x32xf32>
    %47 = tpu.concatenate %41, %46, %36 in 2 : vector<2x32x32xf32>, vector<2x32x32xf32>, vector<2x32x64xf32> -> vector<2x32x128xf32>
    %48 = arith.truncf %47 : vector<2x32x128xf32> to vector<2x32x128xbf16>
    %c0_17 = arith.constant 0 : index
    %c0_18 = arith.constant 0 : index
    %c0_19 = arith.constant 0 : index
    %c0_20 = arith.constant 0 : index
    %49 = vector.load %arg8[%c0_17, %c0_18, %c0_19, %c0_20] : memref<1x2x32x128xbf16, #tpu.memory_space<vmem>>, vector<1x2x32x128xbf16>
    %50 = vector.shape_cast %49 : vector<1x2x32x128xbf16> to vector<2x32x128xbf16>
    %51 = vector.shape_cast %48 : vector<2x32x128xbf16> to vector<1x2x32x128xbf16>
    tpu.vector_store %arg8[%c0_17, %c0_18, %c0_19, %c0_20], %51 {strides = array<i32>} : memref<1x2x32x128xbf16, #tpu.memory_space<vmem>>, vector<1x2x32x128xbf16>,
    %52 = vector.extract_strided_slice %26 {offsets = [0, 256], sizes = [32, 256], strides = [1, 1]} : vector<32x768xf32> to vector<32x256xf32>
    %53 = vector.shape_cast %52 : vector<32x256xf32> to vector<32x2x128xf32>
    %54 = tpu.transpose %53, [1, 0, 2] : vector<32x2x128xf32> -> vector<2x32x128xf32>
    %55 = vector.extract_strided_slice %54 {offsets = [0, 0, 0], sizes = [2, 32, 32], strides = [1, 1, 1]} : vector<2x32x128xf32> to vector<2x32x32xf32>
    %56 = vector.extract_strided_slice %54 {offsets = [0, 0, 32], sizes = [2, 32, 32], strides = [1, 1, 1]} : vector<2x32x128xf32> to vector<2x32x32xf32>
    %57 = vector.extract_strided_slice %54 {offsets = [0, 0, 64], sizes = [2, 32, 64], strides = [1, 1, 1]} : vector<2x32x128xf32> to vector<2x32x64xf32>
    %58 = vector.broadcast %28 : vector<1x32x32xf32> to vector<2x32x32xf32>
    %59 = arith.mulf %55, %58 : vector<2x32x32xf32>
    %60 = vector.broadcast %30 : vector<1x32x32xf32> to vector<2x32x32xf32>
    %61 = arith.mulf %56, %60 : vector<2x32x32xf32>
    %62 = arith.subf %59, %61 : vector<2x32x32xf32>
    %63 = vector.broadcast %30 : vector<1x32x32xf32> to vector<2x32x32xf32>
    %64 = arith.mulf %55, %63 : vector<2x32x32xf32>
    %65 = vector.broadcast %28 : vector<1x32x32xf32> to vector<2x32x32xf32>
    %66 = arith.mulf %56, %65 : vector<2x32x32xf32>
    %67 = arith.addf %64, %66 : vector<2x32x32xf32>
    %68 = tpu.concatenate %62, %67, %57 in 2 : vector<2x32x32xf32>, vector<2x32x32xf32>, vector<2x32x64xf32> -> vector<2x32x128xf32>
    %69 = arith.truncf %68 : vector<2x32x128xf32> to vector<2x32x128xbf16>
    %c0_21 = arith.constant 0 : index
    %c0_22 = arith.constant 0 : index
    %c0_23 = arith.constant 0 : index
    %c0_24 = arith.constant 0 : index
    %70 = vector.load %arg9[%c0_21, %c0_22, %c0_23, %c0_24] : memref<1x2x32x128xbf16, #tpu.memory_space<vmem>>, vector<1x2x32x128xbf16>
    %71 = vector.shape_cast %70 : vector<1x2x32x128xbf16> to vector<2x32x128xbf16>
    %72 = vector.shape_cast %69 : vector<2x32x128xbf16> to vector<1x2x32x128xbf16>
    tpu.vector_store %arg9[%c0_21, %c0_22, %c0_23, %c0_24], %72 {strides = array<i32>} : memref<1x2x32x128xbf16, #tpu.memory_space<vmem>>, vector<1x2x32x128xbf16>,
    %73 = vector.extract_strided_slice %26 {offsets = [0, 512], sizes = [32, 256], strides = [1, 1]} : vector<32x768xf32> to vector<32x256xf32>
    %74 = vector.shape_cast %73 : vector<32x256xf32> to vector<32x2x128xf32>
    %75 = tpu.transpose %74, [1, 0, 2] : vector<32x2x128xf32> -> vector<2x32x128xf32>
    %76 = arith.truncf %75 : vector<2x32x128xf32> to vector<2x32x128xbf16>
    %c0_25 = arith.constant 0 : index
    %c0_26 = arith.constant 0 : index
    %c0_27 = arith.constant 0 : index
    %c0_28 = arith.constant 0 : index
    %77 = vector.load %arg10[%c0_25, %c0_26, %c0_27, %c0_28] : memref<1x2x32x128xbf16, #tpu.memory_space<vmem>>, vector<1x2x32x128xbf16>
    %78 = vector.shape_cast %77 : vector<1x2x32x128xbf16> to vector<2x32x128xbf16>
    %79 = vector.shape_cast %76 : vector<2x32x128xbf16> to vector<1x2x32x128xbf16>
    tpu.vector_store %arg10[%c0_25, %c0_26, %c0_27, %c0_28], %79 {strides = array<i32>} : memref<1x2x32x128xbf16, #tpu.memory_space<vmem>>, vector<1x2x32x128xbf16>,
    return
  }
  func.func @transform_0(%arg0: i32, %arg1: i32) -> (i32, i32, i32) {
    %c0_i32 = arith.constant 0 : i32
    %c0_i32_0 = arith.constant 0 : i32
    return %arg0, %arg1, %c0_i32 : i32, i32, i32
  }
  func.func @transform_1(%arg0: i32, %arg1: i32) -> (i32, i32) {
    %c0_i32 = arith.constant 0 : i32
    %c0_i32_0 = arith.constant 0 : i32
    %c0_i32_1 = arith.constant 0 : i32
    return %c0_i32, %c0_i32_0 : i32, i32
  }
  func.func @transform_2(%arg0: i32, %arg1: i32) -> (i32, i32) {
    %c0_i32 = arith.constant 0 : i32
    %c0_i32_0 = arith.constant 0 : i32
    %c0_i32_1 = arith.constant 0 : i32
    return %c0_i32, %c0_i32_0 : i32, i32
  }
  func.func @transform_3(%arg0: i32, %arg1: i32) -> (i32, i32) {
    %c0_i32 = arith.constant 0 : i32
    %c0_i32_0 = arith.constant 0 : i32
    %c0_i32_1 = arith.constant 0 : i32
    return %c0_i32, %c0_i32_0 : i32, i32
  }
  func.func @transform_4(%arg0: i32, %arg1: i32) -> (i32, i32) {
    %c0_i32 = arith.constant 0 : i32
    %c0_i32_0 = arith.constant 0 : i32
    return %arg1, %c0_i32 : i32, i32
  }
  func.func @transform_5(%arg0: i32, %arg1: i32) -> (i32, i32) {
    %c0_i32 = arith.constant 0 : i32
    %c0_i32_0 = arith.constant 0 : i32
    return %arg1, %c0_i32 : i32, i32
  }
  func.func @transform_6(%arg0: i32, %arg1: i32) -> (i32, i32, i32, i32) {
    %c0_i32 = arith.constant 0 : i32
    %c0_i32_0 = arith.constant 0 : i32
    %c0_i32_1 = arith.constant 0 : i32
    return %arg0, %c0_i32, %arg1, %c0_i32_0 : i32, i32, i32, i32
  }
  func.func @transform_7(%arg0: i32, %arg1: i32) -> (i32, i32, i32, i32) {
    %c0_i32 = arith.constant 0 : i32
    %c0_i32_0 = arith.constant 0 : i32
    %c0_i32_1 = arith.constant 0 : i32
    return %arg0, %c0_i32, %arg1, %c0_i32_0 : i32, i32, i32, i32
  }
  func.func @transform_8(%arg0: i32, %arg1: i32) -> (i32, i32, i32, i32) {
    %c0_i32 = arith.constant 0 : i32
    %c0_i32_0 = arith.constant 0 : i32
    %c0_i32_1 = arith.constant 0 : i32
    return %arg0, %c0_i32, %arg1, %c0_i32_0 : i32, i32, i32, i32
  }
}

module attributes {stable_mosaic.version = 11 : i64} {
  func.func @_flash_attn_kernel(%arg0: i32, %arg1: i32, %arg2: memref<3xi32, #tpu.memory_space<smem>>, %arg3: memref<3xi32, #tpu.memory_space<smem>>, %arg4: memref<1x2x32x128xbf16, #tpu.memory_space<vmem>>, %arg5: memref<1x2x32x128xbf16, #tpu.memory_space<vmem>>, %arg6: memref<1x2x32x128xbf16, #tpu.memory_space<vmem>>, %arg7: memref<256x256xbf16, #tpu.memory_space<vmem>>, %arg8: memref<1x32x256xf32, #tpu.memory_space<vmem>>, %arg9: memref<2x32x1xf32, #tpu.memory_space<vmem>>, %arg10: memref<2x32x1xf32, #tpu.memory_space<vmem>>, %arg11: memref<2x32x128xf32, #tpu.memory_space<vmem>>) attributes {dimension_semantics = [#tpu.dimension_semantics<parallel>, #tpu.dimension_semantics<arbitrary>], iteration_bounds = array<i64: 2, 3>, scalar_prefetch = 2 : i64, scratch_operands = 3 : i64, tpu.core_type = #tpu.core_type<tc>, window_params = [{transform_indices = @transform_0, window_bounds = array<i64: 1, 2, 32, 128>}, {transform_indices = @transform_1, window_bounds = array<i64: 1, 2, 32, 128>}, {transform_indices = @transform_2, window_bounds = array<i64: 1, 2, 32, 128>}, {pipeline_mode = #tpu.pipeline_mode<synchronous>, transform_indices = @transform_3, window_bounds = array<i64: 256, 256>}, {transform_indices = @transform_4, window_bounds = array<i64: 1, 32, 256>}]} {
    %0 = arith.index_cast %arg1 : i32 to index
    %1 = memref.load %arg2[%0] : memref<3xi32, #tpu.memory_space<smem>>
    %2 = arith.index_cast %arg1 : i32 to index
    %3 = memref.load %arg3[%2] : memref<3xi32, #tpu.memory_space<smem>>
    %c32_i32 = arith.constant 32 : i32
    %4 = arith.muli %1, %c32_i32 : i32
    %c32_i32_0 = arith.constant 32 : i32
    %5 = arith.muli %3, %c32_i32_0 : i32
    %c0_i32 = arith.constant 0 : i32
    %6 = arith.cmpi eq, %3, %c0_i32 : i32
    %c32_i32_1 = arith.constant 32 : i32
    %7 = arith.addi %5, %c32_i32_1 : i32
    %c32_i32_2 = arith.constant 32 : i32
    %8 = arith.addi %4, %c32_i32_2 : i32
    %9 = arith.cmpi sge, %7, %8 : i32
    %c32_i32_3 = arith.constant 32 : i32
    %10 = arith.addi %5, %c32_i32_3 : i32
    %c1_i32 = arith.constant 1 : i32
    %11 = arith.subi %10, %c1_i32 : i32
    %12 = arith.cmpi sgt, %11, %4 : i32
    %13 = arith.extui %6 : i1 to i32
    %c0_i32_4 = arith.constant 0 : i32
    %14 = arith.cmpi ne, %13, %c0_i32_4 : i32
    scf.if %14 {
      %cst_19 = arith.constant -1.000000e+30 : f32
      %29 = vector.broadcast %cst_19 : f32 to vector<2x32x1xf32>
      %c0_20 = arith.constant 0 : index
      %c0_21 = arith.constant 0 : index
      %c0_22 = arith.constant 0 : index
      %30 = vector.load %arg9[%c0_20, %c0_21, %c0_22] : memref<2x32x1xf32, #tpu.memory_space<vmem>>, vector<2x32x1xf32>
      tpu.vector_store %arg9[%c0_20, %c0_21, %c0_22], %29 {strides = array<i32>} : memref<2x32x1xf32, #tpu.memory_space<vmem>>, vector<2x32x1xf32>,
      %cst_23 = arith.constant 0.000000e+00 : f32
      %31 = vector.broadcast %cst_23 : f32 to vector<2x32x1xf32>
      %c0_24 = arith.constant 0 : index
      %c0_25 = arith.constant 0 : index
      %c0_26 = arith.constant 0 : index
      %32 = vector.load %arg10[%c0_24, %c0_25, %c0_26] : memref<2x32x1xf32, #tpu.memory_space<vmem>>, vector<2x32x1xf32>
      tpu.vector_store %arg10[%c0_24, %c0_25, %c0_26], %31 {strides = array<i32>} : memref<2x32x1xf32, #tpu.memory_space<vmem>>, vector<2x32x1xf32>,
      %cst_27 = arith.constant 0.000000e+00 : f32
      %33 = vector.broadcast %cst_27 : f32 to vector<2x32x128xf32>
      %c0_28 = arith.constant 0 : index
      %c0_29 = arith.constant 0 : index
      %c0_30 = arith.constant 0 : index
      %34 = vector.load %arg11[%c0_28, %c0_29, %c0_30] : memref<2x32x128xf32, #tpu.memory_space<vmem>>, vector<2x32x128xf32>
      tpu.vector_store %arg11[%c0_28, %c0_29, %c0_30], %33 {strides = array<i32>} : memref<2x32x128xf32, #tpu.memory_space<vmem>>, vector<2x32x128xf32>,
    } else {
    }
    %c0 = arith.constant 0 : index
    %c0_5 = arith.constant 0 : index
    %c0_6 = arith.constant 0 : index
    %c0_7 = arith.constant 0 : index
    %15 = vector.load %arg4[%c0, %c0_5, %c0_6, %c0_7] : memref<1x2x32x128xbf16, #tpu.memory_space<vmem>>, vector<1x2x32x128xbf16>
    %16 = vector.shape_cast %15 : vector<1x2x32x128xbf16> to vector<2x32x128xbf16>
    %c0_8 = arith.constant 0 : index
    %c0_9 = arith.constant 0 : index
    %c0_10 = arith.constant 0 : index
    %c0_11 = arith.constant 0 : index
    %17 = vector.load %arg5[%c0_8, %c0_9, %c0_10, %c0_11] : memref<1x2x32x128xbf16, #tpu.memory_space<vmem>>, vector<1x2x32x128xbf16>
    %18 = vector.shape_cast %17 : vector<1x2x32x128xbf16> to vector<2x32x128xbf16>
    %c0_12 = arith.constant 0 : index
    %c0_13 = arith.constant 0 : index
    %c0_14 = arith.constant 0 : index
    %c0_15 = arith.constant 0 : index
    %19 = vector.load %arg6[%c0_12, %c0_13, %c0_14, %c0_15] : memref<1x2x32x128xbf16, #tpu.memory_space<vmem>>, vector<1x2x32x128xbf16>
    %20 = vector.shape_cast %19 : vector<1x2x32x128xbf16> to vector<2x32x128xbf16>
    "tpu.trace_start"() <{level = 10 : i32, message = "hqd,hkd->hqk"}> : () -> ()
    %cst = arith.constant dense<0.000000e+00> : vector<2x32x32xf32>
    %21 = tpu.matmul %16, %18, %cst {dimension_numbers = #tpu.dot_dimension_numbers<[2], [2], [1], [1], [0, 0, 0, 1, 1, 1], [0], [0]>} : vector<2x32x128xbf16>, vector<2x32x128xbf16>, vector<2x32x32xf32> -> vector<2x32x32xf32>
    "tpu.trace_stop"() : () -> ()
    %22 = arith.extui %12 : i1 to i32
    %c0_i32_16 = arith.constant 0 : i32
    %23 = arith.cmpi ne, %22, %c0_i32_16 : i32
    scf.if %23 {
      %29 = tpu.iota {dimensions = array<i32: 0>} : vector<32x32xi32>
      %30 = vector.broadcast %4 : i32 to vector<32x32xi32>
      %31 = arith.addi %30, %29 : vector<32x32xi32>
      %32 = tpu.iota {dimensions = array<i32: 1>} : vector<32x32xi32>
      %33 = vector.broadcast %5 : i32 to vector<32x32xi32>
      %34 = arith.addi %33, %32 : vector<32x32xi32>
      %35 = arith.cmpi sge, %31, %34 : vector<32x32xi32>
      %36 = vector.shape_cast %35 : vector<32x32xi1> to vector<1x32x32xi1>
      %cst_19 = arith.constant -1.000000e+30 : f32
      %37 = vector.shape_cast %36 : vector<1x32x32xi1> to vector<1x32x32xi1>
      %38 = vector.broadcast %37 : vector<1x32x32xi1> to vector<2x32x32xi1>
      %39 = vector.broadcast %cst_19 : f32 to vector<2x32x32xf32>
      %40 = arith.select %38, %21, %39 : vector<2x32x32xi1>, vector<2x32x32xf32>
      %c0_20 = arith.constant 0 : index
      %c0_21 = arith.constant 0 : index
      %c0_22 = arith.constant 0 : index
      %41 = vector.load %arg9[%c0_20, %c0_21, %c0_22] : memref<2x32x1xf32, #tpu.memory_space<vmem>>, vector<2x32x1xf32>
      %cst_23 = arith.constant dense<0xFF800000> : vector<2x32xf32>
      %42 = vector.multi_reduction <maximumf>, %40, %cst_23 [2] : vector<2x32x32xf32> to vector<2x32xf32>
      %43 = vector.shape_cast %42 : vector<2x32xf32> to vector<2x32x1xf32>
      %44 = arith.maximumf %41, %43 : vector<2x32x1xf32>
      %45 = arith.subf %41, %44 : vector<2x32x1xf32>
      %46 = math.exp %45 : vector<2x32x1xf32>
      %47 = vector.broadcast %44 : vector<2x32x1xf32> to vector<2x32x32xf32>
      %48 = arith.subf %40, %47 : vector<2x32x32xf32>
      %49 = math.exp %48 : vector<2x32x32xf32>
      %c0_24 = arith.constant 0 : index
      %c0_25 = arith.constant 0 : index
      %c0_26 = arith.constant 0 : index
      %50 = vector.load %arg10[%c0_24, %c0_25, %c0_26] : memref<2x32x1xf32, #tpu.memory_space<vmem>>, vector<2x32x1xf32>
      %51 = arith.mulf %46, %50 : vector<2x32x1xf32>
      %cst_27 = arith.constant dense<0.000000e+00> : vector<2x32xf32>
      %52 = vector.multi_reduction <add>, %49, %cst_27 [2] : vector<2x32x32xf32> to vector<2x32xf32>
      %53 = vector.shape_cast %52 : vector<2x32xf32> to vector<2x32x1xf32>
      %54 = arith.addf %51, %53 : vector<2x32x1xf32>
      %c0_28 = arith.constant 0 : index
      %c0_29 = arith.constant 0 : index
      %c0_30 = arith.constant 0 : index
      %55 = vector.load %arg10[%c0_28, %c0_29, %c0_30] : memref<2x32x1xf32, #tpu.memory_space<vmem>>, vector<2x32x1xf32>
      tpu.vector_store %arg10[%c0_28, %c0_29, %c0_30], %54 {strides = array<i32>} : memref<2x32x1xf32, #tpu.memory_space<vmem>>, vector<2x32x1xf32>,
      %c0_31 = arith.constant 0 : index
      %c0_32 = arith.constant 0 : index
      %c0_33 = arith.constant 0 : index
      %56 = vector.load %arg11[%c0_31, %c0_32, %c0_33] : memref<2x32x128xf32, #tpu.memory_space<vmem>>, vector<2x32x128xf32>
      %57 = vector.broadcast %46 : vector<2x32x1xf32> to vector<2x32x128xf32>
      %58 = arith.mulf %57, %56 : vector<2x32x128xf32>
      %59 = arith.truncf %49 : vector<2x32x32xf32> to vector<2x32x32xbf16>
      "tpu.trace_start"() <{level = 10 : i32, message = "hqk,hkd->hqd"}> : () -> ()
      %cst_34 = arith.constant dense<0.000000e+00> : vector<2x32x128xf32>
      %60 = tpu.matmul %59, %20, %cst_34 {dimension_numbers = #tpu.dot_dimension_numbers<[2], [1], [1], [2], [0, 0, 0, 1, 1, 2], [0], [0]>} : vector<2x32x32xbf16>, vector<2x32x128xbf16>, vector<2x32x128xf32> -> vector<2x32x128xf32>
      "tpu.trace_stop"() : () -> ()
      %61 = arith.addf %58, %60 : vector<2x32x128xf32>
      %c0_35 = arith.constant 0 : index
      %c0_36 = arith.constant 0 : index
      %c0_37 = arith.constant 0 : index
      %62 = vector.load %arg11[%c0_35, %c0_36, %c0_37] : memref<2x32x128xf32, #tpu.memory_space<vmem>>, vector<2x32x128xf32>
      tpu.vector_store %arg11[%c0_35, %c0_36, %c0_37], %61 {strides = array<i32>} : memref<2x32x128xf32, #tpu.memory_space<vmem>>, vector<2x32x128xf32>,
      %c0_38 = arith.constant 0 : index
      %c0_39 = arith.constant 0 : index
      %c0_40 = arith.constant 0 : index
      %63 = vector.load %arg9[%c0_38, %c0_39, %c0_40] : memref<2x32x1xf32, #tpu.memory_space<vmem>>, vector<2x32x1xf32>
      tpu.vector_store %arg9[%c0_38, %c0_39, %c0_40], %44 {strides = array<i32>} : memref<2x32x1xf32, #tpu.memory_space<vmem>>, vector<2x32x1xf32>,
    } else {
    }
    %true = arith.constant true
    %24 = arith.xori %12, %true : i1
    %25 = arith.extui %24 : i1 to i32
    %c0_i32_17 = arith.constant 0 : i32
    %26 = arith.cmpi ne, %25, %c0_i32_17 : i32
    scf.if %26 {
      %c0_19 = arith.constant 0 : index
      %c0_20 = arith.constant 0 : index
      %c0_21 = arith.constant 0 : index
      %29 = vector.load %arg9[%c0_19, %c0_20, %c0_21] : memref<2x32x1xf32, #tpu.memory_space<vmem>>, vector<2x32x1xf32>
      %cst_22 = arith.constant dense<0xFF800000> : vector<2x32xf32>
      %30 = vector.multi_reduction <maximumf>, %21, %cst_22 [2] : vector<2x32x32xf32> to vector<2x32xf32>
      %31 = vector.shape_cast %30 : vector<2x32xf32> to vector<2x32x1xf32>
      %32 = arith.maximumf %29, %31 : vector<2x32x1xf32>
      %33 = arith.subf %29, %32 : vector<2x32x1xf32>
      %34 = math.exp %33 : vector<2x32x1xf32>
      %35 = vector.broadcast %32 : vector<2x32x1xf32> to vector<2x32x32xf32>
      %36 = arith.subf %21, %35 : vector<2x32x32xf32>
      %37 = math.exp %36 : vector<2x32x32xf32>
      %c0_23 = arith.constant 0 : index
      %c0_24 = arith.constant 0 : index
      %c0_25 = arith.constant 0 : index
      %38 = vector.load %arg10[%c0_23, %c0_24, %c0_25] : memref<2x32x1xf32, #tpu.memory_space<vmem>>, vector<2x32x1xf32>
      %39 = arith.mulf %34, %38 : vector<2x32x1xf32>
      %cst_26 = arith.constant dense<0.000000e+00> : vector<2x32xf32>
      %40 = vector.multi_reduction <add>, %37, %cst_26 [2] : vector<2x32x32xf32> to vector<2x32xf32>
      %41 = vector.shape_cast %40 : vector<2x32xf32> to vector<2x32x1xf32>
      %42 = arith.addf %39, %41 : vector<2x32x1xf32>
      %c0_27 = arith.constant 0 : index
      %c0_28 = arith.constant 0 : index
      %c0_29 = arith.constant 0 : index
      %43 = vector.load %arg10[%c0_27, %c0_28, %c0_29] : memref<2x32x1xf32, #tpu.memory_space<vmem>>, vector<2x32x1xf32>
      tpu.vector_store %arg10[%c0_27, %c0_28, %c0_29], %42 {strides = array<i32>} : memref<2x32x1xf32, #tpu.memory_space<vmem>>, vector<2x32x1xf32>,
      %c0_30 = arith.constant 0 : index
      %c0_31 = arith.constant 0 : index
      %c0_32 = arith.constant 0 : index
      %44 = vector.load %arg11[%c0_30, %c0_31, %c0_32] : memref<2x32x128xf32, #tpu.memory_space<vmem>>, vector<2x32x128xf32>
      %45 = vector.broadcast %34 : vector<2x32x1xf32> to vector<2x32x128xf32>
      %46 = arith.mulf %45, %44 : vector<2x32x128xf32>
      %47 = arith.truncf %37 : vector<2x32x32xf32> to vector<2x32x32xbf16>
      "tpu.trace_start"() <{level = 10 : i32, message = "hqk,hkd->hqd"}> : () -> ()
      %cst_33 = arith.constant dense<0.000000e+00> : vector<2x32x128xf32>
      %48 = tpu.matmul %47, %20, %cst_33 {dimension_numbers = #tpu.dot_dimension_numbers<[2], [1], [1], [2], [0, 0, 0, 1, 1, 2], [0], [0]>} : vector<2x32x32xbf16>, vector<2x32x128xbf16>, vector<2x32x128xf32> -> vector<2x32x128xf32>
      "tpu.trace_stop"() : () -> ()
      %49 = arith.addf %46, %48 : vector<2x32x128xf32>
      %c0_34 = arith.constant 0 : index
      %c0_35 = arith.constant 0 : index
      %c0_36 = arith.constant 0 : index
      %50 = vector.load %arg11[%c0_34, %c0_35, %c0_36] : memref<2x32x128xf32, #tpu.memory_space<vmem>>, vector<2x32x128xf32>
      tpu.vector_store %arg11[%c0_34, %c0_35, %c0_36], %49 {strides = array<i32>} : memref<2x32x128xf32, #tpu.memory_space<vmem>>, vector<2x32x128xf32>,
      %c0_37 = arith.constant 0 : index
      %c0_38 = arith.constant 0 : index
      %c0_39 = arith.constant 0 : index
      %51 = vector.load %arg9[%c0_37, %c0_38, %c0_39] : memref<2x32x1xf32, #tpu.memory_space<vmem>>, vector<2x32x1xf32>
      tpu.vector_store %arg9[%c0_37, %c0_38, %c0_39], %32 {strides = array<i32>} : memref<2x32x1xf32, #tpu.memory_space<vmem>>, vector<2x32x1xf32>,
    } else {
    }
    %27 = arith.extui %9 : i1 to i32
    %c0_i32_18 = arith.constant 0 : i32
    %28 = arith.cmpi ne, %27, %c0_i32_18 : i32
    scf.if %28 {
      %c0_19 = arith.constant 0 : index
      %c0_20 = arith.constant 0 : index
      %c0_21 = arith.constant 0 : index
      %29 = vector.load %arg11[%c0_19, %c0_20, %c0_21] : memref<2x32x128xf32, #tpu.memory_space<vmem>>, vector<2x32x128xf32>
      %c0_22 = arith.constant 0 : index
      %c0_23 = arith.constant 0 : index
      %c0_24 = arith.constant 0 : index
      %30 = vector.load %arg10[%c0_22, %c0_23, %c0_24] : memref<2x32x1xf32, #tpu.memory_space<vmem>>, vector<2x32x1xf32>
      %31 = tpu.reciprocal %30 {approx = true} : vector<2x32x1xf32> -> vector<2x32x1xf32>
      %32 = vector.broadcast %31 : vector<2x32x1xf32> to vector<2x32x128xf32>
      %33 = arith.mulf %29, %32 : vector<2x32x128xf32>
      %34 = arith.truncf %33 : vector<2x32x128xf32> to vector<2x32x128xbf16>
      %35 = tpu.transpose %34, [1, 0, 2] : vector<2x32x128xbf16> -> vector<32x2x128xbf16>
      %36 = vector.shape_cast %35 : vector<32x2x128xbf16> to vector<32x256xbf16>
      %c0_25 = arith.constant 0 : index
      %c0_26 = arith.constant 0 : index
      %37 = vector.load %arg7[%c0_25, %c0_26] : memref<256x256xbf16, #tpu.memory_space<vmem>>, vector<256x256xbf16>
      %cst_27 = arith.constant dense<0.000000e+00> : vector<32x256xf32>
      %38 = tpu.matmul %36, %37, %cst_27 {dimension_numbers = #tpu.dot_dimension_numbers<[1], [0], [0], [1], [0, 0, 1, 1], [], []>} : vector<32x256xbf16>, vector<256x256xbf16>, vector<32x256xf32> -> vector<32x256xf32>
      %c0_28 = arith.constant 0 : index
      %c0_29 = arith.constant 0 : index
      %c0_30 = arith.constant 0 : index
      %39 = vector.load %arg8[%c0_28, %c0_29, %c0_30] : memref<1x32x256xf32, #tpu.memory_space<vmem>>, vector<1x32x256xf32>
      %40 = vector.shape_cast %39 : vector<1x32x256xf32> to vector<32x256xf32>
      %41 = vector.shape_cast %38 : vector<32x256xf32> to vector<1x32x256xf32>
      tpu.vector_store %arg8[%c0_28, %c0_29, %c0_30], %41 {strides = array<i32>} : memref<1x32x256xf32, #tpu.memory_space<vmem>>, vector<1x32x256xf32>,
    } else {
    }
    return
  }
  func.func @transform_0(%arg0: i32, %arg1: i32, %arg2: memref<3xi32, #tpu.memory_space<smem>>, %arg3: memref<3xi32, #tpu.memory_space<smem>>) -> (i32, i32, i32, i32) {
    %0 = arith.index_cast %arg1 : i32 to index
    %1 = memref.load %arg2[%0] : memref<3xi32, #tpu.memory_space<smem>>
    %c0_i32 = arith.constant 0 : i32
    %c0_i32_0 = arith.constant 0 : i32
    %c0_i32_1 = arith.constant 0 : i32
    return %arg0, %c0_i32, %1, %c0_i32_0 : i32, i32, i32, i32
  }
  func.func @transform_1(%arg0: i32, %arg1: i32, %arg2: memref<3xi32, #tpu.memory_space<smem>>, %arg3: memref<3xi32, #tpu.memory_space<smem>>) -> (i32, i32, i32, i32) {
    %0 = arith.index_cast %arg1 : i32 to index
    %1 = memref.load %arg3[%0] : memref<3xi32, #tpu.memory_space<smem>>
    %c0_i32 = arith.constant 0 : i32
    %c0_i32_0 = arith.constant 0 : i32
    %c0_i32_1 = arith.constant 0 : i32
    return %arg0, %c0_i32, %1, %c0_i32_0 : i32, i32, i32, i32
  }
  func.func @transform_2(%arg0: i32, %arg1: i32, %arg2: memref<3xi32, #tpu.memory_space<smem>>, %arg3: memref<3xi32, #tpu.memory_space<smem>>) -> (i32, i32, i32, i32) {
    %0 = arith.index_cast %arg1 : i32 to index
    %1 = memref.load %arg3[%0] : memref<3xi32, #tpu.memory_space<smem>>
    %c0_i32 = arith.constant 0 : i32
    %c0_i32_0 = arith.constant 0 : i32
    %c0_i32_1 = arith.constant 0 : i32
    return %arg0, %c0_i32, %1, %c0_i32_0 : i32, i32, i32, i32
  }
  func.func @transform_3(%arg0: i32, %arg1: i32, %arg2: memref<3xi32, #tpu.memory_space<smem>>, %arg3: memref<3xi32, #tpu.memory_space<smem>>) -> (i32, i32) {
    %c0_i32 = arith.constant 0 : i32
    %c0_i32_0 = arith.constant 0 : i32
    %c0_i32_1 = arith.constant 0 : i32
    return %c0_i32, %c0_i32_0 : i32, i32
  }
  func.func @transform_4(%arg0: i32, %arg1: i32, %arg2: memref<3xi32, #tpu.memory_space<smem>>, %arg3: memref<3xi32, #tpu.memory_space<smem>>) -> (i32, i32, i32) {
    %0 = arith.index_cast %arg1 : i32 to index
    %1 = memref.load %arg2[%0] : memref<3xi32, #tpu.memory_space<smem>>
    %c0_i32 = arith.constant 0 : i32
    %c0_i32_0 = arith.constant 0 : i32
    return %arg0, %1, %c0_i32 : i32, i32, i32
  }
}

</mosaic_0001>

<llo_original>
// kernel: self_attention_forward.2
$region0: #{self_attention_forward.2}
  #allocation0 [shape = 'u32[]', space=smem, size = 0x4, offset = 0x4, fixed_abs, tag = 'smem constant byte address 0x4 - core index']
  #allocation1 [shape = 'u32[144,128]{1,0:T(1,128)}', space=vmem, size = 0x12000, scoped, tag = 'internal scratch']
  %s0 = inlined_call_operand.vmem [shape: f32[2,64,256], index: 0, kind: input, shape index: {}]
  %s1 = inlined_call_operand.vmem [shape: f32[1,256], index: 1, kind: input, shape index: {}]
  %s2 = inlined_call_operand.vmem [shape: f32[1,256], index: 2, kind: input, shape index: {}]
  %s3 = inlined_call_operand.vmem [shape: bf16[256,768], index: 3, kind: input, shape index: {}]
  %s4 = inlined_call_operand.vmem [shape: f32[64,32], index: 4, kind: input, shape index: {}]
  %s5 = inlined_call_operand.vmem [shape: f32[64,32], index: 5, kind: input, shape index: {}]
  %s6 = inlined_call_operand.vmem [shape: bf16[2,2,64,128], index: 6, kind: output, shape index: {0}]
  %s7 = inlined_call_operand.vmem [shape: bf16[2,2,64,128], index: 7, kind: output, shape index: {1}]
  %s8 = inlined_call_operand.vmem [shape: bf16[2,2,64,128], index: 8, kind: output, shape index: {2}]
  %9 = xla_tuple %s6, %s7, %s8
  %s10 = sld [smem:[#allocation0]]
  $region184: #{self_attention_forward.2} parent=0
    _
  %s12 = ssub.s32 1, %s10
  %s13 = scalar_select 0, %s12, %s10
  $region1: #{self_attention_forward.2} parent=0
    #allocation2 [shape = 'u8[32768]{0}', space=vmem, size = 0x8000, scoped, tag = 'output window, operand 0']
    #allocation3 [shape = 'u8[32768]{0}', space=vmem, size = 0x8000, scoped, tag = 'output window, operand 1']
    #allocation4 [shape = 'u8[32768]{0}', space=vmem, size = 0x8000, scoped, tag = 'output window, operand 2']
    loop: start=0, step=1, limit=6
    $region2: #{self_attention_forward.2} parent=1 // loop_pre_header
      _
    $region3: #{self_attention_forward.2} parent=1 // loop_header
      %s15 = sphi 0, %s19
      %p16 = scmp.ge.s32.totalorder %s15, 6
      %s22 = sphi 0, %s34
      %s23 = sphi 0, %s30
      %s24 = sphi 0, %s22
      %s25 = sphi 0, %s23
      %s26 = sphi 0, %s24
      %s27 = sphi 0, %s25
      %s39 = sphi 0, %s41
      %s42 = sphi 0, %s39
      %s43 = sphi 0, %s42
      %s59 = sphi 0, %s43
      %s63 = sphi 0, %s63
      %s65 = sphi 0, %s63
      %s66 = sphi 0, %s65
      %s80 = sphi 0, %s66
      %s84 = sphi 0, %s84
      %s86 = sphi 0, %s84
      %s87 = sphi 0, %s86
      %s101 = sphi 0, %s87
      %s105 = sphi 0, %s105
      %s107 = sphi 0, %s105
      %s108 = sphi 0, %s107
      %s122 = sphi 0, %s108
      %s128 = sphi 0, %s130
      %s131 = sphi 0, %s128
      %s132 = sphi 0, %s131
      %s148 = sphi 0, %s132
      %s154 = sphi 0, %s156
      %s157 = sphi 0, %s154
      %s158 = sphi 0, %s157
      %s174 = sphi 0, %s158
      %s182 = sphi 0, %s184
      %s185 = sphi 0, %s182
      %s186 = sphi 0, %s185
      %s202 = sphi 0, %s186
      %s210 = sphi 0, %s212
      %s213 = sphi 0, %s210
      %s214 = sphi 0, %s213
      %s230 = sphi 0, %s214
      %s238 = sphi 0, %s240
      %s241 = sphi 0, %s238
      %s242 = sphi 0, %s241
      %s258 = sphi 0, %s242
    $region4: #{self_attention_forward.2} parent=1 // loop_header_branch
      %18 = sbr.rel (%p16) target = $region8
    $region5: #{self_attention_forward.2} parent=1 // loop_body
      %s20 = ssub.s32 %s15, 1
      %s21 = ssub.s32 %s15, 2
      %s28 = sadd.s32 1, %s23
      %p29 = scmp.ge.s32.totalorder %s28, 2
      %s30 = scalar_select %p29, 0, %s28
      %s31 = sadd.s32 1, %s22
      %s32 = scalar_select %p29, %s31, %s22
      %p33 = scmp.ge.s32.totalorder %s32, 2
      %s34 = scalar_select %p33, 0, %s32
      %s35 = ssub.s32 %s22, %s34
      %s36 = ssub.s32 %s23, %s30
      %s37 = sor.u32 %s35, %s36
      %p38 = scmp.eq.s32.totalorder %s37, 0
      %s40 = sadd.s32 %s39, 1
      %s41 = scalar_select %p38, %s39, %s40
      %p44 = pneg %p38
      %p45 = scmp.eq.s32.totalorder %s15, 3
      %p46 = por %p44, %p45
      %p47 = scmp.ne.s32.totalorder %s39, %s42
      %p48 = scmp.eq.s32.totalorder %s15, 0
      %p49 = por %p47, %p48
      %p50 = scmp.ne.s32.totalorder %s39, %s42
      %p51 = scmp.eq.s32.totalorder %s20, 3
      %p52 = por %p50, %p51
      %p53 = scmp.ne.s32.totalorder %s42, %s43
      %p54 = scmp.eq.s32.totalorder %s20, 0
      %p55 = por %p53, %p54
      %p56 = scmp.ne.s32.totalorder %s42, %s43
      %p57 = scmp.eq.s32.totalorder %s21, 3
      %p58 = por %p56, %p57
      %p60 = scmp.ne.s32.totalorder %s43, %s59
      %p61 = scmp.eq.s32.totalorder %s21, 0
      %p62 = por %p60, %p61
      %s64 = sadd.s32 %s63, 1
      %p67 = scmp.eq.s32.totalorder %s15, 3
      %p68 = scmp.ne.s32.totalorder %s63, %s65
      %p69 = scmp.eq.s32.totalorder %s15, 0
      %p70 = por %p68, %p69
      %p71 = scmp.ne.s32.totalorder %s63, %s65
      %p72 = scmp.eq.s32.totalorder %s20, 3
      %p73 = por %p71, %p72
      %p74 = scmp.ne.s32.totalorder %s65, %s66
      %p75 = scmp.eq.s32.totalorder %s20, 0
      %p76 = por %p74, %p75
      %p77 = scmp.ne.s32.totalorder %s65, %s66
      %p78 = scmp.eq.s32.totalorder %s21, 3
      %p79 = por %p77, %p78
      %p81 = scmp.ne.s32.totalorder %s66, %s80
      %p82 = scmp.eq.s32.totalorder %s21, 0
      %p83 = por %p81, %p82
      %s85 = sadd.s32 %s84, 1
      %p88 = scmp.eq.s32.totalorder %s15, 3
      %p89 = scmp.ne.s32.totalorder %s84, %s86
      %p90 = scmp.eq.s32.totalorder %s15, 0
      %p91 = por %p89, %p90
      %p92 = scmp.ne.s32.totalorder %s84, %s86
      %p93 = scmp.eq.s32.totalorder %s20, 3
      %p94 = por %p92, %p93
      %p95 = scmp.ne.s32.totalorder %s86, %s87
      %p96 = scmp.eq.s32.totalorder %s20, 0
      %p97 = por %p95, %p96
      %p98 = scmp.ne.s32.totalorder %s86, %s87
      %p99 = scmp.eq.s32.totalorder %s21, 3
      %p100 = por %p98, %p99
      %p102 = scmp.ne.s32.totalorder %s87, %s101
      %p103 = scmp.eq.s32.totalorder %s21, 0
      %p104 = por %p102, %p103
      %s106 = sadd.s32 %s105, 1
      %p109 = scmp.eq.s32.totalorder %s15, 3
      %p110 = scmp.ne.s32.totalorder %s105, %s107
      %p111 = scmp.eq.s32.totalorder %s15, 0
      %p112 = por %p110, %p111
      %p113 = scmp.ne.s32.totalorder %s105, %s107
      %p114 = scmp.eq.s32.totalorder %s20, 3
      %p115 = por %p113, %p114
      %p116 = scmp.ne.s32.totalorder %s107, %s108
      %p117 = scmp.eq.s32.totalorder %s20, 0
      %p118 = por %p116, %p117
      %p119 = scmp.ne.s32.totalorder %s107, %s108
      %p120 = scmp.eq.s32.totalorder %s21, 3
      %p121 = por %p119, %p120
      %p123 = scmp.ne.s32.totalorder %s108, %s122
      %p124 = scmp.eq.s32.totalorder %s21, 0
      %p125 = por %p123, %p124
      %s126 = ssub.s32 %s23, %s30
      %p127 = scmp.eq.s32.totalorder %s126, 0
      %s129 = sadd.s32 %s128, 1
      %s130 = scalar_select %p127, %s128, %s129
      %p133 = pneg %p127
      %p134 = scmp.eq.s32.totalorder %s15, 3
      %p135 = por %p133, %p134
      %p136 = scmp.ne.s32.totalorder %s128, %s131
      %p137 = scmp.eq.s32.totalorder %s15, 0
      %p138 = por %p136, %p137
      %p139 = scmp.ne.s32.totalorder %s128, %s131
      %p140 = scmp.eq.s32.totalorder %s20, 3
      %p141 = por %p139, %p140
      %p142 = scmp.ne.s32.totalorder %s131, %s132
      %p143 = scmp.eq.s32.totalorder %s20, 0
      %p144 = por %p142, %p143
      %p145 = scmp.ne.s32.totalorder %s131, %s132
      %p146 = scmp.eq.s32.totalorder %s21, 3
      %p147 = por %p145, %p146
      %p149 = scmp.ne.s32.totalorder %s132, %s148
      %p150 = scmp.eq.s32.totalorder %s21, 0
      %p151 = por %p149, %p150
      %s152 = ssub.s32 %s23, %s30
      %p153 = scmp.eq.s32.totalorder %s152, 0
      %s155 = sadd.s32 %s154, 1
      %s156 = scalar_select %p153, %s154, %s155
      %p159 = pneg %p153
      %p160 = scmp.eq.s32.totalorder %s15, 3
      %p161 = por %p159, %p160
      %p162 = scmp.ne.s32.totalorder %s154, %s157
      %p163 = scmp.eq.s32.totalorder %s15, 0
      %p164 = por %p162, %p163
      %p165 = scmp.ne.s32.totalorder %s154, %s157
      %p166 = scmp.eq.s32.totalorder %s20, 3
      %p167 = por %p165, %p166
      %p168 = scmp.ne.s32.totalorder %s157, %s158
      %p169 = scmp.eq.s32.totalorder %s20, 0
      %p170 = por %p168, %p169
      %p171 = scmp.ne.s32.totalorder %s157, %s158
      %p172 = scmp.eq.s32.totalorder %s21, 3
      %p173 = por %p171, %p172
      %p175 = scmp.ne.s32.totalorder %s158, %s174
      %p176 = scmp.eq.s32.totalorder %s21, 0
      %p177 = por %p175, %p176
      %s178 = ssub.s32 %s22, %s34
      %s179 = ssub.s32 %s23, %s30
      %s180 = sor.u32 %s178, %s179
      %p181 = scmp.eq.s32.totalorder %s180, 0
      %s183 = sadd.s32 %s182, 1
      %s184 = scalar_select %p181, %s182, %s183
      %p187 = pneg %p181
      %p188 = scmp.eq.s32.totalorder %s15, 3
      %p189 = por %p187, %p188
      %p190 = scmp.ne.s32.totalorder %s182, %s185
      %p191 = scmp.eq.s32.totalorder %s15, 0
      %p192 = por %p190, %p191
      %p193 = scmp.ne.s32.totalorder %s182, %s185
      %p194 = scmp.eq.s32.totalorder %s20, 3
      %p195 = por %p193, %p194
      %p196 = scmp.ne.s32.totalorder %s185, %s186
      %p197 = scmp.eq.s32.totalorder %s20, 0
      %p198 = por %p196, %p197
      %p199 = scmp.ne.s32.totalorder %s185, %s186
      %p200 = scmp.eq.s32.totalorder %s21, 3
      %p201 = por %p199, %p200
      %p203 = scmp.ne.s32.totalorder %s186, %s202
      %p204 = scmp.eq.s32.totalorder %s21, 0
      %p205 = por %p203, %p204
      %s206 = ssub.s32 %s22, %s34
      %s207 = ssub.s32 %s23, %s30
      %s208 = sor.u32 %s206, %s207
      %p209 = scmp.eq.s32.totalorder %s208, 0
      %s211 = sadd.s32 %s210, 1
      %s212 = scalar_select %p209, %s210, %s211
      %p215 = pneg %p209
      %p216 = scmp.eq.s32.totalorder %s15, 3
      %p217 = por %p215, %p216
      %p218 = scmp.ne.s32.totalorder %s210, %s213
      %p219 = scmp.eq.s32.totalorder %s15, 0
      %p220 = por %p218, %p219
      %p221 = scmp.ne.s32.totalorder %s210, %s213
      %p222 = scmp.eq.s32.totalorder %s20, 3
      %p223 = por %p221, %p222
      %p224 = scmp.ne.s32.totalorder %s213, %s214
      %p225 = scmp.eq.s32.totalorder %s20, 0
      %p226 = por %p224, %p225
      %p227 = scmp.ne.s32.totalorder %s213, %s214
      %p228 = scmp.eq.s32.totalorder %s21, 3
      %p229 = por %p227, %p228
      %p231 = scmp.ne.s32.totalorder %s214, %s230
      %p232 = scmp.eq.s32.totalorder %s21, 0
      %p233 = por %p231, %p232
      %s234 = ssub.s32 %s22, %s34
      %s235 = ssub.s32 %s23, %s30
      %s236 = sor.u32 %s234, %s235
      %p237 = scmp.eq.s32.totalorder %s236, 0
      %s239 = sadd.s32 %s238, 1
      %s240 = scalar_select %p237, %s238, %s239
      %p243 = pneg %p237
      %p244 = scmp.eq.s32.totalorder %s15, 3
      %p245 = por %p243, %p244
      %p246 = scmp.ne.s32.totalorder %s238, %s241
      %p247 = scmp.eq.s32.totalorder %s15, 0
      %p248 = por %p246, %p247
      %p249 = scmp.ne.s32.totalorder %s238, %s241
      %p250 = scmp.eq.s32.totalorder %s20, 3
      %p251 = por %p249, %p250
      %p252 = scmp.ne.s32.totalorder %s241, %s242
      %p253 = scmp.eq.s32.totalorder %s20, 0
      %p254 = por %p252, %p253
      %p255 = scmp.ne.s32.totalorder %s241, %s242
      %p256 = scmp.eq.s32.totalorder %s21, 3
      %p257 = por %p255, %p256
      %p259 = scmp.ne.s32.totalorder %s242, %s258
      %p260 = scmp.eq.s32.totalorder %s21, 0
      %p261 = por %p259, %p260
      %p262 = scmp.le.s32.totalorder 1, %s15
      %p263 = scmp.lt.s32.totalorder %s15, 5
      %p264 = pnand %p262, %p263
      %p265 = pneg %p264
      // Predicated region
      $region9: #{self_attention_forward.2} parent=5 // pred_check
        _
      $region10: #{self_attention_forward.2} parent=5 // pred_check_branch
        %267 = sbr.rel (%p264) target = $region12
      $region11: #{self_attention_forward.2} parent=5 // pred_region
        %s268 = ssub.s32 %s15, 1
        // Predicated region
        $region13: #{self_attention_forward.2} parent=11 // pred_check
          %p269 = pneg %p76
        $region14: #{self_attention_forward.2} parent=11 // pred_check_branch
          %271 = sbr.rel (%p269) target = $region16
        $region15: #{self_attention_forward.2} parent=11 // pred_region
          _
        $region16: #{self_attention_forward.2} parent=11 // pred_fallthru
          _
        // Predicated region
        $region17: #{self_attention_forward.2} parent=11 // pred_check
          %p272 = pneg %p97
        $region18: #{self_attention_forward.2} parent=11 // pred_check_branch
          %274 = sbr.rel (%p272) target = $region20
        $region19: #{self_attention_forward.2} parent=11 // pred_region
          _
        $region20: #{self_attention_forward.2} parent=11 // pred_fallthru
          _
        // Predicated region
        $region21: #{self_attention_forward.2} parent=11 // pred_check
          %p275 = pneg %p118
        $region22: #{self_attention_forward.2} parent=11 // pred_check_branch
          %277 = sbr.rel (%p275) target = $region24
        $region23: #{self_attention_forward.2} parent=11 // pred_region
          _
        $region24: #{self_attention_forward.2} parent=11 // pred_fallthru
          _
      $region12: #{self_attention_forward.2} parent=5 // pred_fallthru
        _
      %p278 = scmp.lt.s32.totalorder %s15, 4
      // Predicated region
      $region25: #{self_attention_forward.2} parent=5 // pred_check
        %p279 = pneg %p278
      $region26: #{self_attention_forward.2} parent=5 // pred_check_branch
        %281 = sbr.rel (%p279) target = $region28
      $region27: #{self_attention_forward.2} parent=5 // pred_region
        // Predicated region
        $region29: #{self_attention_forward.2} parent=27 // pred_check
          %p282 = pneg %p49
        $region30: #{self_attention_forward.2} parent=27 // pred_check_branch
          %284 = sbr.rel (%p282) target = $region32
        $region31: #{self_attention_forward.2} parent=27 // pred_region
          %s285 = smul.u32 4, %s23
          %p286 = scmp.lt.s32.totalorder %s22, 1
          %s287 = scalar_select %p286, %s22, 1
          %p288 = scmp.lt.s32.totalorder %s285, 7
          %s289 = scalar_select %p288, %s285, 7
          %s290 = smul.addr %s289, 2
          %s291 = smul.addr %s287, 16
          %s292 = sadd.s32 %s290, %s291
          %s293 = smul.addr %s292, 8
          %s294 = scalar_lea.vmem %s0, %s293
          %s295 = smul.u32 4, %s23
        $region32: #{self_attention_forward.2} parent=27 // pred_fallthru
          _
        // Predicated region
        $region33: #{self_attention_forward.2} parent=27 // pred_check
          %p296 = pneg %p138
        $region34: #{self_attention_forward.2} parent=27 // pred_check_branch
          %298 = sbr.rel (%p296) target = $region36
        $region35: #{self_attention_forward.2} parent=27 // pred_region
          %s299 = smul.u32 4, %s23
          %p300 = scmp.lt.s32.totalorder %s299, 7
          %s301 = scalar_select %p300, %s299, 7
          %s302 = smul.addr %s301, 8
          %s303 = scalar_lea.vmem %s4, %s302
          %s304 = smul.u32 4, %s23
        $region36: #{self_attention_forward.2} parent=27 // pred_fallthru
          _
        // Predicated region
        $region37: #{self_attention_forward.2} parent=27 // pred_check
          %p305 = pneg %p164
        $region38: #{self_attention_forward.2} parent=27 // pred_check_branch
          %307 = sbr.rel (%p305) target = $region40
        $region39: #{self_attention_forward.2} parent=27 // pred_region
          %s308 = smul.u32 4, %s23
          %p309 = scmp.lt.s32.totalorder %s308, 7
          %s310 = scalar_select %p309, %s308, 7
          %s311 = smul.addr %s310, 8
          %s312 = scalar_lea.vmem %s5, %s311
          %s313 = smul.u32 4, %s23
        $region40: #{self_attention_forward.2} parent=27 // pred_fallthru
          _
      $region28: #{self_attention_forward.2} parent=5 // pred_fallthru
        _
      %p314 = scmp.le.s32.totalorder 1, %s15
      %p315 = scmp.lt.s32.totalorder %s15, 5
      %p316 = pnand %p314, %p315
      %p317 = pneg %p316
      // Predicated region
      $region41: #{self_attention_forward.2} parent=5 // pred_check
        _
      $region42: #{self_attention_forward.2} parent=5 // pred_check_branch
        %319 = sbr.rel (%p316) target = $region44
      $region43: #{self_attention_forward.2} parent=5 // pred_region
        %s320 = ssub.s32 %s15, 1
        %s321 = smul.u32 4, %s25
        %p322 = scmp.lt.s32.totalorder %s24, 1
        %s323 = scalar_select %p322, %s24, 1
        %p324 = scmp.lt.s32.totalorder %s321, 7
        %s325 = scalar_select %p324, %s321, 7
        %s326 = smul.addr %s325, 2
        %s327 = smul.addr %s323, 16
        %s328 = sadd.s32 %s326, %s327
        %s329 = smul.addr %s328, 8
        %s330 = scalar_lea.vmem %s0, %s329
        %p331 = pneg %p55
        %p332 = pneg %p52
        %p333 = pneg %p76
        %p334 = pneg %p73
        %p335 = pneg %p97
        %p336 = pneg %p94
        %p337 = pneg %p118
        %p338 = pneg %p115
        %s339 = smul.u32 4, %s25
        %p340 = scmp.lt.s32.totalorder %s339, 7
        %s341 = scalar_select %p340, %s339, 7
        %s342 = smul.addr %s341, 8
        %s343 = scalar_lea.vmem %s4, %s342
        %p344 = pneg %p144
        %p345 = pneg %p141
        %s346 = smul.u32 4, %s25
        %p347 = scmp.lt.s32.totalorder %s346, 7
        %s348 = scalar_select %p347, %s346, 7
        %s349 = smul.addr %s348, 8
        %s350 = scalar_lea.vmem %s5, %s349
        %p351 = pneg %p170
        %p352 = pneg %p167
        %p353 = pneg %p198
        %p354 = pneg %p195
        %s355 = sand.u32 %s185, 1
        %s356 = sand.u32 %s185, 1
        %s357 = smul.addr %s356, 32
        %s358 = scalar_lea.vmem [#allocation2], %s357
        %p359 = pneg %p226
        %p360 = pneg %p223
        %s361 = sand.u32 %s213, 1
        %s362 = sand.u32 %s213, 1
        %s363 = smul.addr %s362, 32
        %s364 = scalar_lea.vmem [#allocation3], %s363
        %p365 = pneg %p254
        %p366 = pneg %p251
        %s367 = sand.u32 %s241, 1
        %s368 = sand.u32 %s241, 1
        %s369 = smul.addr %s368, 32
        %s370 = scalar_lea.vmem [#allocation4], %s369
        %s371 = smul.u32 4, %s25
        %p372 = scmp.lt.s32.totalorder %s24, 1
        %s373 = scalar_select %p372, %s24, 1
        %p374 = scmp.lt.s32.totalorder %s371, 7
        %s375 = scalar_select %p374, %s371, 7
        %s376 = smul.addr %s375, 2
        %s377 = smul.addr %s373, 16
        %s378 = sadd.s32 %s376, %s377
        %s379 = smul.addr %s378, 8
        %s380 = scalar_lea.vmem %s0, %s379
        %s381 = smul.u32 4, %s25
        %s382 = smul.u32 4, %s25
        %p383 = scmp.lt.s32.totalorder %s382, 7
        %s384 = scalar_select %p383, %s382, 7
        %s385 = smul.addr %s384, 8
        %s386 = scalar_lea.vmem %s4, %s385
        %s387 = smul.u32 4, %s25
        %s388 = smul.u32 4, %s25
        %p389 = scmp.lt.s32.totalorder %s388, 7
        %s390 = scalar_select %p389, %s388, 7
        %s391 = smul.addr %s390, 8
        %s392 = scalar_lea.vmem %s5, %s391
        %s393 = smul.u32 4, %s25
        %s394 = smul.u32 4, %s25
        %s395 = smul.u32 4, %s25
        %s396 = smul.u32 4, %s25
        %v397 = vld [vmem:[%s380] sm:$0xff]
        %v398 = vld [vmem:[%s380 + $0x8] sm:$0xff]
        %v399 = vld [vmem:[%s380 + $0x10] sm:$0xff]
        %v400 = vld [vmem:[%s380 + $0x18] sm:$0xff]
        %v401 = vld [vmem:[%s380 + $0x20] sm:$0xff]
        %v402 = vld [vmem:[%s380 + $0x28] sm:$0xff]
        %v403 = vld [vmem:[%s380 + $0x30] sm:$0xff]
        %v404 = vld [vmem:[%s380 + $0x38] sm:$0xff]
        %v405 = vadd.f32 %v397, %v398
        %406 = vadd.xlane.f32.xlu0 %v405
        %v407 = vpop.xlane.xlu0 %406
        %v408 = vadd.f32 %v399, %v400
        %409 = vadd.xlane.f32.xlu0 %v408
        %v410 = vpop.xlane.xlu0 %409
        %v411 = vadd.f32 %v401, %v402
        %412 = vadd.xlane.f32.xlu0 %v411
        %v413 = vpop.xlane.xlu0 %412
        %v414 = vadd.f32 %v403, %v404
        %415 = vadd.xlane.f32.xlu0 %v414
        %v416 = vpop.xlane.xlu0 %415
        %v417 = vrcp.pop 256.0
        %v418 = vmul.f32 %v407, %v417
        %v419 = vmul.f32 %v410, %v417
        %v420 = vmul.f32 %v413, %v417
        %v421 = vmul.f32 %v416, %v417
        %v422 = vsub.f32 %v397, %v418
        %v423 = vsub.f32 %v398, %v418
        %v424 = vsub.f32 %v399, %v419
        %v425 = vsub.f32 %v400, %v419
        %v426 = vsub.f32 %v401, %v420
        %v427 = vsub.f32 %v402, %v420
        %v428 = vsub.f32 %v403, %v421
        %v429 = vsub.f32 %v404, %v421
        %v430 = vmul.f32 %v422, %v422
        %v431 = vmul.f32 %v423, %v423
        %v432 = vmul.f32 %v424, %v424
        %v433 = vmul.f32 %v425, %v425
        %v434 = vmul.f32 %v426, %v426
        %v435 = vmul.f32 %v427, %v427
        %v436 = vmul.f32 %v428, %v428
        %v437 = vmul.f32 %v429, %v429
        %v438 = vadd.f32 %v430, %v431
        %439 = vadd.xlane.f32.xlu0 %v438
        %v440 = vpop.xlane.xlu0 %439
        %v441 = vadd.f32 %v432, %v433
        %442 = vadd.xlane.f32.xlu0 %v441
        %v443 = vpop.xlane.xlu0 %442
        %v444 = vadd.f32 %v434, %v435
        %445 = vadd.xlane.f32.xlu0 %v444
        %v446 = vpop.xlane.xlu0 %445
        %v447 = vadd.f32 %v436, %v437
        %448 = vadd.xlane.f32.xlu0 %v447
        %v449 = vpop.xlane.xlu0 %448
        %v450 = vmul.f32 %v440, %v417
        %v451 = vmul.f32 %v443, %v417
        %v452 = vmul.f32 %v446, %v417
        %v453 = vmul.f32 %v449, %v417
        %v454 = vadd.f32 %v450, 1e-05
        %v455 = vadd.f32 %v451, 1e-05
        %v456 = vadd.f32 %v452, 1e-05
        %v457 = vadd.f32 %v453, 1e-05
        %v458 = vrsqrt.pop %v454
        %v459 = vrsqrt.pop %v455
        %v460 = vrsqrt.pop %v456
        %v461 = vrsqrt.pop %v457
        %v462 = vmul.f32 %v422, %v458
        %v463 = vmul.f32 %v423, %v458
        %v464 = vmul.f32 %v424, %v459
        %v465 = vmul.f32 %v425, %v459
        %v466 = vmul.f32 %v426, %v460
        %v467 = vmul.f32 %v427, %v460
        %v468 = vmul.f32 %v428, %v461
        %v469 = vmul.f32 %v429, %v461
        %v470 = vld [vmem:[%s1] sm:$0x3]
        %v472 = vlaneseq
        %v473 = vshrl.u32 %v472, 7
        %v474 = vsub.s32 0, %v473
        %v475 = vrot.slane %v470, %v474
        %v476 = vlaneseq
        %v477 = vshrl.u32 %v476, 7
        %v478 = vsub.s32 1, %v477
        %v479 = vrot.slane %v470, %v478
        %v482 = vmul.f32 %v462, %v475
        %v483 = vmul.f32 %v463, %v479
        %v484 = vmul.f32 %v464, %v475
        %v485 = vmul.f32 %v465, %v479
        %v486 = vmul.f32 %v466, %v475
        %v487 = vmul.f32 %v467, %v479
        %v488 = vmul.f32 %v468, %v475
        %v489 = vmul.f32 %v469, %v479
        %v490 = vld [vmem:[%s2] sm:$0x3]
        %v492 = vlaneseq
        %v493 = vshrl.u32 %v492, 7
        %v494 = vsub.s32 0, %v493
        %v495 = vrot.slane %v490, %v494
        %v496 = vlaneseq
        %v497 = vshrl.u32 %v496, 7
        %v498 = vsub.s32 1, %v497
        %v499 = vrot.slane %v490, %v498
        %v502 = vadd.f32 %v482, %v495
        %v503 = vadd.f32 %v483, %v499
        %v504 = vadd.f32 %v484, %v495
        %v505 = vadd.f32 %v485, %v499
        %v506 = vadd.f32 %v486, %v495
        %v507 = vadd.f32 %v487, %v499
        %v508 = vadd.f32 %v488, %v495
        %v509 = vadd.f32 %v489, %v499
        %v510 = vpack.c.bf16 %v504, %v502
        %v511 = vpack.c.bf16 %v505, %v503
        %v512 = vpack.c.bf16 %v508, %v506
        %v513 = vpack.c.bf16 %v509, %v507
        %v514 = vld [vmem:[%s3] sm:$0xff]
        %v515 = vld [vmem:[%s3 + $0x8] sm:$0xff]
        %v516 = vld [vmem:[%s3 + $0x10] sm:$0xff]
        %v517 = vld [vmem:[%s3 + $0x18] sm:$0xff]
        %v518 = vld [vmem:[%s3 + $0x20] sm:$0xff]
        %v519 = vld [vmem:[%s3 + $0x28] sm:$0xff]
        %v520 = vld [vmem:[%s3 + $0x30] sm:$0xff]
        %v521 = vld [vmem:[%s3 + $0x38] sm:$0xff]
        %v522 = vld [vmem:[%s3 + $0x40] sm:$0xff]
        %v523 = vld [vmem:[%s3 + $0x48] sm:$0xff]
        %v524 = vld [vmem:[%s3 + $0x50] sm:$0xff]
        %v525 = vld [vmem:[%s3 + $0x58] sm:$0xff]
        %v526 = vld [vmem:[%s3 + $0x60] sm:$0xff]
        %v527 = vld [vmem:[%s3 + $0x68] sm:$0xff]
        %v528 = vld [vmem:[%s3 + $0x70] sm:$0xff]
        %v529 = vld [vmem:[%s3 + $0x78] sm:$0xff]
        %v530 = vld [vmem:[%s3 + $0x80] sm:$0xff]
        %v531 = vld [vmem:[%s3 + $0x88] sm:$0xff]
        %v532 = vld [vmem:[%s3 + $0x90] sm:$0xff]
        %v533 = vld [vmem:[%s3 + $0x98] sm:$0xff]
        %v534 = vld [vmem:[%s3 + $0xa0] sm:$0xff]
        %v535 = vld [vmem:[%s3 + $0xa8] sm:$0xff]
        %v536 = vld [vmem:[%s3 + $0xb0] sm:$0xff]
        %v537 = vld [vmem:[%s3 + $0xb8] sm:$0xff]
        %v538 = vld [vmem:[%s3 + $0xc0] sm:$0xff]
        %v539 = vld [vmem:[%s3 + $0xc8] sm:$0xff]
        %v540 = vld [vmem:[%s3 + $0xd0] sm:$0xff]
        %v541 = vld [vmem:[%s3 + $0xd8] sm:$0xff]
        %v542 = vld [vmem:[%s3 + $0xe0] sm:$0xff]
        %v543 = vld [vmem:[%s3 + $0xe8] sm:$0xff]
        %v544 = vld [vmem:[%s3 + $0xf0] sm:$0xff]
        %v545 = vld [vmem:[%s3 + $0xf8] sm:$0xff]
        %v546 = vld [vmem:[%s3 + $0x100] sm:$0xff]
        %v547 = vld [vmem:[%s3 + $0x108] sm:$0xff]
        %v548 = vld [vmem:[%s3 + $0x110] sm:$0xff]
        %v549 = vld [vmem:[%s3 + $0x118] sm:$0xff]
        %v550 = vld [vmem:[%s3 + $0x120] sm:$0xff]
        %v551 = vld [vmem:[%s3 + $0x128] sm:$0xff]
        %v552 = vld [vmem:[%s3 + $0x130] sm:$0xff]
        %v553 = vld [vmem:[%s3 + $0x138] sm:$0xff]
        %v554 = vld [vmem:[%s3 + $0x140] sm:$0xff]
        %v555 = vld [vmem:[%s3 + $0x148] sm:$0xff]
        %v556 = vld [vmem:[%s3 + $0x150] sm:$0xff]
        %v557 = vld [vmem:[%s3 + $0x158] sm:$0xff]
        %v558 = vld [vmem:[%s3 + $0x160] sm:$0xff]
        %v559 = vld [vmem:[%s3 + $0x168] sm:$0xff]
        %v560 = vld [vmem:[%s3 + $0x170] sm:$0xff]
        %v561 = vld [vmem:[%s3 + $0x178] sm:$0xff]
        %v562 = vld [vmem:[%s3 + $0x180] sm:$0xff]
        %v563 = vld [vmem:[%s3 + $0x188] sm:$0xff]
        %v564 = vld [vmem:[%s3 + $0x190] sm:$0xff]
        %v565 = vld [vmem:[%s3 + $0x198] sm:$0xff]
        %v566 = vld [vmem:[%s3 + $0x1a0] sm:$0xff]
        %v567 = vld [vmem:[%s3 + $0x1a8] sm:$0xff]
        %v568 = vld [vmem:[%s3 + $0x1b0] sm:$0xff]
        %v569 = vld [vmem:[%s3 + $0x1b8] sm:$0xff]
        %v570 = vld [vmem:[%s3 + $0x1c0] sm:$0xff]
        %v571 = vld [vmem:[%s3 + $0x1c8] sm:$0xff]
        %v572 = vld [vmem:[%s3 + $0x1d0] sm:$0xff]
        %v573 = vld [vmem:[%s3 + $0x1d8] sm:$0xff]
        %v574 = vld [vmem:[%s3 + $0x1e0] sm:$0xff]
        %v575 = vld [vmem:[%s3 + $0x1e8] sm:$0xff]
        %v576 = vld [vmem:[%s3 + $0x1f0] sm:$0xff]
        %v577 = vld [vmem:[%s3 + $0x1f8] sm:$0xff]
        %v578 = vld [vmem:[%s3 + $0x200] sm:$0xff]
        %v579 = vld [vmem:[%s3 + $0x208] sm:$0xff]
        %v580 = vld [vmem:[%s3 + $0x210] sm:$0xff]
        %v581 = vld [vmem:[%s3 + $0x218] sm:$0xff]
        %v582 = vld [vmem:[%s3 + $0x220] sm:$0xff]
        %v583 = vld [vmem:[%s3 + $0x228] sm:$0xff]
        %v584 = vld [vmem:[%s3 + $0x230] sm:$0xff]
        %v585 = vld [vmem:[%s3 + $0x238] sm:$0xff]
        %v586 = vld [vmem:[%s3 + $0x240] sm:$0xff]
        %v587 = vld [vmem:[%s3 + $0x248] sm:$0xff]
        %v588 = vld [vmem:[%s3 + $0x250] sm:$0xff]
        %v589 = vld [vmem:[%s3 + $0x258] sm:$0xff]
        %v590 = vld [vmem:[%s3 + $0x260] sm:$0xff]
        %v591 = vld [vmem:[%s3 + $0x268] sm:$0xff]
        %v592 = vld [vmem:[%s3 + $0x270] sm:$0xff]
        %v593 = vld [vmem:[%s3 + $0x278] sm:$0xff]
        %v594 = vld [vmem:[%s3 + $0x280] sm:$0xff]
        %v595 = vld [vmem:[%s3 + $0x288] sm:$0xff]
        %v596 = vld [vmem:[%s3 + $0x290] sm:$0xff]
        %v597 = vld [vmem:[%s3 + $0x298] sm:$0xff]
        %v598 = vld [vmem:[%s3 + $0x2a0] sm:$0xff]
        %v599 = vld [vmem:[%s3 + $0x2a8] sm:$0xff]
        %v600 = vld [vmem:[%s3 + $0x2b0] sm:$0xff]
        %v601 = vld [vmem:[%s3 + $0x2b8] sm:$0xff]
        %v602 = vld [vmem:[%s3 + $0x2c0] sm:$0xff]
        %v603 = vld [vmem:[%s3 + $0x2c8] sm:$0xff]
        %v604 = vld [vmem:[%s3 + $0x2d0] sm:$0xff]
        %v605 = vld [vmem:[%s3 + $0x2d8] sm:$0xff]
        %v606 = vld [vmem:[%s3 + $0x2e0] sm:$0xff]
        %v607 = vld [vmem:[%s3 + $0x2e8] sm:$0xff]
        %v608 = vld [vmem:[%s3 + $0x2f0] sm:$0xff]
        %v609 = vld [vmem:[%s3 + $0x2f8] sm:$0xff]
        %v706 = vunpack.c.l.b16 %v514
        %v707 = vunpack.c.h.b16 %v514
        %v708 = vunpack.c.l.b16 %v515
        %v709 = vunpack.c.h.b16 %v515
        %v710 = vunpack.c.l.b16 %v516
        %v711 = vunpack.c.h.b16 %v516
        %v712 = vunpack.c.l.b16 %v517
        %v713 = vunpack.c.h.b16 %v517
        %v714 = vunpack.c.l.b16 %v518
        %v715 = vunpack.c.h.b16 %v518
        %v716 = vunpack.c.l.b16 %v519
        %v717 = vunpack.c.h.b16 %v519
        %v718 = vunpack.c.l.b16 %v520
        %v719 = vunpack.c.h.b16 %v520
        %v720 = vunpack.c.l.b16 %v521
        %v721 = vunpack.c.h.b16 %v521
        %v722 = vunpack.c.l.b16 %v522
        %v723 = vunpack.c.h.b16 %v522
        %v724 = vunpack.c.l.b16 %v523
        %v725 = vunpack.c.h.b16 %v523
        %v726 = vunpack.c.l.b16 %v524
        %v727 = vunpack.c.h.b16 %v524
        %v728 = vunpack.c.l.b16 %v525
        %v729 = vunpack.c.h.b16 %v525
        %v730 = vunpack.c.l.b16 %v526
        %v731 = vunpack.c.h.b16 %v526
        %v732 = vunpack.c.l.b16 %v527
        %v733 = vunpack.c.h.b16 %v527
        %v734 = vunpack.c.l.b16 %v528
        %v735 = vunpack.c.h.b16 %v528
        %v736 = vunpack.c.l.b16 %v529
        %v737 = vunpack.c.h.b16 %v529
        %v738 = vunpack.c.l.b16 %v530
        %v739 = vunpack.c.h.b16 %v530
        %v740 = vunpack.c.l.b16 %v531
        %v741 = vunpack.c.h.b16 %v531
        %v742 = vunpack.c.l.b16 %v532
        %v743 = vunpack.c.h.b16 %v532
        %v744 = vunpack.c.l.b16 %v533
        %v745 = vunpack.c.h.b16 %v533
        %v746 = vunpack.c.l.b16 %v534
        %v747 = vunpack.c.h.b16 %v534
        %v748 = vunpack.c.l.b16 %v535
        %v749 = vunpack.c.h.b16 %v535
        %v750 = vunpack.c.l.b16 %v536
        %v751 = vunpack.c.h.b16 %v536
        %v752 = vunpack.c.l.b16 %v537
        %v753 = vunpack.c.h.b16 %v537
        %v754 = vunpack.c.l.b16 %v538
        %v755 = vunpack.c.h.b16 %v538
        %v756 = vunpack.c.l.b16 %v539
        %v757 = vunpack.c.h.b16 %v539
        %v758 = vunpack.c.l.b16 %v540
        %v759 = vunpack.c.h.b16 %v540
        %v760 = vunpack.c.l.b16 %v541
        %v761 = vunpack.c.h.b16 %v541
        %v762 = vunpack.c.l.b16 %v542
        %v763 = vunpack.c.h.b16 %v542
        %v764 = vunpack.c.l.b16 %v543
        %v765 = vunpack.c.h.b16 %v543
        %v766 = vunpack.c.l.b16 %v544
        %v767 = vunpack.c.h.b16 %v544
        %v768 = vunpack.c.l.b16 %v545
        %v769 = vunpack.c.h.b16 %v545
        %v770 = vunpack.c.l.b16 %v546
        %v771 = vunpack.c.h.b16 %v546
        %v772 = vunpack.c.l.b16 %v547
        %v773 = vunpack.c.h.b16 %v547
        %v774 = vunpack.c.l.b16 %v548
        %v775 = vunpack.c.h.b16 %v548
        %v776 = vunpack.c.l.b16 %v549
        %v777 = vunpack.c.h.b16 %v549
        %v778 = vunpack.c.l.b16 %v550
        %v779 = vunpack.c.h.b16 %v550
        %v780 = vunpack.c.l.b16 %v551
        %v781 = vunpack.c.h.b16 %v551
        %v782 = vunpack.c.l.b16 %v552
        %v783 = vunpack.c.h.b16 %v552
        %v784 = vunpack.c.l.b16 %v553
        %v785 = vunpack.c.h.b16 %v553
        %v786 = vunpack.c.l.b16 %v554
        %v787 = vunpack.c.h.b16 %v554
        %v788 = vunpack.c.l.b16 %v555
        %v789 = vunpack.c.h.b16 %v555
        %v790 = vunpack.c.l.b16 %v556
        %v791 = vunpack.c.h.b16 %v556
        %v792 = vunpack.c.l.b16 %v557
        %v793 = vunpack.c.h.b16 %v557
        %v794 = vunpack.c.l.b16 %v558
        %v795 = vunpack.c.h.b16 %v558
        %v796 = vunpack.c.l.b16 %v559
        %v797 = vunpack.c.h.b16 %v559
        %v798 = vunpack.c.l.b16 %v560
        %v799 = vunpack.c.h.b16 %v560
        %v800 = vunpack.c.l.b16 %v561
        %v801 = vunpack.c.h.b16 %v561
        %v802 = vunpack.c.l.b16 %v562
        %v803 = vunpack.c.h.b16 %v562
        %v804 = vunpack.c.l.b16 %v563
        %v805 = vunpack.c.h.b16 %v563
        %v806 = vunpack.c.l.b16 %v564
        %v807 = vunpack.c.h.b16 %v564
        %v808 = vunpack.c.l.b16 %v565
        %v809 = vunpack.c.h.b16 %v565
        %v810 = vunpack.c.l.b16 %v566
        %v811 = vunpack.c.h.b16 %v566
        %v812 = vunpack.c.l.b16 %v567
        %v813 = vunpack.c.h.b16 %v567
        %v814 = vunpack.c.l.b16 %v568
        %v815 = vunpack.c.h.b16 %v568
        %v816 = vunpack.c.l.b16 %v569
        %v817 = vunpack.c.h.b16 %v569
        %v818 = vunpack.c.l.b16 %v570
        %v819 = vunpack.c.h.b16 %v570
        %v820 = vunpack.c.l.b16 %v571
        %v821 = vunpack.c.h.b16 %v571
        %v822 = vunpack.c.l.b16 %v572
        %v823 = vunpack.c.h.b16 %v572
        %v824 = vunpack.c.l.b16 %v573
        %v825 = vunpack.c.h.b16 %v573
        %v826 = vunpack.c.l.b16 %v574
        %v827 = vunpack.c.h.b16 %v574
        %v828 = vunpack.c.l.b16 %v575
        %v829 = vunpack.c.h.b16 %v575
        %v830 = vunpack.c.l.b16 %v576
        %v831 = vunpack.c.h.b16 %v576
        %v832 = vunpack.c.l.b16 %v577
        %v833 = vunpack.c.h.b16 %v577
        %v834 = vunpack.c.l.b16 %v578
        %v835 = vunpack.c.h.b16 %v578
        %v836 = vunpack.c.l.b16 %v579
        %v837 = vunpack.c.h.b16 %v579
        %v838 = vunpack.c.l.b16 %v580
        %v839 = vunpack.c.h.b16 %v580
        %v840 = vunpack.c.l.b16 %v581
        %v841 = vunpack.c.h.b16 %v581
        %v842 = vunpack.c.l.b16 %v582
        %v843 = vunpack.c.h.b16 %v582
        %v844 = vunpack.c.l.b16 %v583
        %v845 = vunpack.c.h.b16 %v583
        %v846 = vunpack.c.l.b16 %v584
        %v847 = vunpack.c.h.b16 %v584
        %v848 = vunpack.c.l.b16 %v585
        %v849 = vunpack.c.h.b16 %v585
        %v850 = vunpack.c.l.b16 %v586
        %v851 = vunpack.c.h.b16 %v586
        %v852 = vunpack.c.l.b16 %v587
        %v853 = vunpack.c.h.b16 %v587
        %v854 = vunpack.c.l.b16 %v588
        %v855 = vunpack.c.h.b16 %v588
        %v856 = vunpack.c.l.b16 %v589
        %v857 = vunpack.c.h.b16 %v589
        %v858 = vunpack.c.l.b16 %v590
        %v859 = vunpack.c.h.b16 %v590
        %v860 = vunpack.c.l.b16 %v591
        %v861 = vunpack.c.h.b16 %v591
        %v862 = vunpack.c.l.b16 %v592
        %v863 = vunpack.c.h.b16 %v592
        %v864 = vunpack.c.l.b16 %v593
        %v865 = vunpack.c.h.b16 %v593
        %v866 = vunpack.c.l.b16 %v594
        %v867 = vunpack.c.h.b16 %v594
        %v868 = vunpack.c.l.b16 %v595
        %v869 = vunpack.c.h.b16 %v595
        %v870 = vunpack.c.l.b16 %v596
        %v871 = vunpack.c.h.b16 %v596
        %v872 = vunpack.c.l.b16 %v597
        %v873 = vunpack.c.h.b16 %v597
        %v874 = vunpack.c.l.b16 %v598
        %v875 = vunpack.c.h.b16 %v598
        %v876 = vunpack.c.l.b16 %v599
        %v877 = vunpack.c.h.b16 %v599
        %v878 = vunpack.c.l.b16 %v600
        %v879 = vunpack.c.h.b16 %v600
        %v880 = vunpack.c.l.b16 %v601
        %v881 = vunpack.c.h.b16 %v601
        %v882 = vunpack.c.l.b16 %v602
        %v883 = vunpack.c.h.b16 %v602
        %v884 = vunpack.c.l.b16 %v603
        %v885 = vunpack.c.h.b16 %v603
        %v886 = vunpack.c.l.b16 %v604
        %v887 = vunpack.c.h.b16 %v604
        %v888 = vunpack.c.l.b16 %v605
        %v889 = vunpack.c.h.b16 %v605
        %v890 = vunpack.c.l.b16 %v606
        %v891 = vunpack.c.h.b16 %v606
        %v892 = vunpack.c.l.b16 %v607
        %v893 = vunpack.c.h.b16 %v607
        %v894 = vunpack.c.l.b16 %v608
        %v895 = vunpack.c.h.b16 %v608
        %v896 = vunpack.c.l.b16 %v609
        %v897 = vunpack.c.h.b16 %v609
        %v898 = vpack.c.b16 %v712, %v706
        %v899 = vpack.c.b16 %v713, %v707
        %v900 = vpack.c.b16 %v714, %v708
        %v901 = vpack.c.b16 %v715, %v709
        %v902 = vpack.c.b16 %v716, %v710
        %v903 = vpack.c.b16 %v717, %v711
        %v904 = vpack.c.b16 %v724, %v718
        %v905 = vpack.c.b16 %v725, %v719
        %v906 = vpack.c.b16 %v726, %v720
        %v907 = vpack.c.b16 %v727, %v721
        %v908 = vpack.c.b16 %v728, %v722
        %v909 = vpack.c.b16 %v729, %v723
        %v910 = vpack.c.b16 %v736, %v730
        %v911 = vpack.c.b16 %v737, %v731
        %v912 = vpack.c.b16 %v738, %v732
        %v913 = vpack.c.b16 %v739, %v733
        %v914 = vpack.c.b16 %v740, %v734
        %v915 = vpack.c.b16 %v741, %v735
        %v916 = vpack.c.b16 %v748, %v742
        %v917 = vpack.c.b16 %v749, %v743
        %v918 = vpack.c.b16 %v750, %v744
        %v919 = vpack.c.b16 %v751, %v745
        %v920 = vpack.c.b16 %v752, %v746
        %v921 = vpack.c.b16 %v753, %v747
        %v922 = vpack.c.b16 %v760, %v754
        %v923 = vpack.c.b16 %v761, %v755
        %v924 = vpack.c.b16 %v762, %v756
        %v925 = vpack.c.b16 %v763, %v757
        %v926 = vpack.c.b16 %v764, %v758
        %v927 = vpack.c.b16 %v765, %v759
        %v928 = vpack.c.b16 %v772, %v766
        %v929 = vpack.c.b16 %v773, %v767
        %v930 = vpack.c.b16 %v774, %v768
        %v931 = vpack.c.b16 %v775, %v769
        %v932 = vpack.c.b16 %v776, %v770
        %v933 = vpack.c.b16 %v777, %v771
        %v934 = vpack.c.b16 %v784, %v778
        %v935 = vpack.c.b16 %v785, %v779
        %v936 = vpack.c.b16 %v786, %v780
        %v937 = vpack.c.b16 %v787, %v781
        %v938 = vpack.c.b16 %v788, %v782
        %v939 = vpack.c.b16 %v789, %v783
        %v940 = vpack.c.b16 %v796, %v790
        %v941 = vpack.c.b16 %v797, %v791
        %v942 = vpack.c.b16 %v798, %v792
        %v943 = vpack.c.b16 %v799, %v793
        %v944 = vpack.c.b16 %v800, %v794
        %v945 = vpack.c.b16 %v801, %v795
        %v946 = vpack.c.b16 %v808, %v802
        %v947 = vpack.c.b16 %v809, %v803
        %v948 = vpack.c.b16 %v810, %v804
        %v949 = vpack.c.b16 %v811, %v805
        %v950 = vpack.c.b16 %v812, %v806
        %v951 = vpack.c.b16 %v813, %v807
        %v952 = vpack.c.b16 %v820, %v814
        %v953 = vpack.c.b16 %v821, %v815
        %v954 = vpack.c.b16 %v822, %v816
        %v955 = vpack.c.b16 %v823, %v817
        %v956 = vpack.c.b16 %v824, %v818
        %v957 = vpack.c.b16 %v825, %v819
        %v958 = vpack.c.b16 %v832, %v826
        %v959 = vpack.c.b16 %v833, %v827
        %v960 = vpack.c.b16 %v834, %v828
        %v961 = vpack.c.b16 %v835, %v829
        %v962 = vpack.c.b16 %v836, %v830
        %v963 = vpack.c.b16 %v837, %v831
        %v964 = vpack.c.b16 %v844, %v838
        %v965 = vpack.c.b16 %v845, %v839
        %v966 = vpack.c.b16 %v846, %v840
        %v967 = vpack.c.b16 %v847, %v841
        %v968 = vpack.c.b16 %v848, %v842
        %v969 = vpack.c.b16 %v849, %v843
        %v970 = vpack.c.b16 %v856, %v850
        %v971 = vpack.c.b16 %v857, %v851
        %v972 = vpack.c.b16 %v858, %v852
        %v973 = vpack.c.b16 %v859, %v853
        %v974 = vpack.c.b16 %v860, %v854
        %v975 = vpack.c.b16 %v861, %v855
        %v976 = vpack.c.b16 %v868, %v862
        %v977 = vpack.c.b16 %v869, %v863
        %v978 = vpack.c.b16 %v870, %v864
        %v979 = vpack.c.b16 %v871, %v865
        %v980 = vpack.c.b16 %v872, %v866
        %v981 = vpack.c.b16 %v873, %v867
        %v982 = vpack.c.b16 %v880, %v874
        %v983 = vpack.c.b16 %v881, %v875
        %v984 = vpack.c.b16 %v882, %v876
        %v985 = vpack.c.b16 %v883, %v877
        %v986 = vpack.c.b16 %v884, %v878
        %v987 = vpack.c.b16 %v885, %v879
        %v988 = vpack.c.b16 %v892, %v886
        %v989 = vpack.c.b16 %v893, %v887
        %v990 = vpack.c.b16 %v894, %v888
        %v991 = vpack.c.b16 %v895, %v889
        %v992 = vpack.c.b16 %v896, %v890
        %v993 = vpack.c.b16 %v897, %v891
        %1090 = vmatprep.subr.bf16.mxu0 %v941
        %1091 = vmatpush1.bf16.msra.mxu0 %v940
        %1092 = vmatprep.subr.bf16.mxu0 %v935
        %1093 = vmatpush1.bf16.msra.mxu0 %v934
        %1094 = vmatprep.subr.bf16.mxu0 %v929
        %1095 = vmatpush1.bf16.msra.mxu0 %v928
        %1096 = vmatprep.subr.bf16.mxu0 %v923
        %1097 = vmatpush1.bf16.msra.mxu0 %v922
        %1098 = vmatprep.subr.bf16.mxu0 %v917
        %1099 = vmatpush1.bf16.msra.mxu0 %v916
        %1100 = vmatprep.subr.bf16.mxu0 %v911
        %1101 = vmatpush1.bf16.msra.mxu0 %v910
        %1102 = vmatprep.subr.bf16.mxu0 %v905
        %1103 = vmatpush1.bf16.msra.mxu0 %v904
        %1104 = vmatprep.subr.bf16.mxu0 %v899
        %1105 = vmatpush1.bf16.msra.mxu0 %v898
        %1106 = vmatprep.subr.bf16.mxu0 %v989
        %1107 = vmatpush2.bf16.msra.mxu0 %v988
        %1108 = vmatprep.subr.bf16.mxu0 %v983
        %1109 = vmatpush2.bf16.msra.mxu0 %v982
        %1110 = vmatprep.subr.bf16.mxu0 %v977
        %1111 = vmatpush2.bf16.msra.mxu0 %v976
        %1112 = vmatprep.subr.bf16.mxu0 %v971
        %1113 = vmatpush2.bf16.msra.mxu0 %v970
        %1114 = vmatprep.subr.bf16.mxu0 %v965
        %1115 = vmatpush2.bf16.msra.mxu0 %v964
        %1116 = vmatprep.subr.bf16.mxu0 %v959
        %1117 = vmatpush2.bf16.msra.mxu0 %v958
        %1118 = vmatprep.subr.bf16.mxu0 %v953
        %1119 = vmatpush2.bf16.msra.mxu0 %v952
        %1120 = vmatprep.subr.bf16.mxu0 %v947
        %1121 = vmatpush2.bf16.msra.mxu0 %v946
        %1122 = vmatprep.mubr.bf16.mxu0 %v511
        %1123 = vmatmul.mubr.bf16.gmra.mxu0 %v510
        %v1124 = vpop.f32.mrf.mxu0
        %v1125 = vadd.f32 0.0, %v1124
        %v1126 = vpop.f32.mrf.mxu0
        %v1127 = vadd.f32 0.0, %v1126
        %v1128 = vpop.f32.mrf.mxu0
        %v1129 = vadd.f32 0.0, %v1128
        %v1130 = vpop.f32.mrf.mxu0
        %v1131 = vadd.f32 0.0, %v1130
        %1132 = vmatprep.mubr.bf16.mxu0 %v513
        %1133 = vmatmul.mubr.bf16.gmra.mxu0 %v512
        %v1134 = vpop.f32.mrf.mxu0
        %v1135 = vadd.f32 0.0, %v1134
        %v1136 = vpop.f32.mrf.mxu0
        %v1137 = vadd.f32 0.0, %v1136
        %v1138 = vpop.f32.mrf.mxu0
        %v1139 = vadd.f32 0.0, %v1138
        %v1140 = vpop.f32.mrf.mxu0
        %v1141 = vadd.f32 0.0, %v1140
        %1142 = vdwg.mxu0
        %1143 = vmatprep.subr.bf16.mxu0 %v943
        %1144 = vmatpush1.bf16.msra.mxu0 %v942
        %1145 = vmatprep.subr.bf16.mxu0 %v937
        %1146 = vmatpush1.bf16.msra.mxu0 %v936
        %1147 = vmatprep.subr.bf16.mxu0 %v931
        %1148 = vmatpush1.bf16.msra.mxu0 %v930
        %1149 = vmatprep.subr.bf16.mxu0 %v925
        %1150 = vmatpush1.bf16.msra.mxu0 %v924
        %1151 = vmatprep.subr.bf16.mxu0 %v919
        %1152 = vmatpush1.bf16.msra.mxu0 %v918
        %1153 = vmatprep.subr.bf16.mxu0 %v913
        %1154 = vmatpush1.bf16.msra.mxu0 %v912
        %1155 = vmatprep.subr.bf16.mxu0 %v907
        %1156 = vmatpush1.bf16.msra.mxu0 %v906
        %1157 = vmatprep.subr.bf16.mxu0 %v901
        %1158 = vmatpush1.bf16.msra.mxu0 %v900
        %1159 = vmatprep.subr.bf16.mxu0 %v991
        %1160 = vmatpush2.bf16.msra.mxu0 %v990
        %1161 = vmatprep.subr.bf16.mxu0 %v985
        %1162 = vmatpush2.bf16.msra.mxu0 %v984
        %1163 = vmatprep.subr.bf16.mxu0 %v979
        %1164 = vmatpush2.bf16.msra.mxu0 %v978
        %1165 = vmatprep.subr.bf16.mxu0 %v973
        %1166 = vmatpush2.bf16.msra.mxu0 %v972
        %1167 = vmatprep.subr.bf16.mxu0 %v967
        %1168 = vmatpush2.bf16.msra.mxu0 %v966
        %1169 = vmatprep.subr.bf16.mxu0 %v961
        %1170 = vmatpush2.bf16.msra.mxu0 %v960
        %1171 = vmatprep.subr.bf16.mxu0 %v955
        %1172 = vmatpush2.bf16.msra.mxu0 %v954
        %1173 = vmatprep.subr.bf16.mxu0 %v949
        %1174 = vmatpush2.bf16.msra.mxu0 %v948
        %1175 = vmatprep.mubr.bf16.mxu0 %v511
        %1176 = vmatmul.mubr.bf16.gmra.mxu0 %v510
        %v1177 = vpop.f32.mrf.mxu0
        %v1178 = vadd.f32 0.0, %v1177
        %v1179 = vpop.f32.mrf.mxu0
        %v1180 = vadd.f32 0.0, %v1179
        %v1181 = vpop.f32.mrf.mxu0
        %v1182 = vadd.f32 0.0, %v1181
        %v1183 = vpop.f32.mrf.mxu0
        %v1184 = vadd.f32 0.0, %v1183
        %1185 = vmatprep.mubr.bf16.mxu0 %v513
        %1186 = vmatmul.mubr.bf16.gmra.mxu0 %v512
        %v1187 = vpop.f32.mrf.mxu0
        %v1188 = vadd.f32 0.0, %v1187
        %v1189 = vpop.f32.mrf.mxu0
        %v1190 = vadd.f32 0.0, %v1189
        %v1191 = vpop.f32.mrf.mxu0
        %v1192 = vadd.f32 0.0, %v1191
        %v1193 = vpop.f32.mrf.mxu0
        %v1194 = vadd.f32 0.0, %v1193
        %1195 = vdwg.mxu0
        %1196 = vmatprep.subr.bf16.mxu0 %v945
        %1197 = vmatpush1.bf16.msra.mxu0 %v944
        %1198 = vmatprep.subr.bf16.mxu0 %v939
        %1199 = vmatpush1.bf16.msra.mxu0 %v938
        %1200 = vmatprep.subr.bf16.mxu0 %v933
        %1201 = vmatpush1.bf16.msra.mxu0 %v932
        %1202 = vmatprep.subr.bf16.mxu0 %v927
        %1203 = vmatpush1.bf16.msra.mxu0 %v926
        %1204 = vmatprep.subr.bf16.mxu0 %v921
        %1205 = vmatpush1.bf16.msra.mxu0 %v920
        %1206 = vmatprep.subr.bf16.mxu0 %v915
        %1207 = vmatpush1.bf16.msra.mxu0 %v914
        %1208 = vmatprep.subr.bf16.mxu0 %v909
        %1209 = vmatpush1.bf16.msra.mxu0 %v908
        %1210 = vmatprep.subr.bf16.mxu0 %v903
        %1211 = vmatpush1.bf16.msra.mxu0 %v902
        %1212 = vmatprep.subr.bf16.mxu0 %v993
        %1213 = vmatpush2.bf16.msra.mxu0 %v992
        %1214 = vmatprep.subr.bf16.mxu0 %v987
        %1215 = vmatpush2.bf16.msra.mxu0 %v986
        %1216 = vmatprep.subr.bf16.mxu0 %v981
        %1217 = vmatpush2.bf16.msra.mxu0 %v980
        %1218 = vmatprep.subr.bf16.mxu0 %v975
        %1219 = vmatpush2.bf16.msra.mxu0 %v974
        %1220 = vmatprep.subr.bf16.mxu0 %v969
        %1221 = vmatpush2.bf16.msra.mxu0 %v968
        %1222 = vmatprep.subr.bf16.mxu0 %v963
        %1223 = vmatpush2.bf16.msra.mxu0 %v962
        %1224 = vmatprep.subr.bf16.mxu0 %v957
        %1225 = vmatpush2.bf16.msra.mxu0 %v956
        %1226 = vmatprep.subr.bf16.mxu0 %v951
        %1227 = vmatpush2.bf16.msra.mxu0 %v950
        %1228 = vmatprep.mubr.bf16.mxu0 %v511
        %1229 = vmatmul.mubr.bf16.gmra.mxu0 %v510
        %v1230 = vpop.f32.mrf.mxu0
        %v1231 = vadd.f32 0.0, %v1230
        %v1232 = vpop.f32.mrf.mxu0
        %v1233 = vadd.f32 0.0, %v1232
        %v1234 = vpop.f32.mrf.mxu0
        %v1235 = vadd.f32 0.0, %v1234
        %v1236 = vpop.f32.mrf.mxu0
        %v1237 = vadd.f32 0.0, %v1236
        %1238 = vmatprep.mubr.bf16.mxu0 %v513
        %1239 = vmatmul.mubr.bf16.gmra.mxu0 %v512
        %v1240 = vpop.f32.mrf.mxu0
        %v1241 = vadd.f32 0.0, %v1240
        %v1242 = vpop.f32.mrf.mxu0
        %v1243 = vadd.f32 0.0, %v1242
        %v1244 = vpop.f32.mrf.mxu0
        %v1245 = vadd.f32 0.0, %v1244
        %v1246 = vpop.f32.mrf.mxu0
        %v1247 = vadd.f32 0.0, %v1246
        %1248 = vdwg.mxu0
        %v1249 = vld [vmem:[%s386] sm:$0xff]
        %v1250 = vld [vmem:[%s386 + $0x8] sm:$0xff]
        %v1251 = vld [vmem:[%s386 + $0x10] sm:$0xff]
        %v1252 = vld [vmem:[%s386 + $0x18] sm:$0xff]
        %v1253 = vld [vmem:[%s392] sm:$0xff]
        %v1254 = vld [vmem:[%s392 + $0x8] sm:$0xff]
        %v1255 = vld [vmem:[%s392 + $0x10] sm:$0xff]
        %v1256 = vld [vmem:[%s392 + $0x18] sm:$0xff]
        %v1257 = vcombine.high %v1125, 0.0
        %v1259 = vunpack.c.l.s4 1983009808
        %v1260 = vunpack.c.0.s8 %v1259
        %v1261 = vlaneseq
        %v1262 = vshrl.u32 %v1261, 7
        %v1263 = vsub.s32 %v1260, %v1262
        %v1264 = vrot.slane %v1125, %v1263
        %v1266 = vunpack.c.l.s4 1983009808
        %v1267 = vunpack.c.0.s8 %v1266
        %v1268 = vlaneseq
        %v1269 = vshrl.u32 %v1268, 7
        %v1270 = vsub.s32 %v1267, %v1269
        %v1271 = vrot.slane %v1257, %v1270
        %v1272 = vcombine.high %v1127, 0.0
        %v1274 = vunpack.c.l.s4 1983009808
        %v1275 = vunpack.c.0.s8 %v1274
        %v1276 = vlaneseq
        %v1277 = vshrl.u32 %v1276, 7
        %v1278 = vsub.s32 %v1275, %v1277
        %v1279 = vrot.slane %v1127, %v1278
        %v1281 = vunpack.c.l.s4 1983009808
        %v1282 = vunpack.c.0.s8 %v1281
        %v1283 = vlaneseq
        %v1284 = vshrl.u32 %v1283, 7
        %v1285 = vsub.s32 %v1282, %v1284
        %v1286 = vrot.slane %v1272, %v1285
        %v1287 = vcombine.low %v1264, %v1279
        %v1288 = vcombine.high %v1264, %v1279
        %v1290 = vunpack.c.l.s4 1934713408
        %v1291 = vunpack.c.0.s8 %v1290
        %v1292 = vlaneseq
        %v1293 = vshrl.u32 %v1292, 7
        %v1294 = vsub.s32 %v1291, %v1293
        %v1295 = vrot.slane %v1287, %v1294
        %v1297 = vunpack.c.l.s4 1934713408
        %v1298 = vunpack.c.0.s8 %v1297
        %v1299 = vlaneseq
        %v1300 = vshrl.u32 %v1299, 7
        %v1301 = vsub.s32 %v1298, %v1300
        %v1302 = vrot.slane %v1288, %v1301
        %v1303 = vcombine.low %v1271, %v1286
        %v1304 = vcombine.high %v1271, %v1286
        %v1306 = vunpack.c.l.s4 1934713408
        %v1307 = vunpack.c.0.s8 %v1306
        %v1308 = vlaneseq
        %v1309 = vshrl.u32 %v1308, 7
        %v1310 = vsub.s32 %v1307, %v1309
        %v1311 = vrot.slane %v1303, %v1310
        %v1313 = vunpack.c.l.s4 1934713408
        %v1314 = vunpack.c.0.s8 %v1313
        %v1315 = vlaneseq
        %v1316 = vshrl.u32 %v1315, 7
        %v1317 = vsub.s32 %v1314, %v1316
        %v1318 = vrot.slane %v1304, %v1317
        %v1319 = vcombine.high %v1295, 0.0
        %v1320 = vcombine.high %v1302, 0.0
        %v1321 = vcombine.high %v1311, 0.0
        %v1322 = vcombine.high %v1318, 0.0
        %v1323 = vcombine.high %v1129, 0.0
        %v1325 = vunpack.c.l.s4 1983009808
        %v1326 = vunpack.c.0.s8 %v1325
        %v1327 = vlaneseq
        %v1328 = vshrl.u32 %v1327, 7
        %v1329 = vsub.s32 %v1326, %v1328
        %v1330 = vrot.slane %v1129, %v1329
        %v1332 = vunpack.c.l.s4 1983009808
        %v1333 = vunpack.c.0.s8 %v1332
        %v1334 = vlaneseq
        %v1335 = vshrl.u32 %v1334, 7
        %v1336 = vsub.s32 %v1333, %v1335
        %v1337 = vrot.slane %v1323, %v1336
        %v1338 = vcombine.high %v1131, 0.0
        %v1340 = vunpack.c.l.s4 1983009808
        %v1341 = vunpack.c.0.s8 %v1340
        %v1342 = vlaneseq
        %v1343 = vshrl.u32 %v1342, 7
        %v1344 = vsub.s32 %v1341, %v1343
        %v1345 = vrot.slane %v1131, %v1344
        %v1347 = vunpack.c.l.s4 1983009808
        %v1348 = vunpack.c.0.s8 %v1347
        %v1349 = vlaneseq
        %v1350 = vshrl.u32 %v1349, 7
        %v1351 = vsub.s32 %v1348, %v1350
        %v1352 = vrot.slane %v1338, %v1351
        %v1353 = vcombine.low %v1330, %v1345
        %v1354 = vcombine.high %v1330, %v1345
        %v1356 = vunpack.c.l.s4 1934713408
        %v1357 = vunpack.c.0.s8 %v1356
        %v1358 = vlaneseq
        %v1359 = vshrl.u32 %v1358, 7
        %v1360 = vsub.s32 %v1357, %v1359
        %v1361 = vrot.slane %v1353, %v1360
        %v1363 = vunpack.c.l.s4 1934713408
        %v1364 = vunpack.c.0.s8 %v1363
        %v1365 = vlaneseq
        %v1366 = vshrl.u32 %v1365, 7
        %v1367 = vsub.s32 %v1364, %v1366
        %v1368 = vrot.slane %v1354, %v1367
        %v1369 = vcombine.low %v1337, %v1352
        %v1370 = vcombine.high %v1337, %v1352
        %v1372 = vunpack.c.l.s4 1934713408
        %v1373 = vunpack.c.0.s8 %v1372
        %v1374 = vlaneseq
        %v1375 = vshrl.u32 %v1374, 7
        %v1376 = vsub.s32 %v1373, %v1375
        %v1377 = vrot.slane %v1369, %v1376
        %v1379 = vunpack.c.l.s4 1934713408
        %v1380 = vunpack.c.0.s8 %v1379
        %v1381 = vlaneseq
        %v1382 = vshrl.u32 %v1381, 7
        %v1383 = vsub.s32 %v1380, %v1382
        %v1384 = vrot.slane %v1370, %v1383
        %v1385 = vcombine.high %v1361, 0.0
        %v1386 = vcombine.high %v1368, 0.0
        %v1387 = vcombine.high %v1377, 0.0
        %v1388 = vcombine.high %v1384, 0.0
        %v1389 = vcombine.high %v1135, 0.0
        %v1391 = vunpack.c.l.s4 1983009808
        %v1392 = vunpack.c.0.s8 %v1391
        %v1393 = vlaneseq
        %v1394 = vshrl.u32 %v1393, 7
        %v1395 = vsub.s32 %v1392, %v1394
        %v1396 = vrot.slane %v1135, %v1395
        %v1398 = vunpack.c.l.s4 1983009808
        %v1399 = vunpack.c.0.s8 %v1398
        %v1400 = vlaneseq
        %v1401 = vshrl.u32 %v1400, 7
        %v1402 = vsub.s32 %v1399, %v1401
        %v1403 = vrot.slane %v1389, %v1402
        %v1404 = vcombine.high %v1137, 0.0
        %v1406 = vunpack.c.l.s4 1983009808
        %v1407 = vunpack.c.0.s8 %v1406
        %v1408 = vlaneseq
        %v1409 = vshrl.u32 %v1408, 7
        %v1410 = vsub.s32 %v1407, %v1409
        %v1411 = vrot.slane %v1137, %v1410
        %v1413 = vunpack.c.l.s4 1983009808
        %v1414 = vunpack.c.0.s8 %v1413
        %v1415 = vlaneseq
        %v1416 = vshrl.u32 %v1415, 7
        %v1417 = vsub.s32 %v1414, %v1416
        %v1418 = vrot.slane %v1404, %v1417
        %v1419 = vcombine.low %v1396, %v1411
        %v1420 = vcombine.high %v1396, %v1411
        %v1422 = vunpack.c.l.s4 1934713408
        %v1423 = vunpack.c.0.s8 %v1422
        %v1424 = vlaneseq
        %v1425 = vshrl.u32 %v1424, 7
        %v1426 = vsub.s32 %v1423, %v1425
        %v1427 = vrot.slane %v1419, %v1426
        %v1429 = vunpack.c.l.s4 1934713408
        %v1430 = vunpack.c.0.s8 %v1429
        %v1431 = vlaneseq
        %v1432 = vshrl.u32 %v1431, 7
        %v1433 = vsub.s32 %v1430, %v1432
        %v1434 = vrot.slane %v1420, %v1433
        %v1435 = vcombine.low %v1403, %v1418
        %v1436 = vcombine.high %v1403, %v1418
        %v1438 = vunpack.c.l.s4 1934713408
        %v1439 = vunpack.c.0.s8 %v1438
        %v1440 = vlaneseq
        %v1441 = vshrl.u32 %v1440, 7
        %v1442 = vsub.s32 %v1439, %v1441
        %v1443 = vrot.slane %v1435, %v1442
        %v1445 = vunpack.c.l.s4 1934713408
        %v1446 = vunpack.c.0.s8 %v1445
        %v1447 = vlaneseq
        %v1448 = vshrl.u32 %v1447, 7
        %v1449 = vsub.s32 %v1446, %v1448
        %v1450 = vrot.slane %v1436, %v1449
        %v1451 = vcombine.high %v1427, 0.0
        %v1452 = vcombine.high %v1434, 0.0
        %v1453 = vcombine.high %v1443, 0.0
        %v1454 = vcombine.high %v1450, 0.0
        %v1455 = vcombine.high %v1139, 0.0
        %v1457 = vunpack.c.l.s4 1983009808
        %v1458 = vunpack.c.0.s8 %v1457
        %v1459 = vlaneseq
        %v1460 = vshrl.u32 %v1459, 7
        %v1461 = vsub.s32 %v1458, %v1460
        %v1462 = vrot.slane %v1139, %v1461
        %v1464 = vunpack.c.l.s4 1983009808
        %v1465 = vunpack.c.0.s8 %v1464
        %v1466 = vlaneseq
        %v1467 = vshrl.u32 %v1466, 7
        %v1468 = vsub.s32 %v1465, %v1467
        %v1469 = vrot.slane %v1455, %v1468
        %v1470 = vcombine.high %v1141, 0.0
        %v1472 = vunpack.c.l.s4 1983009808
        %v1473 = vunpack.c.0.s8 %v1472
        %v1474 = vlaneseq
        %v1475 = vshrl.u32 %v1474, 7
        %v1476 = vsub.s32 %v1473, %v1475
        %v1477 = vrot.slane %v1141, %v1476
        %v1479 = vunpack.c.l.s4 1983009808
        %v1480 = vunpack.c.0.s8 %v1479
        %v1481 = vlaneseq
        %v1482 = vshrl.u32 %v1481, 7
        %v1483 = vsub.s32 %v1480, %v1482
        %v1484 = vrot.slane %v1470, %v1483
        %v1485 = vcombine.low %v1462, %v1477
        %v1486 = vcombine.high %v1462, %v1477
        %v1488 = vunpack.c.l.s4 1934713408
        %v1489 = vunpack.c.0.s8 %v1488
        %v1490 = vlaneseq
        %v1491 = vshrl.u32 %v1490, 7
        %v1492 = vsub.s32 %v1489, %v1491
        %v1493 = vrot.slane %v1485, %v1492
        %v1495 = vunpack.c.l.s4 1934713408
        %v1496 = vunpack.c.0.s8 %v1495
        %v1497 = vlaneseq
        %v1498 = vshrl.u32 %v1497, 7
        %v1499 = vsub.s32 %v1496, %v1498
        %v1500 = vrot.slane %v1486, %v1499
        %v1501 = vcombine.low %v1469, %v1484
        %v1502 = vcombine.high %v1469, %v1484
        %v1504 = vunpack.c.l.s4 1934713408
        %v1505 = vunpack.c.0.s8 %v1504
        %v1506 = vlaneseq
        %v1507 = vshrl.u32 %v1506, 7
        %v1508 = vsub.s32 %v1505, %v1507
        %v1509 = vrot.slane %v1501, %v1508
        %v1511 = vunpack.c.l.s4 1934713408
        %v1512 = vunpack.c.0.s8 %v1511
        %v1513 = vlaneseq
        %v1514 = vshrl.u32 %v1513, 7
        %v1515 = vsub.s32 %v1512, %v1514
        %v1516 = vrot.slane %v1502, %v1515
        %v1517 = vcombine.high %v1493, 0.0
        %v1518 = vcombine.high %v1500, 0.0
        %v1519 = vcombine.high %v1509, 0.0
        %v1520 = vcombine.high %v1516, 0.0
        %v1521 = vcombine.low %v1295, %v1302
        %v1523 = vunpack.c.l.s4 1983009808
        %v1524 = vunpack.c.0.s8 %v1523
        %v1525 = vlaneseq
        %v1526 = vshrl.u32 %v1525, 7
        %v1527 = vsub.s32 %v1524, %v1526
        %v1528 = vrot.slane %v1521, %v1527
        %v1529 = vcombine.low %v1319, %v1320
        %v1531 = vunpack.c.l.s4 1983009808
        %v1532 = vunpack.c.0.s8 %v1531
        %v1533 = vlaneseq
        %v1534 = vshrl.u32 %v1533, 7
        %v1535 = vsub.s32 %v1532, %v1534
        %v1536 = vrot.slane %v1529, %v1535
        %v1537 = vcombine.low %v1311, %v1318
        %v1539 = vunpack.c.l.s4 1983009808
        %v1540 = vunpack.c.0.s8 %v1539
        %v1541 = vlaneseq
        %v1542 = vshrl.u32 %v1541, 7
        %v1543 = vsub.s32 %v1540, %v1542
        %v1544 = vrot.slane %v1537, %v1543
        %v1545 = vcombine.low %v1321, %v1322
        %v1547 = vunpack.c.l.s4 1983009808
        %v1548 = vunpack.c.0.s8 %v1547
        %v1549 = vlaneseq
        %v1550 = vshrl.u32 %v1549, 7
        %v1551 = vsub.s32 %v1548, %v1550
        %v1552 = vrot.slane %v1545, %v1551
        %v1553 = vcombine.low %v1528, %v1536
        %v1555 = vunpack.c.l.s4 1934713408
        %v1556 = vunpack.c.0.s8 %v1555
        %v1557 = vlaneseq
        %v1558 = vshrl.u32 %v1557, 7
        %v1559 = vsub.s32 %v1556, %v1558
        %v1560 = vrot.slane %v1553, %v1559
        %v1561 = vcombine.low %v1544, %v1552
        %v1563 = vunpack.c.l.s4 1934713408
        %v1564 = vunpack.c.0.s8 %v1563
        %v1565 = vlaneseq
        %v1566 = vshrl.u32 %v1565, 7
        %v1567 = vsub.s32 %v1564, %v1566
        %v1568 = vrot.slane %v1561, %v1567
        %v1569 = vcombine.low %v1560, %v1568
        %v1570 = vcombine.high %v1560, %v1568
        %v1571 = vcombine.low %v1361, %v1368
        %v1573 = vunpack.c.l.s4 1983009808
        %v1574 = vunpack.c.0.s8 %v1573
        %v1575 = vlaneseq
        %v1576 = vshrl.u32 %v1575, 7
        %v1577 = vsub.s32 %v1574, %v1576
        %v1578 = vrot.slane %v1571, %v1577
        %v1579 = vcombine.low %v1385, %v1386
        %v1581 = vunpack.c.l.s4 1983009808
        %v1582 = vunpack.c.0.s8 %v1581
        %v1583 = vlaneseq
        %v1584 = vshrl.u32 %v1583, 7
        %v1585 = vsub.s32 %v1582, %v1584
        %v1586 = vrot.slane %v1579, %v1585
        %v1587 = vcombine.low %v1377, %v1384
        %v1589 = vunpack.c.l.s4 1983009808
        %v1590 = vunpack.c.0.s8 %v1589
        %v1591 = vlaneseq
        %v1592 = vshrl.u32 %v1591, 7
        %v1593 = vsub.s32 %v1590, %v1592
        %v1594 = vrot.slane %v1587, %v1593
        %v1595 = vcombine.low %v1387, %v1388
        %v1597 = vunpack.c.l.s4 1983009808
        %v1598 = vunpack.c.0.s8 %v1597
        %v1599 = vlaneseq
        %v1600 = vshrl.u32 %v1599, 7
        %v1601 = vsub.s32 %v1598, %v1600
        %v1602 = vrot.slane %v1595, %v1601
        %v1603 = vcombine.low %v1578, %v1586
        %v1605 = vunpack.c.l.s4 1934713408
        %v1606 = vunpack.c.0.s8 %v1605
        %v1607 = vlaneseq
        %v1608 = vshrl.u32 %v1607, 7
        %v1609 = vsub.s32 %v1606, %v1608
        %v1610 = vrot.slane %v1603, %v1609
        %v1611 = vcombine.low %v1594, %v1602
        %v1613 = vunpack.c.l.s4 1934713408
        %v1614 = vunpack.c.0.s8 %v1613
        %v1615 = vlaneseq
        %v1616 = vshrl.u32 %v1615, 7
        %v1617 = vsub.s32 %v1614, %v1616
        %v1618 = vrot.slane %v1611, %v1617
        %v1619 = vcombine.low %v1610, %v1618
        %v1620 = vcombine.high %v1610, %v1618
        %v1621 = vcombine.low %v1427, %v1434
        %v1623 = vunpack.c.l.s4 1983009808
        %v1624 = vunpack.c.0.s8 %v1623
        %v1625 = vlaneseq
        %v1626 = vshrl.u32 %v1625, 7
        %v1627 = vsub.s32 %v1624, %v1626
        %v1628 = vrot.slane %v1621, %v1627
        %v1629 = vcombine.low %v1451, %v1452
        %v1631 = vunpack.c.l.s4 1983009808
        %v1632 = vunpack.c.0.s8 %v1631
        %v1633 = vlaneseq
        %v1634 = vshrl.u32 %v1633, 7
        %v1635 = vsub.s32 %v1632, %v1634
        %v1636 = vrot.slane %v1629, %v1635
        %v1637 = vcombine.low %v1443, %v1450
        %v1639 = vunpack.c.l.s4 1983009808
        %v1640 = vunpack.c.0.s8 %v1639
        %v1641 = vlaneseq
        %v1642 = vshrl.u32 %v1641, 7
        %v1643 = vsub.s32 %v1640, %v1642
        %v1644 = vrot.slane %v1637, %v1643
        %v1645 = vcombine.low %v1453, %v1454
        %v1647 = vunpack.c.l.s4 1983009808
        %v1648 = vunpack.c.0.s8 %v1647
        %v1649 = vlaneseq
        %v1650 = vshrl.u32 %v1649, 7
        %v1651 = vsub.s32 %v1648, %v1650
        %v1652 = vrot.slane %v1645, %v1651
        %v1653 = vcombine.low %v1628, %v1636
        %v1655 = vunpack.c.l.s4 1934713408
        %v1656 = vunpack.c.0.s8 %v1655
        %v1657 = vlaneseq
        %v1658 = vshrl.u32 %v1657, 7
        %v1659 = vsub.s32 %v1656, %v1658
        %v1660 = vrot.slane %v1653, %v1659
        %v1661 = vcombine.low %v1644, %v1652
        %v1663 = vunpack.c.l.s4 1934713408
        %v1664 = vunpack.c.0.s8 %v1663
        %v1665 = vlaneseq
        %v1666 = vshrl.u32 %v1665, 7
        %v1667 = vsub.s32 %v1664, %v1666
        %v1668 = vrot.slane %v1661, %v1667
        %v1669 = vcombine.low %v1660, %v1668
        %v1670 = vcombine.high %v1660, %v1668
        %v1671 = vcombine.low %v1493, %v1500
        %v1673 = vunpack.c.l.s4 1983009808
        %v1674 = vunpack.c.0.s8 %v1673
        %v1675 = vlaneseq
        %v1676 = vshrl.u32 %v1675, 7
        %v1677 = vsub.s32 %v1674, %v1676
        %v1678 = vrot.slane %v1671, %v1677
        %v1679 = vcombine.low %v1517, %v1518
        %v1681 = vunpack.c.l.s4 1983009808
        %v1682 = vunpack.c.0.s8 %v1681
        %v1683 = vlaneseq
        %v1684 = vshrl.u32 %v1683, 7
        %v1685 = vsub.s32 %v1682, %v1684
        %v1686 = vrot.slane %v1679, %v1685
        %v1687 = vcombine.low %v1509, %v1516
        %v1689 = vunpack.c.l.s4 1983009808
        %v1690 = vunpack.c.0.s8 %v1689
        %v1691 = vlaneseq
        %v1692 = vshrl.u32 %v1691, 7
        %v1693 = vsub.s32 %v1690, %v1692
        %v1694 = vrot.slane %v1687, %v1693
        %v1695 = vcombine.low %v1519, %v1520
        %v1697 = vunpack.c.l.s4 1983009808
        %v1698 = vunpack.c.0.s8 %v1697
        %v1699 = vlaneseq
        %v1700 = vshrl.u32 %v1699, 7
        %v1701 = vsub.s32 %v1698, %v1700
        %v1702 = vrot.slane %v1695, %v1701
        %v1703 = vcombine.low %v1678, %v1686
        %v1705 = vunpack.c.l.s4 1934713408
        %v1706 = vunpack.c.0.s8 %v1705
        %v1707 = vlaneseq
        %v1708 = vshrl.u32 %v1707, 7
        %v1709 = vsub.s32 %v1706, %v1708
        %v1710 = vrot.slane %v1703, %v1709
        %v1711 = vcombine.low %v1694, %v1702
        %v1713 = vunpack.c.l.s4 1934713408
        %v1714 = vunpack.c.0.s8 %v1713
        %v1715 = vlaneseq
        %v1716 = vshrl.u32 %v1715, 7
        %v1717 = vsub.s32 %v1714, %v1716
        %v1718 = vrot.slane %v1711, %v1717
        %v1719 = vcombine.low %v1710, %v1718
        %v1720 = vcombine.high %v1710, %v1718
        %v1721 = vmul.f32 %v1569, %v1249
        %v1722 = vmul.f32 %v1619, %v1250
        %v1723 = vmul.f32 %v1669, %v1251
        %v1724 = vmul.f32 %v1719, %v1252
        %v1725 = vmul.f32 %v1570, %v1249
        %v1726 = vmul.f32 %v1620, %v1250
        %v1727 = vmul.f32 %v1670, %v1251
        %v1728 = vmul.f32 %v1720, %v1252
        %1733 = vrot.lane.b32.xlu0 %v1253, 32
        %v1734 = vpop.permute.xlu0 %1733
        %1735 = vrot.lane.b32.xlu0 %v1254, 32
        %v1736 = vpop.permute.xlu0 %1735
        %1737 = vrot.lane.b32.xlu0 %v1255, 32
        %v1738 = vpop.permute.xlu0 %1737
        %1739 = vrot.lane.b32.xlu0 %v1256, 32
        %v1740 = vpop.permute.xlu0 %1739
        %v1745 = vmul.f32 %v1569, %v1734
        %v1746 = vmul.f32 %v1619, %v1736
        %v1747 = vmul.f32 %v1669, %v1738
        %v1748 = vmul.f32 %v1719, %v1740
        %v1749 = vmul.f32 %v1570, %v1734
        %v1750 = vmul.f32 %v1620, %v1736
        %v1751 = vmul.f32 %v1670, %v1738
        %v1752 = vmul.f32 %v1720, %v1740
        %1761 = vrot.lane.b32.xlu0 %v1745, 96
        %v1762 = vpop.permute.xlu0 %1761
        %1763 = vrot.lane.b32.xlu0 %v1746, 96
        %v1764 = vpop.permute.xlu0 %1763
        %1765 = vrot.lane.b32.xlu0 %v1747, 96
        %v1766 = vpop.permute.xlu0 %1765
        %1767 = vrot.lane.b32.xlu0 %v1748, 96
        %v1768 = vpop.permute.xlu0 %1767
        %1769 = vrot.lane.b32.xlu0 %v1749, 96
        %v1770 = vpop.permute.xlu0 %1769
        %1771 = vrot.lane.b32.xlu0 %v1750, 96
        %v1772 = vpop.permute.xlu0 %1771
        %1773 = vrot.lane.b32.xlu0 %v1751, 96
        %v1774 = vpop.permute.xlu0 %1773
        %1775 = vrot.lane.b32.xlu0 %v1752, 96
        %v1776 = vpop.permute.xlu0 %1775
        %v1785 = vsub.f32 %v1721, %v1762
        %v1786 = vsub.f32 %v1722, %v1764
        %v1787 = vsub.f32 %v1723, %v1766
        %v1788 = vsub.f32 %v1724, %v1768
        %v1789 = vsub.f32 %v1725, %v1770
        %v1790 = vsub.f32 %v1726, %v1772
        %v1791 = vsub.f32 %v1727, %v1774
        %v1792 = vsub.f32 %v1728, %v1776
        %v1793 = vmul.f32 %v1569, %v1253
        %v1794 = vmul.f32 %v1619, %v1254
        %v1795 = vmul.f32 %v1669, %v1255
        %v1796 = vmul.f32 %v1719, %v1256
        %v1797 = vmul.f32 %v1570, %v1253
        %v1798 = vmul.f32 %v1620, %v1254
        %v1799 = vmul.f32 %v1670, %v1255
        %v1800 = vmul.f32 %v1720, %v1256
        %1805 = vrot.lane.b32.xlu0 %v1249, 32
        %v1806 = vpop.permute.xlu0 %1805
        %1807 = vrot.lane.b32.xlu0 %v1250, 32
        %v1808 = vpop.permute.xlu0 %1807
        %1809 = vrot.lane.b32.xlu0 %v1251, 32
        %v1810 = vpop.permute.xlu0 %1809
        %1811 = vrot.lane.b32.xlu0 %v1252, 32
        %v1812 = vpop.permute.xlu0 %1811
        %v1817 = vmul.f32 %v1569, %v1806
        %v1818 = vmul.f32 %v1619, %v1808
        %v1819 = vmul.f32 %v1669, %v1810
        %v1820 = vmul.f32 %v1719, %v1812
        %v1821 = vmul.f32 %v1570, %v1806
        %v1822 = vmul.f32 %v1620, %v1808
        %v1823 = vmul.f32 %v1670, %v1810
        %v1824 = vmul.f32 %v1720, %v1812
        %1833 = vrot.lane.b32.xlu0 %v1817, 96
        %v1834 = vpop.permute.xlu0 %1833
        %1835 = vrot.lane.b32.xlu0 %v1818, 96
        %v1836 = vpop.permute.xlu0 %1835
        %1837 = vrot.lane.b32.xlu0 %v1819, 96
        %v1838 = vpop.permute.xlu0 %1837
        %1839 = vrot.lane.b32.xlu0 %v1820, 96
        %v1840 = vpop.permute.xlu0 %1839
        %1841 = vrot.lane.b32.xlu0 %v1821, 96
        %v1842 = vpop.permute.xlu0 %1841
        %1843 = vrot.lane.b32.xlu0 %v1822, 96
        %v1844 = vpop.permute.xlu0 %1843
        %1845 = vrot.lane.b32.xlu0 %v1823, 96
        %v1846 = vpop.permute.xlu0 %1845
        %1847 = vrot.lane.b32.xlu0 %v1824, 96
        %v1848 = vpop.permute.xlu0 %1847
        %v1857 = vadd.f32 %v1793, %v1834
        %v1858 = vadd.f32 %v1794, %v1836
        %v1859 = vadd.f32 %v1795, %v1838
        %v1860 = vadd.f32 %v1796, %v1840
        %v1861 = vadd.f32 %v1797, %v1842
        %v1862 = vadd.f32 %v1798, %v1844
        %v1863 = vadd.f32 %v1799, %v1846
        %v1864 = vadd.f32 %v1800, %v1848
        %1873 = vrot.lane.b32.xlu0 %v1857, 32
        %v1874 = vpop.permute.xlu0 %1873
        %1875 = vrot.lane.b32.xlu0 %v1858, 32
        %v1876 = vpop.permute.xlu0 %1875
        %1877 = vrot.lane.b32.xlu0 %v1859, 32
        %v1878 = vpop.permute.xlu0 %1877
        %1879 = vrot.lane.b32.xlu0 %v1860, 32
        %v1880 = vpop.permute.xlu0 %1879
        %1881 = vrot.lane.b32.xlu0 %v1861, 32
        %v1882 = vpop.permute.xlu0 %1881
        %1883 = vrot.lane.b32.xlu0 %v1862, 32
        %v1884 = vpop.permute.xlu0 %1883
        %1885 = vrot.lane.b32.xlu0 %v1863, 32
        %v1886 = vpop.permute.xlu0 %1885
        %1887 = vrot.lane.b32.xlu0 %v1864, 32
        %v1888 = vpop.permute.xlu0 %1887
        %vm1897 = vcmask 261120
        %v1898 = vsel %vm1897, %v1785, %v1874
        %v1899 = vsel %vm1897, %v1786, %v1876
        %v1900 = vsel %vm1897, %v1787, %v1878
        %v1901 = vsel %vm1897, %v1788, %v1880
        %v1902 = vsel %vm1897, %v1789, %v1882
        %v1903 = vsel %vm1897, %v1790, %v1884
        %v1904 = vsel %vm1897, %v1791, %v1886
        %v1905 = vsel %vm1897, %v1792, %v1888
        %vm1906 = vcmask 523264
        %v1907 = vsel %vm1906, %v1898, %v1569
        %v1908 = vsel %vm1906, %v1899, %v1619
        %v1909 = vsel %vm1906, %v1900, %v1669
        %v1910 = vsel %vm1906, %v1901, %v1719
        %v1911 = vsel %vm1906, %v1902, %v1570
        %v1912 = vsel %vm1906, %v1903, %v1620
        %v1913 = vsel %vm1906, %v1904, %v1670
        %v1914 = vsel %vm1906, %v1905, %v1720
        %v1915 = vpack.c.bf16 %v1908, %v1907
        %v1916 = vpack.c.bf16 %v1910, %v1909
        %v1917 = vpack.c.bf16 %v1912, %v1911
        %v1918 = vpack.c.bf16 %v1914, %v1913
        %v1923 = vunpack.c.l.b16 %v1915
        %v1924 = vunpack.c.h.b16 %v1915
        %v1925 = vunpack.c.l.b16 %v1916
        %v1926 = vunpack.c.h.b16 %v1916
        %v1927 = vunpack.c.l.b16 %v1917
        %v1928 = vunpack.c.h.b16 %v1917
        %v1929 = vunpack.c.l.b16 %v1918
        %v1930 = vunpack.c.h.b16 %v1918
        %v1931 = vpack.c.b16 %v1923, %v1923
        %v1932 = vpack.c.b16 %v1924, %v1924
        %v1933 = vpack.c.b16 %v1925, %v1925
        %v1934 = vpack.c.b16 %v1926, %v1926
        %v1935 = vpack.c.b16 %v1927, %v1927
        %v1936 = vpack.c.b16 %v1928, %v1928
        %v1937 = vpack.c.b16 %v1929, %v1929
        %v1938 = vpack.c.b16 %v1930, %v1930
        %1947 = vst [vmem:[%s358] sm:$0xf] %v1931
        %1948 = vst [vmem:[%s358 + $0x4] sm:$0xf] %v1932
        %1949 = vst [vmem:[%s358 + $0x8] sm:$0xf] %v1933
        %1950 = vst [vmem:[%s358 + $0xc] sm:$0xf] %v1934
        %1951 = vst [vmem:[%s358 + $0x10] sm:$0xf] %v1935
        %1952 = vst [vmem:[%s358 + $0x14] sm:$0xf] %v1936
        %1953 = vst [vmem:[%s358 + $0x18] sm:$0xf] %v1937
        %1954 = vst [vmem:[%s358 + $0x1c] sm:$0xf] %v1938
        %v1955 = vcombine.high %v1178, 0.0
        %v1957 = vunpack.c.l.s4 1983009808
        %v1958 = vunpack.c.0.s8 %v1957
        %v1959 = vlaneseq
        %v1960 = vshrl.u32 %v1959, 7
        %v1961 = vsub.s32 %v1958, %v1960
        %v1962 = vrot.slane %v1178, %v1961
        %v1964 = vunpack.c.l.s4 1983009808
        %v1965 = vunpack.c.0.s8 %v1964
        %v1966 = vlaneseq
        %v1967 = vshrl.u32 %v1966, 7
        %v1968 = vsub.s32 %v1965, %v1967
        %v1969 = vrot.slane %v1955, %v1968
        %v1970 = vcombine.high %v1180, 0.0
        %v1972 = vunpack.c.l.s4 1983009808
        %v1973 = vunpack.c.0.s8 %v1972
        %v1974 = vlaneseq
        %v1975 = vshrl.u32 %v1974, 7
        %v1976 = vsub.s32 %v1973, %v1975
        %v1977 = vrot.slane %v1180, %v1976
        %v1979 = vunpack.c.l.s4 1983009808
        %v1980 = vunpack.c.0.s8 %v1979
        %v1981 = vlaneseq
        %v1982 = vshrl.u32 %v1981, 7
        %v1983 = vsub.s32 %v1980, %v1982
        %v1984 = vrot.slane %v1970, %v1983
        %v1985 = vcombine.low %v1962, %v1977
        %v1986 = vcombine.high %v1962, %v1977
        %v1988 = vunpack.c.l.s4 1934713408
        %v1989 = vunpack.c.0.s8 %v1988
        %v1990 = vlaneseq
        %v1991 = vshrl.u32 %v1990, 7
        %v1992 = vsub.s32 %v1989, %v1991
        %v1993 = vrot.slane %v1985, %v1992
        %v1995 = vunpack.c.l.s4 1934713408
        %v1996 = vunpack.c.0.s8 %v1995
        %v1997 = vlaneseq
        %v1998 = vshrl.u32 %v1997, 7
        %v1999 = vsub.s32 %v1996, %v1998
        %v2000 = vrot.slane %v1986, %v1999
        %v2001 = vcombine.low %v1969, %v1984
        %v2002 = vcombine.high %v1969, %v1984
        %v2004 = vunpack.c.l.s4 1934713408
        %v2005 = vunpack.c.0.s8 %v2004
        %v2006 = vlaneseq
        %v2007 = vshrl.u32 %v2006, 7
        %v2008 = vsub.s32 %v2005, %v2007
        %v2009 = vrot.slane %v2001, %v2008
        %v2011 = vunpack.c.l.s4 1934713408
        %v2012 = vunpack.c.0.s8 %v2011
        %v2013 = vlaneseq
        %v2014 = vshrl.u32 %v2013, 7
        %v2015 = vsub.s32 %v2012, %v2014
        %v2016 = vrot.slane %v2002, %v2015
        %v2017 = vcombine.high %v1993, 0.0
        %v2018 = vcombine.high %v2000, 0.0
        %v2019 = vcombine.high %v2009, 0.0
        %v2020 = vcombine.high %v2016, 0.0
        %v2021 = vcombine.high %v1182, 0.0
        %v2023 = vunpack.c.l.s4 1983009808
        %v2024 = vunpack.c.0.s8 %v2023
        %v2025 = vlaneseq
        %v2026 = vshrl.u32 %v2025, 7
        %v2027 = vsub.s32 %v2024, %v2026
        %v2028 = vrot.slane %v1182, %v2027
        %v2030 = vunpack.c.l.s4 1983009808
        %v2031 = vunpack.c.0.s8 %v2030
        %v2032 = vlaneseq
        %v2033 = vshrl.u32 %v2032, 7
        %v2034 = vsub.s32 %v2031, %v2033
        %v2035 = vrot.slane %v2021, %v2034
        %v2036 = vcombine.high %v1184, 0.0
        %v2038 = vunpack.c.l.s4 1983009808
        %v2039 = vunpack.c.0.s8 %v2038
        %v2040 = vlaneseq
        %v2041 = vshrl.u32 %v2040, 7
        %v2042 = vsub.s32 %v2039, %v2041
        %v2043 = vrot.slane %v1184, %v2042
        %v2045 = vunpack.c.l.s4 1983009808
        %v2046 = vunpack.c.0.s8 %v2045
        %v2047 = vlaneseq
        %v2048 = vshrl.u32 %v2047, 7
        %v2049 = vsub.s32 %v2046, %v2048
        %v2050 = vrot.slane %v2036, %v2049
        %v2051 = vcombine.low %v2028, %v2043
        %v2052 = vcombine.high %v2028, %v2043
        %v2054 = vunpack.c.l.s4 1934713408
        %v2055 = vunpack.c.0.s8 %v2054
        %v2056 = vlaneseq
        %v2057 = vshrl.u32 %v2056, 7
        %v2058 = vsub.s32 %v2055, %v2057
        %v2059 = vrot.slane %v2051, %v2058
        %v2061 = vunpack.c.l.s4 1934713408
        %v2062 = vunpack.c.0.s8 %v2061
        %v2063 = vlaneseq
        %v2064 = vshrl.u32 %v2063, 7
        %v2065 = vsub.s32 %v2062, %v2064
        %v2066 = vrot.slane %v2052, %v2065
        %v2067 = vcombine.low %v2035, %v2050
        %v2068 = vcombine.high %v2035, %v2050
        %v2070 = vunpack.c.l.s4 1934713408
        %v2071 = vunpack.c.0.s8 %v2070
        %v2072 = vlaneseq
        %v2073 = vshrl.u32 %v2072, 7
        %v2074 = vsub.s32 %v2071, %v2073
        %v2075 = vrot.slane %v2067, %v2074
        %v2077 = vunpack.c.l.s4 1934713408
        %v2078 = vunpack.c.0.s8 %v2077
        %v2079 = vlaneseq
        %v2080 = vshrl.u32 %v2079, 7
        %v2081 = vsub.s32 %v2078, %v2080
        %v2082 = vrot.slane %v2068, %v2081
        %v2083 = vcombine.high %v2059, 0.0
        %v2084 = vcombine.high %v2066, 0.0
        %v2085 = vcombine.high %v2075, 0.0
        %v2086 = vcombine.high %v2082, 0.0
        %v2087 = vcombine.high %v1188, 0.0
        %v2089 = vunpack.c.l.s4 1983009808
        %v2090 = vunpack.c.0.s8 %v2089
        %v2091 = vlaneseq
        %v2092 = vshrl.u32 %v2091, 7
        %v2093 = vsub.s32 %v2090, %v2092
        %v2094 = vrot.slane %v1188, %v2093
        %v2096 = vunpack.c.l.s4 1983009808
        %v2097 = vunpack.c.0.s8 %v2096
        %v2098 = vlaneseq
        %v2099 = vshrl.u32 %v2098, 7
        %v2100 = vsub.s32 %v2097, %v2099
        %v2101 = vrot.slane %v2087, %v2100
        %v2102 = vcombine.high %v1190, 0.0
        %v2104 = vunpack.c.l.s4 1983009808
        %v2105 = vunpack.c.0.s8 %v2104
        %v2106 = vlaneseq
        %v2107 = vshrl.u32 %v2106, 7
        %v2108 = vsub.s32 %v2105, %v2107
        %v2109 = vrot.slane %v1190, %v2108
        %v2111 = vunpack.c.l.s4 1983009808
        %v2112 = vunpack.c.0.s8 %v2111
        %v2113 = vlaneseq
        %v2114 = vshrl.u32 %v2113, 7
        %v2115 = vsub.s32 %v2112, %v2114
        %v2116 = vrot.slane %v2102, %v2115
        %v2117 = vcombine.low %v2094, %v2109
        %v2118 = vcombine.high %v2094, %v2109
        %v2120 = vunpack.c.l.s4 1934713408
        %v2121 = vunpack.c.0.s8 %v2120
        %v2122 = vlaneseq
        %v2123 = vshrl.u32 %v2122, 7
        %v2124 = vsub.s32 %v2121, %v2123
        %v2125 = vrot.slane %v2117, %v2124
        %v2127 = vunpack.c.l.s4 1934713408
        %v2128 = vunpack.c.0.s8 %v2127
        %v2129 = vlaneseq
        %v2130 = vshrl.u32 %v2129, 7
        %v2131 = vsub.s32 %v2128, %v2130
        %v2132 = vrot.slane %v2118, %v2131
        %v2133 = vcombine.low %v2101, %v2116
        %v2134 = vcombine.high %v2101, %v2116
        %v2136 = vunpack.c.l.s4 1934713408
        %v2137 = vunpack.c.0.s8 %v2136
        %v2138 = vlaneseq
        %v2139 = vshrl.u32 %v2138, 7
        %v2140 = vsub.s32 %v2137, %v2139
        %v2141 = vrot.slane %v2133, %v2140
        %v2143 = vunpack.c.l.s4 1934713408
        %v2144 = vunpack.c.0.s8 %v2143
        %v2145 = vlaneseq
        %v2146 = vshrl.u32 %v2145, 7
        %v2147 = vsub.s32 %v2144, %v2146
        %v2148 = vrot.slane %v2134, %v2147
        %v2149 = vcombine.high %v2125, 0.0
        %v2150 = vcombine.high %v2132, 0.0
        %v2151 = vcombine.high %v2141, 0.0
        %v2152 = vcombine.high %v2148, 0.0
        %v2153 = vcombine.high %v1192, 0.0
        %v2155 = vunpack.c.l.s4 1983009808
        %v2156 = vunpack.c.0.s8 %v2155
        %v2157 = vlaneseq
        %v2158 = vshrl.u32 %v2157, 7
        %v2159 = vsub.s32 %v2156, %v2158
        %v2160 = vrot.slane %v1192, %v2159
        %v2162 = vunpack.c.l.s4 1983009808
        %v2163 = vunpack.c.0.s8 %v2162
        %v2164 = vlaneseq
        %v2165 = vshrl.u32 %v2164, 7
        %v2166 = vsub.s32 %v2163, %v2165
        %v2167 = vrot.slane %v2153, %v2166
        %v2168 = vcombine.high %v1194, 0.0
        %v2170 = vunpack.c.l.s4 1983009808
        %v2171 = vunpack.c.0.s8 %v2170
        %v2172 = vlaneseq
        %v2173 = vshrl.u32 %v2172, 7
        %v2174 = vsub.s32 %v2171, %v2173
        %v2175 = vrot.slane %v1194, %v2174
        %v2177 = vunpack.c.l.s4 1983009808
        %v2178 = vunpack.c.0.s8 %v2177
        %v2179 = vlaneseq
        %v2180 = vshrl.u32 %v2179, 7
        %v2181 = vsub.s32 %v2178, %v2180
        %v2182 = vrot.slane %v2168, %v2181
        %v2183 = vcombine.low %v2160, %v2175
        %v2184 = vcombine.high %v2160, %v2175
        %v2186 = vunpack.c.l.s4 1934713408
        %v2187 = vunpack.c.0.s8 %v2186
        %v2188 = vlaneseq
        %v2189 = vshrl.u32 %v2188, 7
        %v2190 = vsub.s32 %v2187, %v2189
        %v2191 = vrot.slane %v2183, %v2190
        %v2193 = vunpack.c.l.s4 1934713408
        %v2194 = vunpack.c.0.s8 %v2193
        %v2195 = vlaneseq
        %v2196 = vshrl.u32 %v2195, 7
        %v2197 = vsub.s32 %v2194, %v2196
        %v2198 = vrot.slane %v2184, %v2197
        %v2199 = vcombine.low %v2167, %v2182
        %v2200 = vcombine.high %v2167, %v2182
        %v2202 = vunpack.c.l.s4 1934713408
        %v2203 = vunpack.c.0.s8 %v2202
        %v2204 = vlaneseq
        %v2205 = vshrl.u32 %v2204, 7
        %v2206 = vsub.s32 %v2203, %v2205
        %v2207 = vrot.slane %v2199, %v2206
        %v2209 = vunpack.c.l.s4 1934713408
        %v2210 = vunpack.c.0.s8 %v2209
        %v2211 = vlaneseq
        %v2212 = vshrl.u32 %v2211, 7
        %v2213 = vsub.s32 %v2210, %v2212
        %v2214 = vrot.slane %v2200, %v2213
        %v2215 = vcombine.high %v2191, 0.0
        %v2216 = vcombine.high %v2198, 0.0
        %v2217 = vcombine.high %v2207, 0.0
        %v2218 = vcombine.high %v2214, 0.0
        %v2219 = vcombine.low %v1993, %v2000
        %v2221 = vunpack.c.l.s4 1983009808
        %v2222 = vunpack.c.0.s8 %v2221
        %v2223 = vlaneseq
        %v2224 = vshrl.u32 %v2223, 7
        %v2225 = vsub.s32 %v2222, %v2224
        %v2226 = vrot.slane %v2219, %v2225
        %v2227 = vcombine.low %v2017, %v2018
        %v2229 = vunpack.c.l.s4 1983009808
        %v2230 = vunpack.c.0.s8 %v2229
        %v2231 = vlaneseq
        %v2232 = vshrl.u32 %v2231, 7
        %v2233 = vsub.s32 %v2230, %v2232
        %v2234 = vrot.slane %v2227, %v2233
        %v2235 = vcombine.low %v2009, %v2016
        %v2237 = vunpack.c.l.s4 1983009808
        %v2238 = vunpack.c.0.s8 %v2237
        %v2239 = vlaneseq
        %v2240 = vshrl.u32 %v2239, 7
        %v2241 = vsub.s32 %v2238, %v2240
        %v2242 = vrot.slane %v2235, %v2241
        %v2243 = vcombine.low %v2019, %v2020
        %v2245 = vunpack.c.l.s4 1983009808
        %v2246 = vunpack.c.0.s8 %v2245
        %v2247 = vlaneseq
        %v2248 = vshrl.u32 %v2247, 7
        %v2249 = vsub.s32 %v2246, %v2248
        %v2250 = vrot.slane %v2243, %v2249
        %v2251 = vcombine.low %v2226, %v2234
        %v2253 = vunpack.c.l.s4 1934713408
        %v2254 = vunpack.c.0.s8 %v2253
        %v2255 = vlaneseq
        %v2256 = vshrl.u32 %v2255, 7
        %v2257 = vsub.s32 %v2254, %v2256
        %v2258 = vrot.slane %v2251, %v2257
        %v2259 = vcombine.low %v2242, %v2250
        %v2261 = vunpack.c.l.s4 1934713408
        %v2262 = vunpack.c.0.s8 %v2261
        %v2263 = vlaneseq
        %v2264 = vshrl.u32 %v2263, 7
        %v2265 = vsub.s32 %v2262, %v2264
        %v2266 = vrot.slane %v2259, %v2265
        %v2267 = vcombine.low %v2258, %v2266
        %v2268 = vcombine.high %v2258, %v2266
        %v2269 = vcombine.low %v2059, %v2066
        %v2271 = vunpack.c.l.s4 1983009808
        %v2272 = vunpack.c.0.s8 %v2271
        %v2273 = vlaneseq
        %v2274 = vshrl.u32 %v2273, 7
        %v2275 = vsub.s32 %v2272, %v2274
        %v2276 = vrot.slane %v2269, %v2275
        %v2277 = vcombine.low %v2083, %v2084
        %v2279 = vunpack.c.l.s4 1983009808
        %v2280 = vunpack.c.0.s8 %v2279
        %v2281 = vlaneseq
        %v2282 = vshrl.u32 %v2281, 7
        %v2283 = vsub.s32 %v2280, %v2282
        %v2284 = vrot.slane %v2277, %v2283
        %v2285 = vcombine.low %v2075, %v2082
        %v2287 = vunpack.c.l.s4 1983009808
        %v2288 = vunpack.c.0.s8 %v2287
        %v2289 = vlaneseq
        %v2290 = vshrl.u32 %v2289, 7
        %v2291 = vsub.s32 %v2288, %v2290
        %v2292 = vrot.slane %v2285, %v2291
        %v2293 = vcombine.low %v2085, %v2086
        %v2295 = vunpack.c.l.s4 1983009808
        %v2296 = vunpack.c.0.s8 %v2295
        %v2297 = vlaneseq
        %v2298 = vshrl.u32 %v2297, 7
        %v2299 = vsub.s32 %v2296, %v2298
        %v2300 = vrot.slane %v2293, %v2299
        %v2301 = vcombine.low %v2276, %v2284
        %v2303 = vunpack.c.l.s4 1934713408
        %v2304 = vunpack.c.0.s8 %v2303
        %v2305 = vlaneseq
        %v2306 = vshrl.u32 %v2305, 7
        %v2307 = vsub.s32 %v2304, %v2306
        %v2308 = vrot.slane %v2301, %v2307
        %v2309 = vcombine.low %v2292, %v2300
        %v2311 = vunpack.c.l.s4 1934713408
        %v2312 = vunpack.c.0.s8 %v2311
        %v2313 = vlaneseq
        %v2314 = vshrl.u32 %v2313, 7
        %v2315 = vsub.s32 %v2312, %v2314
        %v2316 = vrot.slane %v2309, %v2315
        %v2317 = vcombine.low %v2308, %v2316
        %v2318 = vcombine.high %v2308, %v2316
        %v2319 = vcombine.low %v2125, %v2132
        %v2321 = vunpack.c.l.s4 1983009808
        %v2322 = vunpack.c.0.s8 %v2321
        %v2323 = vlaneseq
        %v2324 = vshrl.u32 %v2323, 7
        %v2325 = vsub.s32 %v2322, %v2324
        %v2326 = vrot.slane %v2319, %v2325
        %v2327 = vcombine.low %v2149, %v2150
        %v2329 = vunpack.c.l.s4 1983009808
        %v2330 = vunpack.c.0.s8 %v2329
        %v2331 = vlaneseq
        %v2332 = vshrl.u32 %v2331, 7
        %v2333 = vsub.s32 %v2330, %v2332
        %v2334 = vrot.slane %v2327, %v2333
        %v2335 = vcombine.low %v2141, %v2148
        %v2337 = vunpack.c.l.s4 1983009808
        %v2338 = vunpack.c.0.s8 %v2337
        %v2339 = vlaneseq
        %v2340 = vshrl.u32 %v2339, 7
        %v2341 = vsub.s32 %v2338, %v2340
        %v2342 = vrot.slane %v2335, %v2341
        %v2343 = vcombine.low %v2151, %v2152
        %v2345 = vunpack.c.l.s4 1983009808
        %v2346 = vunpack.c.0.s8 %v2345
        %v2347 = vlaneseq
        %v2348 = vshrl.u32 %v2347, 7
        %v2349 = vsub.s32 %v2346, %v2348
        %v2350 = vrot.slane %v2343, %v2349
        %v2351 = vcombine.low %v2326, %v2334
        %v2353 = vunpack.c.l.s4 1934713408
        %v2354 = vunpack.c.0.s8 %v2353
        %v2355 = vlaneseq
        %v2356 = vshrl.u32 %v2355, 7
        %v2357 = vsub.s32 %v2354, %v2356
        %v2358 = vrot.slane %v2351, %v2357
        %v2359 = vcombine.low %v2342, %v2350
        %v2361 = vunpack.c.l.s4 1934713408
        %v2362 = vunpack.c.0.s8 %v2361
        %v2363 = vlaneseq
        %v2364 = vshrl.u32 %v2363, 7
        %v2365 = vsub.s32 %v2362, %v2364
        %v2366 = vrot.slane %v2359, %v2365
        %v2367 = vcombine.low %v2358, %v2366
        %v2368 = vcombine.high %v2358, %v2366
        %v2369 = vcombine.low %v2191, %v2198
        %v2371 = vunpack.c.l.s4 1983009808
        %v2372 = vunpack.c.0.s8 %v2371
        %v2373 = vlaneseq
        %v2374 = vshrl.u32 %v2373, 7
        %v2375 = vsub.s32 %v2372, %v2374
        %v2376 = vrot.slane %v2369, %v2375
        %v2377 = vcombine.low %v2215, %v2216
        %v2379 = vunpack.c.l.s4 1983009808
        %v2380 = vunpack.c.0.s8 %v2379
        %v2381 = vlaneseq
        %v2382 = vshrl.u32 %v2381, 7
        %v2383 = vsub.s32 %v2380, %v2382
        %v2384 = vrot.slane %v2377, %v2383
        %v2385 = vcombine.low %v2207, %v2214
        %v2387 = vunpack.c.l.s4 1983009808
        %v2388 = vunpack.c.0.s8 %v2387
        %v2389 = vlaneseq
        %v2390 = vshrl.u32 %v2389, 7
        %v2391 = vsub.s32 %v2388, %v2390
        %v2392 = vrot.slane %v2385, %v2391
        %v2393 = vcombine.low %v2217, %v2218
        %v2395 = vunpack.c.l.s4 1983009808
        %v2396 = vunpack.c.0.s8 %v2395
        %v2397 = vlaneseq
        %v2398 = vshrl.u32 %v2397, 7
        %v2399 = vsub.s32 %v2396, %v2398
        %v2400 = vrot.slane %v2393, %v2399
        %v2401 = vcombine.low %v2376, %v2384
        %v2403 = vunpack.c.l.s4 1934713408
        %v2404 = vunpack.c.0.s8 %v2403
        %v2405 = vlaneseq
        %v2406 = vshrl.u32 %v2405, 7
        %v2407 = vsub.s32 %v2404, %v2406
        %v2408 = vrot.slane %v2401, %v2407
        %v2409 = vcombine.low %v2392, %v2400
        %v2411 = vunpack.c.l.s4 1934713408
        %v2412 = vunpack.c.0.s8 %v2411
        %v2413 = vlaneseq
        %v2414 = vshrl.u32 %v2413, 7
        %v2415 = vsub.s32 %v2412, %v2414
        %v2416 = vrot.slane %v2409, %v2415
        %v2417 = vcombine.low %v2408, %v2416
        %v2418 = vcombine.high %v2408, %v2416
        %v2419 = vmul.f32 %v2267, %v1249
        %v2420 = vmul.f32 %v2317, %v1250
        %v2421 = vmul.f32 %v2367, %v1251
        %v2422 = vmul.f32 %v2417, %v1252
        %v2423 = vmul.f32 %v2268, %v1249
        %v2424 = vmul.f32 %v2318, %v1250
        %v2425 = vmul.f32 %v2368, %v1251
        %v2426 = vmul.f32 %v2418, %v1252
        %v2427 = vmul.f32 %v2267, %v1734
        %v2428 = vmul.f32 %v2317, %v1736
        %v2429 = vmul.f32 %v2367, %v1738
        %v2430 = vmul.f32 %v2417, %v1740
        %v2431 = vmul.f32 %v2268, %v1734
        %v2432 = vmul.f32 %v2318, %v1736
        %v2433 = vmul.f32 %v2368, %v1738
        %v2434 = vmul.f32 %v2418, %v1740
        %2443 = vrot.lane.b32.xlu0 %v2427, 96
        %v2444 = vpop.permute.xlu0 %2443
        %2445 = vrot.lane.b32.xlu0 %v2428, 96
        %v2446 = vpop.permute.xlu0 %2445
        %2447 = vrot.lane.b32.xlu0 %v2429, 96
        %v2448 = vpop.permute.xlu0 %2447
        %2449 = vrot.lane.b32.xlu0 %v2430, 96
        %v2450 = vpop.permute.xlu0 %2449
        %2451 = vrot.lane.b32.xlu0 %v2431, 96
        %v2452 = vpop.permute.xlu0 %2451
        %2453 = vrot.lane.b32.xlu0 %v2432, 96
        %v2454 = vpop.permute.xlu0 %2453
        %2455 = vrot.lane.b32.xlu0 %v2433, 96
        %v2456 = vpop.permute.xlu0 %2455
        %2457 = vrot.lane.b32.xlu0 %v2434, 96
        %v2458 = vpop.permute.xlu0 %2457
        %v2467 = vsub.f32 %v2419, %v2444
        %v2468 = vsub.f32 %v2420, %v2446
        %v2469 = vsub.f32 %v2421, %v2448
        %v2470 = vsub.f32 %v2422, %v2450
        %v2471 = vsub.f32 %v2423, %v2452
        %v2472 = vsub.f32 %v2424, %v2454
        %v2473 = vsub.f32 %v2425, %v2456
        %v2474 = vsub.f32 %v2426, %v2458
        %v2475 = vmul.f32 %v2267, %v1253
        %v2476 = vmul.f32 %v2317, %v1254
        %v2477 = vmul.f32 %v2367, %v1255
        %v2478 = vmul.f32 %v2417, %v1256
        %v2479 = vmul.f32 %v2268, %v1253
        %v2480 = vmul.f32 %v2318, %v1254
        %v2481 = vmul.f32 %v2368, %v1255
        %v2482 = vmul.f32 %v2418, %v1256
        %v2483 = vmul.f32 %v2267, %v1806
        %v2484 = vmul.f32 %v2317, %v1808
        %v2485 = vmul.f32 %v2367, %v1810
        %v2486 = vmul.f32 %v2417, %v1812
        %v2487 = vmul.f32 %v2268, %v1806
        %v2488 = vmul.f32 %v2318, %v1808
        %v2489 = vmul.f32 %v2368, %v1810
        %v2490 = vmul.f32 %v2418, %v1812
        %2499 = vrot.lane.b32.xlu0 %v2483, 96
        %v2500 = vpop.permute.xlu0 %2499
        %2501 = vrot.lane.b32.xlu0 %v2484, 96
        %v2502 = vpop.permute.xlu0 %2501
        %2503 = vrot.lane.b32.xlu0 %v2485, 96
        %v2504 = vpop.permute.xlu0 %2503
        %2505 = vrot.lane.b32.xlu0 %v2486, 96
        %v2506 = vpop.permute.xlu0 %2505
        %2507 = vrot.lane.b32.xlu0 %v2487, 96
        %v2508 = vpop.permute.xlu0 %2507
        %2509 = vrot.lane.b32.xlu0 %v2488, 96
        %v2510 = vpop.permute.xlu0 %2509
        %2511 = vrot.lane.b32.xlu0 %v2489, 96
        %v2512 = vpop.permute.xlu0 %2511
        %2513 = vrot.lane.b32.xlu0 %v2490, 96
        %v2514 = vpop.permute.xlu0 %2513
        %v2523 = vadd.f32 %v2475, %v2500
        %v2524 = vadd.f32 %v2476, %v2502
        %v2525 = vadd.f32 %v2477, %v2504
        %v2526 = vadd.f32 %v2478, %v2506
        %v2527 = vadd.f32 %v2479, %v2508
        %v2528 = vadd.f32 %v2480, %v2510
        %v2529 = vadd.f32 %v2481, %v2512
        %v2530 = vadd.f32 %v2482, %v2514
        %2539 = vrot.lane.b32.xlu0 %v2523, 32
        %v2540 = vpop.permute.xlu0 %2539
        %2541 = vrot.lane.b32.xlu0 %v2524, 32
        %v2542 = vpop.permute.xlu0 %2541
        %2543 = vrot.lane.b32.xlu0 %v2525, 32
        %v2544 = vpop.permute.xlu0 %2543
        %2545 = vrot.lane.b32.xlu0 %v2526, 32
        %v2546 = vpop.permute.xlu0 %2545
        %2547 = vrot.lane.b32.xlu0 %v2527, 32
        %v2548 = vpop.permute.xlu0 %2547
        %2549 = vrot.lane.b32.xlu0 %v2528, 32
        %v2550 = vpop.permute.xlu0 %2549
        %2551 = vrot.lane.b32.xlu0 %v2529, 32
        %v2552 = vpop.permute.xlu0 %2551
        %2553 = vrot.lane.b32.xlu0 %v2530, 32
        %v2554 = vpop.permute.xlu0 %2553
        %v2563 = vsel %vm1897, %v2467, %v2540
        %v2564 = vsel %vm1897, %v2468, %v2542
        %v2565 = vsel %vm1897, %v2469, %v2544
        %v2566 = vsel %vm1897, %v2470, %v2546
        %v2567 = vsel %vm1897, %v2471, %v2548
        %v2568 = vsel %vm1897, %v2472, %v2550
        %v2569 = vsel %vm1897, %v2473, %v2552
        %v2570 = vsel %vm1897, %v2474, %v2554
        %v2571 = vsel %vm1906, %v2563, %v2267
        %v2572 = vsel %vm1906, %v2564, %v2317
        %v2573 = vsel %vm1906, %v2565, %v2367
        %v2574 = vsel %vm1906, %v2566, %v2417
        %v2575 = vsel %vm1906, %v2567, %v2268
        %v2576 = vsel %vm1906, %v2568, %v2318
        %v2577 = vsel %vm1906, %v2569, %v2368
        %v2578 = vsel %vm1906, %v2570, %v2418
        %v2579 = vpack.c.bf16 %v2572, %v2571
        %v2580 = vpack.c.bf16 %v2574, %v2573
        %v2581 = vpack.c.bf16 %v2576, %v2575
        %v2582 = vpack.c.bf16 %v2578, %v2577
        %v2587 = vunpack.c.l.b16 %v2579
        %v2588 = vunpack.c.h.b16 %v2579
        %v2589 = vunpack.c.l.b16 %v2580
        %v2590 = vunpack.c.h.b16 %v2580
        %v2591 = vunpack.c.l.b16 %v2581
        %v2592 = vunpack.c.h.b16 %v2581
        %v2593 = vunpack.c.l.b16 %v2582
        %v2594 = vunpack.c.h.b16 %v2582
        %v2595 = vpack.c.b16 %v2587, %v2587
        %v2596 = vpack.c.b16 %v2588, %v2588
        %v2597 = vpack.c.b16 %v2589, %v2589
        %v2598 = vpack.c.b16 %v2590, %v2590
        %v2599 = vpack.c.b16 %v2591, %v2591
        %v2600 = vpack.c.b16 %v2592, %v2592
        %v2601 = vpack.c.b16 %v2593, %v2593
        %v2602 = vpack.c.b16 %v2594, %v2594
        %2611 = vst [vmem:[%s364] sm:$0xf] %v2595
        %2612 = vst [vmem:[%s364 + $0x4] sm:$0xf] %v2596
        %2613 = vst [vmem:[%s364 + $0x8] sm:$0xf] %v2597
        %2614 = vst [vmem:[%s364 + $0xc] sm:$0xf] %v2598
        %2615 = vst [vmem:[%s364 + $0x10] sm:$0xf] %v2599
        %2616 = vst [vmem:[%s364 + $0x14] sm:$0xf] %v2600
        %2617 = vst [vmem:[%s364 + $0x18] sm:$0xf] %v2601
        %2618 = vst [vmem:[%s364 + $0x1c] sm:$0xf] %v2602
        %v2619 = vcombine.high %v1231, 0.0
        %v2621 = vunpack.c.l.s4 1983009808
        %v2622 = vunpack.c.0.s8 %v2621
        %v2623 = vlaneseq
        %v2624 = vshrl.u32 %v2623, 7
        %v2625 = vsub.s32 %v2622, %v2624
        %v2626 = vrot.slane %v1231, %v2625
        %v2628 = vunpack.c.l.s4 1983009808
        %v2629 = vunpack.c.0.s8 %v2628
        %v2630 = vlaneseq
        %v2631 = vshrl.u32 %v2630, 7
        %v2632 = vsub.s32 %v2629, %v2631
        %v2633 = vrot.slane %v2619, %v2632
        %v2634 = vcombine.high %v1233, 0.0
        %v2636 = vunpack.c.l.s4 1983009808
        %v2637 = vunpack.c.0.s8 %v2636
        %v2638 = vlaneseq
        %v2639 = vshrl.u32 %v2638, 7
        %v2640 = vsub.s32 %v2637, %v2639
        %v2641 = vrot.slane %v1233, %v2640
        %v2643 = vunpack.c.l.s4 1983009808
        %v2644 = vunpack.c.0.s8 %v2643
        %v2645 = vlaneseq
        %v2646 = vshrl.u32 %v2645, 7
        %v2647 = vsub.s32 %v2644, %v2646
        %v2648 = vrot.slane %v2634, %v2647
        %v2649 = vcombine.low %v2626, %v2641
        %v2650 = vcombine.high %v2626, %v2641
        %v2652 = vunpack.c.l.s4 1934713408
        %v2653 = vunpack.c.0.s8 %v2652
        %v2654 = vlaneseq
        %v2655 = vshrl.u32 %v2654, 7
        %v2656 = vsub.s32 %v2653, %v2655
        %v2657 = vrot.slane %v2649, %v2656
        %v2659 = vunpack.c.l.s4 1934713408
        %v2660 = vunpack.c.0.s8 %v2659
        %v2661 = vlaneseq
        %v2662 = vshrl.u32 %v2661, 7
        %v2663 = vsub.s32 %v2660, %v2662
        %v2664 = vrot.slane %v2650, %v2663
        %v2665 = vcombine.low %v2633, %v2648
        %v2666 = vcombine.high %v2633, %v2648
        %v2668 = vunpack.c.l.s4 1934713408
        %v2669 = vunpack.c.0.s8 %v2668
        %v2670 = vlaneseq
        %v2671 = vshrl.u32 %v2670, 7
        %v2672 = vsub.s32 %v2669, %v2671
        %v2673 = vrot.slane %v2665, %v2672
        %v2675 = vunpack.c.l.s4 1934713408
        %v2676 = vunpack.c.0.s8 %v2675
        %v2677 = vlaneseq
        %v2678 = vshrl.u32 %v2677, 7
        %v2679 = vsub.s32 %v2676, %v2678
        %v2680 = vrot.slane %v2666, %v2679
        %v2681 = vcombine.high %v2657, 0.0
        %v2682 = vcombine.high %v2664, 0.0
        %v2683 = vcombine.high %v2673, 0.0
        %v2684 = vcombine.high %v2680, 0.0
        %v2685 = vcombine.high %v1235, 0.0
        %v2687 = vunpack.c.l.s4 1983009808
        %v2688 = vunpack.c.0.s8 %v2687
        %v2689 = vlaneseq
        %v2690 = vshrl.u32 %v2689, 7
        %v2691 = vsub.s32 %v2688, %v2690
        %v2692 = vrot.slane %v1235, %v2691
        %v2694 = vunpack.c.l.s4 1983009808
        %v2695 = vunpack.c.0.s8 %v2694
        %v2696 = vlaneseq
        %v2697 = vshrl.u32 %v2696, 7
        %v2698 = vsub.s32 %v2695, %v2697
        %v2699 = vrot.slane %v2685, %v2698
        %v2700 = vcombine.high %v1237, 0.0
        %v2702 = vunpack.c.l.s4 1983009808
        %v2703 = vunpack.c.0.s8 %v2702
        %v2704 = vlaneseq
        %v2705 = vshrl.u32 %v2704, 7
        %v2706 = vsub.s32 %v2703, %v2705
        %v2707 = vrot.slane %v1237, %v2706
        %v2709 = vunpack.c.l.s4 1983009808
        %v2710 = vunpack.c.0.s8 %v2709
        %v2711 = vlaneseq
        %v2712 = vshrl.u32 %v2711, 7
        %v2713 = vsub.s32 %v2710, %v2712
        %v2714 = vrot.slane %v2700, %v2713
        %v2715 = vcombine.low %v2692, %v2707
        %v2716 = vcombine.high %v2692, %v2707
        %v2718 = vunpack.c.l.s4 1934713408
        %v2719 = vunpack.c.0.s8 %v2718
        %v2720 = vlaneseq
        %v2721 = vshrl.u32 %v2720, 7
        %v2722 = vsub.s32 %v2719, %v2721
        %v2723 = vrot.slane %v2715, %v2722
        %v2725 = vunpack.c.l.s4 1934713408
        %v2726 = vunpack.c.0.s8 %v2725
        %v2727 = vlaneseq
        %v2728 = vshrl.u32 %v2727, 7
        %v2729 = vsub.s32 %v2726, %v2728
        %v2730 = vrot.slane %v2716, %v2729
        %v2731 = vcombine.low %v2699, %v2714
        %v2732 = vcombine.high %v2699, %v2714
        %v2734 = vunpack.c.l.s4 1934713408
        %v2735 = vunpack.c.0.s8 %v2734
        %v2736 = vlaneseq
        %v2737 = vshrl.u32 %v2736, 7
        %v2738 = vsub.s32 %v2735, %v2737
        %v2739 = vrot.slane %v2731, %v2738
        %v2741 = vunpack.c.l.s4 1934713408
        %v2742 = vunpack.c.0.s8 %v2741
        %v2743 = vlaneseq
        %v2744 = vshrl.u32 %v2743, 7
        %v2745 = vsub.s32 %v2742, %v2744
        %v2746 = vrot.slane %v2732, %v2745
        %v2747 = vcombine.high %v2723, 0.0
        %v2748 = vcombine.high %v2730, 0.0
        %v2749 = vcombine.high %v2739, 0.0
        %v2750 = vcombine.high %v2746, 0.0
        %v2751 = vcombine.high %v1241, 0.0
        %v2753 = vunpack.c.l.s4 1983009808
        %v2754 = vunpack.c.0.s8 %v2753
        %v2755 = vlaneseq
        %v2756 = vshrl.u32 %v2755, 7
        %v2757 = vsub.s32 %v2754, %v2756
        %v2758 = vrot.slane %v1241, %v2757
        %v2760 = vunpack.c.l.s4 1983009808
        %v2761 = vunpack.c.0.s8 %v2760
        %v2762 = vlaneseq
        %v2763 = vshrl.u32 %v2762, 7
        %v2764 = vsub.s32 %v2761, %v2763
        %v2765 = vrot.slane %v2751, %v2764
        %v2766 = vcombine.high %v1243, 0.0
        %v2768 = vunpack.c.l.s4 1983009808
        %v2769 = vunpack.c.0.s8 %v2768
        %v2770 = vlaneseq
        %v2771 = vshrl.u32 %v2770, 7
        %v2772 = vsub.s32 %v2769, %v2771
        %v2773 = vrot.slane %v1243, %v2772
        %v2775 = vunpack.c.l.s4 1983009808
        %v2776 = vunpack.c.0.s8 %v2775
        %v2777 = vlaneseq
        %v2778 = vshrl.u32 %v2777, 7
        %v2779 = vsub.s32 %v2776, %v2778
        %v2780 = vrot.slane %v2766, %v2779
        %v2781 = vcombine.low %v2758, %v2773
        %v2782 = vcombine.high %v2758, %v2773
        %v2784 = vunpack.c.l.s4 1934713408
        %v2785 = vunpack.c.0.s8 %v2784
        %v2786 = vlaneseq
        %v2787 = vshrl.u32 %v2786, 7
        %v2788 = vsub.s32 %v2785, %v2787
        %v2789 = vrot.slane %v2781, %v2788
        %v2791 = vunpack.c.l.s4 1934713408
        %v2792 = vunpack.c.0.s8 %v2791
        %v2793 = vlaneseq
        %v2794 = vshrl.u32 %v2793, 7
        %v2795 = vsub.s32 %v2792, %v2794
        %v2796 = vrot.slane %v2782, %v2795
        %v2797 = vcombine.low %v2765, %v2780
        %v2798 = vcombine.high %v2765, %v2780
        %v2800 = vunpack.c.l.s4 1934713408
        %v2801 = vunpack.c.0.s8 %v2800
        %v2802 = vlaneseq
        %v2803 = vshrl.u32 %v2802, 7
        %v2804 = vsub.s32 %v2801, %v2803
        %v2805 = vrot.slane %v2797, %v2804
        %v2807 = vunpack.c.l.s4 1934713408
        %v2808 = vunpack.c.0.s8 %v2807
        %v2809 = vlaneseq
        %v2810 = vshrl.u32 %v2809, 7
        %v2811 = vsub.s32 %v2808, %v2810
        %v2812 = vrot.slane %v2798, %v2811
        %v2813 = vcombine.high %v2789, 0.0
        %v2814 = vcombine.high %v2796, 0.0
        %v2815 = vcombine.high %v2805, 0.0
        %v2816 = vcombine.high %v2812, 0.0
        %v2817 = vcombine.high %v1245, 0.0
        %v2819 = vunpack.c.l.s4 1983009808
        %v2820 = vunpack.c.0.s8 %v2819
        %v2821 = vlaneseq
        %v2822 = vshrl.u32 %v2821, 7
        %v2823 = vsub.s32 %v2820, %v2822
        %v2824 = vrot.slane %v1245, %v2823
        %v2826 = vunpack.c.l.s4 1983009808
        %v2827 = vunpack.c.0.s8 %v2826
        %v2828 = vlaneseq
        %v2829 = vshrl.u32 %v2828, 7
        %v2830 = vsub.s32 %v2827, %v2829
        %v2831 = vrot.slane %v2817, %v2830
        %v2832 = vcombine.high %v1247, 0.0
        %v2834 = vunpack.c.l.s4 1983009808
        %v2835 = vunpack.c.0.s8 %v2834
        %v2836 = vlaneseq
        %v2837 = vshrl.u32 %v2836, 7
        %v2838 = vsub.s32 %v2835, %v2837
        %v2839 = vrot.slane %v1247, %v2838
        %v2841 = vunpack.c.l.s4 1983009808
        %v2842 = vunpack.c.0.s8 %v2841
        %v2843 = vlaneseq
        %v2844 = vshrl.u32 %v2843, 7
        %v2845 = vsub.s32 %v2842, %v2844
        %v2846 = vrot.slane %v2832, %v2845
        %v2847 = vcombine.low %v2824, %v2839
        %v2848 = vcombine.high %v2824, %v2839
        %v2850 = vunpack.c.l.s4 1934713408
        %v2851 = vunpack.c.0.s8 %v2850
        %v2852 = vlaneseq
        %v2853 = vshrl.u32 %v2852, 7
        %v2854 = vsub.s32 %v2851, %v2853
        %v2855 = vrot.slane %v2847, %v2854
        %v2857 = vunpack.c.l.s4 1934713408
        %v2858 = vunpack.c.0.s8 %v2857
        %v2859 = vlaneseq
        %v2860 = vshrl.u32 %v2859, 7
        %v2861 = vsub.s32 %v2858, %v2860
        %v2862 = vrot.slane %v2848, %v2861
        %v2863 = vcombine.low %v2831, %v2846
        %v2864 = vcombine.high %v2831, %v2846
        %v2866 = vunpack.c.l.s4 1934713408
        %v2867 = vunpack.c.0.s8 %v2866
        %v2868 = vlaneseq
        %v2869 = vshrl.u32 %v2868, 7
        %v2870 = vsub.s32 %v2867, %v2869
        %v2871 = vrot.slane %v2863, %v2870
        %v2873 = vunpack.c.l.s4 1934713408
        %v2874 = vunpack.c.0.s8 %v2873
        %v2875 = vlaneseq
        %v2876 = vshrl.u32 %v2875, 7
        %v2877 = vsub.s32 %v2874, %v2876
        %v2878 = vrot.slane %v2864, %v2877
        %v2879 = vcombine.high %v2855, 0.0
        %v2880 = vcombine.high %v2862, 0.0
        %v2881 = vcombine.high %v2871, 0.0
        %v2882 = vcombine.high %v2878, 0.0
        %v2883 = vcombine.low %v2657, %v2664
        %v2885 = vunpack.c.l.s4 1983009808
        %v2886 = vunpack.c.0.s8 %v2885
        %v2887 = vlaneseq
        %v2888 = vshrl.u32 %v2887, 7
        %v2889 = vsub.s32 %v2886, %v2888
        %v2890 = vrot.slane %v2883, %v2889
        %v2891 = vcombine.low %v2681, %v2682
        %v2893 = vunpack.c.l.s4 1983009808
        %v2894 = vunpack.c.0.s8 %v2893
        %v2895 = vlaneseq
        %v2896 = vshrl.u32 %v2895, 7
        %v2897 = vsub.s32 %v2894, %v2896
        %v2898 = vrot.slane %v2891, %v2897
        %v2899 = vcombine.low %v2673, %v2680
        %v2901 = vunpack.c.l.s4 1983009808
        %v2902 = vunpack.c.0.s8 %v2901
        %v2903 = vlaneseq
        %v2904 = vshrl.u32 %v2903, 7
        %v2905 = vsub.s32 %v2902, %v2904
        %v2906 = vrot.slane %v2899, %v2905
        %v2907 = vcombine.low %v2683, %v2684
        %v2909 = vunpack.c.l.s4 1983009808
        %v2910 = vunpack.c.0.s8 %v2909
        %v2911 = vlaneseq
        %v2912 = vshrl.u32 %v2911, 7
        %v2913 = vsub.s32 %v2910, %v2912
        %v2914 = vrot.slane %v2907, %v2913
        %v2915 = vcombine.low %v2890, %v2898
        %v2917 = vunpack.c.l.s4 1934713408
        %v2918 = vunpack.c.0.s8 %v2917
        %v2919 = vlaneseq
        %v2920 = vshrl.u32 %v2919, 7
        %v2921 = vsub.s32 %v2918, %v2920
        %v2922 = vrot.slane %v2915, %v2921
        %v2923 = vcombine.low %v2906, %v2914
        %v2925 = vunpack.c.l.s4 1934713408
        %v2926 = vunpack.c.0.s8 %v2925
        %v2927 = vlaneseq
        %v2928 = vshrl.u32 %v2927, 7
        %v2929 = vsub.s32 %v2926, %v2928
        %v2930 = vrot.slane %v2923, %v2929
        %v2931 = vcombine.low %v2922, %v2930
        %v2932 = vcombine.high %v2922, %v2930
        %v2933 = vcombine.low %v2723, %v2730
        %v2935 = vunpack.c.l.s4 1983009808
        %v2936 = vunpack.c.0.s8 %v2935
        %v2937 = vlaneseq
        %v2938 = vshrl.u32 %v2937, 7
        %v2939 = vsub.s32 %v2936, %v2938
        %v2940 = vrot.slane %v2933, %v2939
        %v2941 = vcombine.low %v2747, %v2748
        %v2943 = vunpack.c.l.s4 1983009808
        %v2944 = vunpack.c.0.s8 %v2943
        %v2945 = vlaneseq
        %v2946 = vshrl.u32 %v2945, 7
        %v2947 = vsub.s32 %v2944, %v2946
        %v2948 = vrot.slane %v2941, %v2947
        %v2949 = vcombine.low %v2739, %v2746
        %v2951 = vunpack.c.l.s4 1983009808
        %v2952 = vunpack.c.0.s8 %v2951
        %v2953 = vlaneseq
        %v2954 = vshrl.u32 %v2953, 7
        %v2955 = vsub.s32 %v2952, %v2954
        %v2956 = vrot.slane %v2949, %v2955
        %v2957 = vcombine.low %v2749, %v2750
        %v2959 = vunpack.c.l.s4 1983009808
        %v2960 = vunpack.c.0.s8 %v2959
        %v2961 = vlaneseq
        %v2962 = vshrl.u32 %v2961, 7
        %v2963 = vsub.s32 %v2960, %v2962
        %v2964 = vrot.slane %v2957, %v2963
        %v2965 = vcombine.low %v2940, %v2948
        %v2967 = vunpack.c.l.s4 1934713408
        %v2968 = vunpack.c.0.s8 %v2967
        %v2969 = vlaneseq
        %v2970 = vshrl.u32 %v2969, 7
        %v2971 = vsub.s32 %v2968, %v2970
        %v2972 = vrot.slane %v2965, %v2971
        %v2973 = vcombine.low %v2956, %v2964
        %v2975 = vunpack.c.l.s4 1934713408
        %v2976 = vunpack.c.0.s8 %v2975
        %v2977 = vlaneseq
        %v2978 = vshrl.u32 %v2977, 7
        %v2979 = vsub.s32 %v2976, %v2978
        %v2980 = vrot.slane %v2973, %v2979
        %v2981 = vcombine.low %v2972, %v2980
        %v2982 = vcombine.high %v2972, %v2980
        %v2983 = vcombine.low %v2789, %v2796
        %v2985 = vunpack.c.l.s4 1983009808
        %v2986 = vunpack.c.0.s8 %v2985
        %v2987 = vlaneseq
        %v2988 = vshrl.u32 %v2987, 7
        %v2989 = vsub.s32 %v2986, %v2988
        %v2990 = vrot.slane %v2983, %v2989
        %v2991 = vcombine.low %v2813, %v2814
        %v2993 = vunpack.c.l.s4 1983009808
        %v2994 = vunpack.c.0.s8 %v2993
        %v2995 = vlaneseq
        %v2996 = vshrl.u32 %v2995, 7
        %v2997 = vsub.s32 %v2994, %v2996
        %v2998 = vrot.slane %v2991, %v2997
        %v2999 = vcombine.low %v2805, %v2812
        %v3001 = vunpack.c.l.s4 1983009808
        %v3002 = vunpack.c.0.s8 %v3001
        %v3003 = vlaneseq
        %v3004 = vshrl.u32 %v3003, 7
        %v3005 = vsub.s32 %v3002, %v3004
        %v3006 = vrot.slane %v2999, %v3005
        %v3007 = vcombine.low %v2815, %v2816
        %v3009 = vunpack.c.l.s4 1983009808
        %v3010 = vunpack.c.0.s8 %v3009
        %v3011 = vlaneseq
        %v3012 = vshrl.u32 %v3011, 7
        %v3013 = vsub.s32 %v3010, %v3012
        %v3014 = vrot.slane %v3007, %v3013
        %v3015 = vcombine.low %v2990, %v2998
        %v3017 = vunpack.c.l.s4 1934713408
        %v3018 = vunpack.c.0.s8 %v3017
        %v3019 = vlaneseq
        %v3020 = vshrl.u32 %v3019, 7
        %v3021 = vsub.s32 %v3018, %v3020
        %v3022 = vrot.slane %v3015, %v3021
        %v3023 = vcombine.low %v3006, %v3014
        %v3025 = vunpack.c.l.s4 1934713408
        %v3026 = vunpack.c.0.s8 %v3025
        %v3027 = vlaneseq
        %v3028 = vshrl.u32 %v3027, 7
        %v3029 = vsub.s32 %v3026, %v3028
        %v3030 = vrot.slane %v3023, %v3029
        %v3031 = vcombine.low %v3022, %v3030
        %v3032 = vcombine.high %v3022, %v3030
        %v3033 = vcombine.low %v2855, %v2862
        %v3035 = vunpack.c.l.s4 1983009808
        %v3036 = vunpack.c.0.s8 %v3035
        %v3037 = vlaneseq
        %v3038 = vshrl.u32 %v3037, 7
        %v3039 = vsub.s32 %v3036, %v3038
        %v3040 = vrot.slane %v3033, %v3039
        %v3041 = vcombine.low %v2879, %v2880
        %v3043 = vunpack.c.l.s4 1983009808
        %v3044 = vunpack.c.0.s8 %v3043
        %v3045 = vlaneseq
        %v3046 = vshrl.u32 %v3045, 7
        %v3047 = vsub.s32 %v3044, %v3046
        %v3048 = vrot.slane %v3041, %v3047
        %v3049 = vcombine.low %v2871, %v2878
        %v3051 = vunpack.c.l.s4 1983009808
        %v3052 = vunpack.c.0.s8 %v3051
        %v3053 = vlaneseq
        %v3054 = vshrl.u32 %v3053, 7
        %v3055 = vsub.s32 %v3052, %v3054
        %v3056 = vrot.slane %v3049, %v3055
        %v3057 = vcombine.low %v2881, %v2882
        %v3059 = vunpack.c.l.s4 1983009808
        %v3060 = vunpack.c.0.s8 %v3059
        %v3061 = vlaneseq
        %v3062 = vshrl.u32 %v3061, 7
        %v3063 = vsub.s32 %v3060, %v3062
        %v3064 = vrot.slane %v3057, %v3063
        %v3065 = vcombine.low %v3040, %v3048
        %v3067 = vunpack.c.l.s4 1934713408
        %v3068 = vunpack.c.0.s8 %v3067
        %v3069 = vlaneseq
        %v3070 = vshrl.u32 %v3069, 7
        %v3071 = vsub.s32 %v3068, %v3070
        %v3072 = vrot.slane %v3065, %v3071
        %v3073 = vcombine.low %v3056, %v3064
        %v3075 = vunpack.c.l.s4 1934713408
        %v3076 = vunpack.c.0.s8 %v3075
        %v3077 = vlaneseq
        %v3078 = vshrl.u32 %v3077, 7
        %v3079 = vsub.s32 %v3076, %v3078
        %v3080 = vrot.slane %v3073, %v3079
        %v3081 = vcombine.low %v3072, %v3080
        %v3082 = vcombine.high %v3072, %v3080
        %v3083 = vpack.c.bf16 %v2981, %v2931
        %v3084 = vpack.c.bf16 %v3081, %v3031
        %v3085 = vpack.c.bf16 %v2982, %v2932
        %v3086 = vpack.c.bf16 %v3082, %v3032
        %v3091 = vunpack.c.l.b16 %v3083
        %v3092 = vunpack.c.h.b16 %v3083
        %v3093 = vunpack.c.l.b16 %v3084
        %v3094 = vunpack.c.h.b16 %v3084
        %v3095 = vunpack.c.l.b16 %v3085
        %v3096 = vunpack.c.h.b16 %v3085
        %v3097 = vunpack.c.l.b16 %v3086
        %v3098 = vunpack.c.h.b16 %v3086
        %v3099 = vpack.c.b16 %v3091, %v3091
        %v3100 = vpack.c.b16 %v3092, %v3092
        %v3101 = vpack.c.b16 %v3093, %v3093
        %v3102 = vpack.c.b16 %v3094, %v3094
        %v3103 = vpack.c.b16 %v3095, %v3095
        %v3104 = vpack.c.b16 %v3096, %v3096
        %v3105 = vpack.c.b16 %v3097, %v3097
        %v3106 = vpack.c.b16 %v3098, %v3098
        %3115 = vst [vmem:[%s370] sm:$0xf] %v3099
        %3116 = vst [vmem:[%s370 + $0x4] sm:$0xf] %v3100
        %3117 = vst [vmem:[%s370 + $0x8] sm:$0xf] %v3101
        %3118 = vst [vmem:[%s370 + $0xc] sm:$0xf] %v3102
        %3119 = vst [vmem:[%s370 + $0x10] sm:$0xf] %v3103
        %3120 = vst [vmem:[%s370 + $0x14] sm:$0xf] %v3104
        %3121 = vst [vmem:[%s370 + $0x18] sm:$0xf] %v3105
        %3122 = vst [vmem:[%s370 + $0x1c] sm:$0xf] %v3106
        %s3123 = sand.u32 %s185, 1
        %s3124 = sand.u32 %s185, 1
        %s3125 = smul.addr %s3124, 32
        %s3126 = scalar_lea.vmem [#allocation2], %s3125
        %s3127 = sand.u32 %s213, 1
        %s3128 = sand.u32 %s213, 1
        %s3129 = smul.addr %s3128, 32
        %s3130 = scalar_lea.vmem [#allocation3], %s3129
        %s3131 = sand.u32 %s241, 1
        %s3132 = sand.u32 %s241, 1
        %s3133 = smul.addr %s3132, 32
        %s3134 = scalar_lea.vmem [#allocation4], %s3133
        // Predicated region
        $region45: #{self_attention_forward.2} parent=43 // pred_check
          %p3135 = pneg %p195
        $region46: #{self_attention_forward.2} parent=43 // pred_check_branch
          %3137 = sbr.rel (%p3135) target = $region48
        $region47: #{self_attention_forward.2} parent=43 // pred_region
          %s3138 = smul.u32 4, %s25
          %s3139 = smul.addr %s24, 16
          %s3140 = sadd.s32 %s3138, %s3139
          %s3141 = smul.addr %s3140, 4
          %s3142 = scalar_lea.vmem %s6, %s3141
          // Predicated region
          $region49: #{self_attention_forward.2} parent=47 // pred_check
            _
          $region50: #{self_attention_forward.2} parent=47 // pred_check_branch
            %3144 = sbr.rel (0) target = $region52
          $region51: #{self_attention_forward.2} parent=47 // pred_region
            // Predicated region
            $region53: #{self_attention_forward.2} parent=51 // pred_check
              _
            $region54: #{self_attention_forward.2} parent=51 // pred_check_branch
              %3146 = sbr.rel target = $region56
            $region55: #{self_attention_forward.2} parent=51 // pred_region
              // Predicated region
              $region68: #{self_attention_forward.2} parent=55 // pred_check
                _
              $region69: #{self_attention_forward.2} parent=55 // pred_check_branch
                %3176 = sbr.rel (0) target = $region71
              $region70: #{self_attention_forward.2} parent=55 // pred_region
                loop: start=0, step=1, limit=1
                $region72: #{self_attention_forward.2} parent=70 // loop_pre_header
                  _
                $region73: #{self_attention_forward.2} parent=70 // loop_header
                  %s3178 = sphi 0, %s3182
                  %p3179 = scmp.ge.s32.totalorder %s3178, 1
                  %s3183 = sphi %s3126, %s3126
                  %s3184 = sphi %s3142, %s3142
                $region74: #{self_attention_forward.2} parent=70 // loop_header_branch
                  %3181 = sbr.rel (%p3179) target = $region78
                $region75: #{self_attention_forward.2} parent=70 // loop_body
                  _
                $region76: #{self_attention_forward.2} parent=70 // loop_footer
                  %s3182 = sadd.s32 1, %s3178
                $region77: #{self_attention_forward.2} parent=70 // loop_footer_branch
                  %3177 = sbr.rel target = $region73
                $region78: #{self_attention_forward.2} parent=70 // loop_exit
                  _
                %s3186 = ssub.s32 16, 1
                loop: start=0, step=1, limit=1
                $region79: #{self_attention_forward.2} parent=70 // loop_pre_header
                  _
                $region80: #{self_attention_forward.2} parent=70 // loop_header
                  %s3188 = sphi 0, %s3192
                  %p3189 = scmp.ge.s32.totalorder %s3188, 1
                  %s3193 = sphi %s3126, %s3126
                  %s3194 = sphi %s3142, %s3142
                $region81: #{self_attention_forward.2} parent=70 // loop_header_branch
                  %3191 = sbr.rel (%p3189) target = $region85
                $region82: #{self_attention_forward.2} parent=70 // loop_body
                  %v3195 = vld [vmem:[%s3193] sm:%s3186]
                  %3196 = vst [vmem:[%s3194] sm:%s3186] %v3195
                  %v3197 = vld [vmem:[%s3193 + $0x4] sm:%s3186]
                  %3198 = vst [vmem:[%s3194 + $0x4] sm:%s3186] %v3197
                  %v3199 = vld [vmem:[%s3193 + $0x8] sm:%s3186]
                  %3200 = vst [vmem:[%s3194 + $0x8] sm:%s3186] %v3199
                  %v3201 = vld [vmem:[%s3193 + $0xc] sm:%s3186]
                  %3202 = vst [vmem:[%s3194 + $0xc] sm:%s3186] %v3201
                  %v3203 = vld [vmem:[%s3193 + $0x10] sm:%s3186]
                  %3204 = vst [vmem:[%s3194 + $0x20] sm:%s3186] %v3203
                  %v3205 = vld [vmem:[%s3193 + $0x14] sm:%s3186]
                  %3206 = vst [vmem:[%s3194 + $0x24] sm:%s3186] %v3205
                  %v3207 = vld [vmem:[%s3193 + $0x18] sm:%s3186]
                  %3208 = vst [vmem:[%s3194 + $0x28] sm:%s3186] %v3207
                  %v3209 = vld [vmem:[%s3193 + $0x1c] sm:%s3186]
                  %3210 = vst [vmem:[%s3194 + $0x2c] sm:%s3186] %v3209
                $region83: #{self_attention_forward.2} parent=70 // loop_footer
                  %s3192 = sadd.s32 1, %s3188
                $region84: #{self_attention_forward.2} parent=70 // loop_footer_branch
                  %3187 = sbr.rel target = $region80
                $region85: #{self_attention_forward.2} parent=70 // loop_exit
                  _
              $region71: #{self_attention_forward.2} parent=55 // pred_fallthru
                _
            $region56: #{self_attention_forward.2} parent=51 // pred_fallthru
              _
            // Predicated region
            $region57: #{self_attention_forward.2} parent=51 // pred_check
              _
            $region58: #{self_attention_forward.2} parent=51 // pred_check_branch
              %3148 = sbr.rel (0) target = $region60
            $region59: #{self_attention_forward.2} parent=51 // pred_region
              %s3150 = ssub.s32 16, 1
              loop: start=0, step=1, limit=1
              $region61: #{self_attention_forward.2} parent=59 // loop_pre_header
                _
              $region62: #{self_attention_forward.2} parent=59 // loop_header
                %s3152 = sphi 0, %s3156
                %p3153 = scmp.ge.s32.totalorder %s3152, 1
                %s3157 = sphi %s3126, %s3126
                %s3158 = sphi %s3142, %s3142
              $region63: #{self_attention_forward.2} parent=59 // loop_header_branch
                %3155 = sbr.rel (%p3153) target = $region67
              $region64: #{self_attention_forward.2} parent=59 // loop_body
                %v3159 = vld [vmem:[%s3157] sm:%s3150]
                %3160 = vst [vmem:[%s3158] sm:%s3150] %v3159
                %v3161 = vld [vmem:[%s3157 + $0x4] sm:%s3150]
                %3162 = vst [vmem:[%s3158 + $0x4] sm:%s3150] %v3161
                %v3163 = vld [vmem:[%s3157 + $0x8] sm:%s3150]
                %3164 = vst [vmem:[%s3158 + $0x8] sm:%s3150] %v3163
                %v3165 = vld [vmem:[%s3157 + $0xc] sm:%s3150]
                %3166 = vst [vmem:[%s3158 + $0xc] sm:%s3150] %v3165
                %v3167 = vld [vmem:[%s3157 + $0x10] sm:%s3150]
                %3168 = vst [vmem:[%s3158 + $0x20] sm:%s3150] %v3167
                %v3169 = vld [vmem:[%s3157 + $0x14] sm:%s3150]
                %3170 = vst [vmem:[%s3158 + $0x24] sm:%s3150] %v3169
                %v3171 = vld [vmem:[%s3157 + $0x18] sm:%s3150]
                %3172 = vst [vmem:[%s3158 + $0x28] sm:%s3150] %v3171
                %v3173 = vld [vmem:[%s3157 + $0x1c] sm:%s3150]
                %3174 = vst [vmem:[%s3158 + $0x2c] sm:%s3150] %v3173
              $region65: #{self_attention_forward.2} parent=59 // loop_footer
                %s3156 = sadd.s32 1, %s3152
              $region66: #{self_attention_forward.2} parent=59 // loop_footer_branch
                %3151 = sbr.rel target = $region62
              $region67: #{self_attention_forward.2} parent=59 // loop_exit
                _
            $region60: #{self_attention_forward.2} parent=51 // pred_fallthru
              _
          $region52: #{self_attention_forward.2} parent=47 // pred_fallthru
            _
          %3211 = vnop
        $region48: #{self_attention_forward.2} parent=43 // pred_fallthru
          _
        // Predicated region
        $region86: #{self_attention_forward.2} parent=43 // pred_check
          %p3212 = pneg %p223
        $region87: #{self_attention_forward.2} parent=43 // pred_check_branch
          %3214 = sbr.rel (%p3212) target = $region89
        $region88: #{self_attention_forward.2} parent=43 // pred_region
          %s3215 = smul.u32 4, %s25
          %s3216 = smul.addr %s24, 16
          %s3217 = sadd.s32 %s3215, %s3216
          %s3218 = smul.addr %s3217, 4
          %s3219 = scalar_lea.vmem %s7, %s3218
          // Predicated region
          $region90: #{self_attention_forward.2} parent=88 // pred_check
            _
          $region91: #{self_attention_forward.2} parent=88 // pred_check_branch
            %3221 = sbr.rel (0) target = $region93
          $region92: #{self_attention_forward.2} parent=88 // pred_region
            // Predicated region
            $region94: #{self_attention_forward.2} parent=92 // pred_check
              _
            $region95: #{self_attention_forward.2} parent=92 // pred_check_branch
              %3223 = sbr.rel target = $region97
            $region96: #{self_attention_forward.2} parent=92 // pred_region
              // Predicated region
              $region109: #{self_attention_forward.2} parent=96 // pred_check
                _
              $region110: #{self_attention_forward.2} parent=96 // pred_check_branch
                %3253 = sbr.rel (0) target = $region112
              $region111: #{self_attention_forward.2} parent=96 // pred_region
                loop: start=0, step=1, limit=1
                $region113: #{self_attention_forward.2} parent=111 // loop_pre_header
                  _
                $region114: #{self_attention_forward.2} parent=111 // loop_header
                  %s3255 = sphi 0, %s3259
                  %p3256 = scmp.ge.s32.totalorder %s3255, 1
                  %s3260 = sphi %s3130, %s3130
                  %s3261 = sphi %s3219, %s3219
                $region115: #{self_attention_forward.2} parent=111 // loop_header_branch
                  %3258 = sbr.rel (%p3256) target = $region119
                $region116: #{self_attention_forward.2} parent=111 // loop_body
                  _
                $region117: #{self_attention_forward.2} parent=111 // loop_footer
                  %s3259 = sadd.s32 1, %s3255
                $region118: #{self_attention_forward.2} parent=111 // loop_footer_branch
                  %3254 = sbr.rel target = $region114
                $region119: #{self_attention_forward.2} parent=111 // loop_exit
                  _
                %s3263 = ssub.s32 16, 1
                loop: start=0, step=1, limit=1
                $region120: #{self_attention_forward.2} parent=111 // loop_pre_header
                  _
                $region121: #{self_attention_forward.2} parent=111 // loop_header
                  %s3265 = sphi 0, %s3269
                  %p3266 = scmp.ge.s32.totalorder %s3265, 1
                  %s3270 = sphi %s3130, %s3130
                  %s3271 = sphi %s3219, %s3219
                $region122: #{self_attention_forward.2} parent=111 // loop_header_branch
                  %3268 = sbr.rel (%p3266) target = $region126
                $region123: #{self_attention_forward.2} parent=111 // loop_body
                  %v3272 = vld [vmem:[%s3270] sm:%s3263]
                  %3273 = vst [vmem:[%s3271] sm:%s3263] %v3272
                  %v3274 = vld [vmem:[%s3270 + $0x4] sm:%s3263]
                  %3275 = vst [vmem:[%s3271 + $0x4] sm:%s3263] %v3274
                  %v3276 = vld [vmem:[%s3270 + $0x8] sm:%s3263]
                  %3277 = vst [vmem:[%s3271 + $0x8] sm:%s3263] %v3276
                  %v3278 = vld [vmem:[%s3270 + $0xc] sm:%s3263]
                  %3279 = vst [vmem:[%s3271 + $0xc] sm:%s3263] %v3278
                  %v3280 = vld [vmem:[%s3270 + $0x10] sm:%s3263]
                  %3281 = vst [vmem:[%s3271 + $0x20] sm:%s3263] %v3280
                  %v3282 = vld [vmem:[%s3270 + $0x14] sm:%s3263]
                  %3283 = vst [vmem:[%s3271 + $0x24] sm:%s3263] %v3282
                  %v3284 = vld [vmem:[%s3270 + $0x18] sm:%s3263]
                  %3285 = vst [vmem:[%s3271 + $0x28] sm:%s3263] %v3284
                  %v3286 = vld [vmem:[%s3270 + $0x1c] sm:%s3263]
                  %3287 = vst [vmem:[%s3271 + $0x2c] sm:%s3263] %v3286
                $region124: #{self_attention_forward.2} parent=111 // loop_footer
                  %s3269 = sadd.s32 1, %s3265
                $region125: #{self_attention_forward.2} parent=111 // loop_footer_branch
                  %3264 = sbr.rel target = $region121
                $region126: #{self_attention_forward.2} parent=111 // loop_exit
                  _
              $region112: #{self_attention_forward.2} parent=96 // pred_fallthru
                _
            $region97: #{self_attention_forward.2} parent=92 // pred_fallthru
              _
            // Predicated region
            $region98: #{self_attention_forward.2} parent=92 // pred_check
              _
            $region99: #{self_attention_forward.2} parent=92 // pred_check_branch
              %3225 = sbr.rel (0) target = $region101
            $region100: #{self_attention_forward.2} parent=92 // pred_region
              %s3227 = ssub.s32 16, 1
              loop: start=0, step=1, limit=1
              $region102: #{self_attention_forward.2} parent=100 // loop_pre_header
                _
              $region103: #{self_attention_forward.2} parent=100 // loop_header
                %s3229 = sphi 0, %s3233
                %p3230 = scmp.ge.s32.totalorder %s3229, 1
                %s3234 = sphi %s3130, %s3130
                %s3235 = sphi %s3219, %s3219
              $region104: #{self_attention_forward.2} parent=100 // loop_header_branch
                %3232 = sbr.rel (%p3230) target = $region108
              $region105: #{self_attention_forward.2} parent=100 // loop_body
                %v3236 = vld [vmem:[%s3234] sm:%s3227]
                %3237 = vst [vmem:[%s3235] sm:%s3227] %v3236
                %v3238 = vld [vmem:[%s3234 + $0x4] sm:%s3227]
                %3239 = vst [vmem:[%s3235 + $0x4] sm:%s3227] %v3238
                %v3240 = vld [vmem:[%s3234 + $0x8] sm:%s3227]
                %3241 = vst [vmem:[%s3235 + $0x8] sm:%s3227] %v3240
                %v3242 = vld [vmem:[%s3234 + $0xc] sm:%s3227]
                %3243 = vst [vmem:[%s3235 + $0xc] sm:%s3227] %v3242
                %v3244 = vld [vmem:[%s3234 + $0x10] sm:%s3227]
                %3245 = vst [vmem:[%s3235 + $0x20] sm:%s3227] %v3244
                %v3246 = vld [vmem:[%s3234 + $0x14] sm:%s3227]
                %3247 = vst [vmem:[%s3235 + $0x24] sm:%s3227] %v3246
                %v3248 = vld [vmem:[%s3234 + $0x18] sm:%s3227]
                %3249 = vst [vmem:[%s3235 + $0x28] sm:%s3227] %v3248
                %v3250 = vld [vmem:[%s3234 + $0x1c] sm:%s3227]
                %3251 = vst [vmem:[%s3235 + $0x2c] sm:%s3227] %v3250
              $region106: #{self_attention_forward.2} parent=100 // loop_footer
                %s3233 = sadd.s32 1, %s3229
              $region107: #{self_attention_forward.2} parent=100 // loop_footer_branch
                %3228 = sbr.rel target = $region103
              $region108: #{self_attention_forward.2} parent=100 // loop_exit
                _
            $region101: #{self_attention_forward.2} parent=92 // pred_fallthru
              _
          $region93: #{self_attention_forward.2} parent=88 // pred_fallthru
            _
          %3288 = vnop
        $region89: #{self_attention_forward.2} parent=43 // pred_fallthru
          _
        // Predicated region
        $region127: #{self_attention_forward.2} parent=43 // pred_check
          %p3289 = pneg %p251
        $region128: #{self_attention_forward.2} parent=43 // pred_check_branch
          %3291 = sbr.rel (%p3289) target = $region130
        $region129: #{self_attention_forward.2} parent=43 // pred_region
          %s3292 = smul.u32 4, %s25
          %s3293 = smul.addr %s24, 16
          %s3294 = sadd.s32 %s3292, %s3293
          %s3295 = smul.addr %s3294, 4
          %s3296 = scalar_lea.vmem %s8, %s3295
          // Predicated region
          $region131: #{self_attention_forward.2} parent=129 // pred_check
            _
          $region132: #{self_attention_forward.2} parent=129 // pred_check_branch
            %3298 = sbr.rel (0) target = $region134
          $region133: #{self_attention_forward.2} parent=129 // pred_region
            // Predicated region
            $region135: #{self_attention_forward.2} parent=133 // pred_check
              _
            $region136: #{self_attention_forward.2} parent=133 // pred_check_branch
              %3300 = sbr.rel target = $region138
            $region137: #{self_attention_forward.2} parent=133 // pred_region
              // Predicated region
              $region150: #{self_attention_forward.2} parent=137 // pred_check
                _
              $region151: #{self_attention_forward.2} parent=137 // pred_check_branch
                %3330 = sbr.rel (0) target = $region153
              $region152: #{self_attention_forward.2} parent=137 // pred_region
                loop: start=0, step=1, limit=1
                $region154: #{self_attention_forward.2} parent=152 // loop_pre_header
                  _
                $region155: #{self_attention_forward.2} parent=152 // loop_header
                  %s3332 = sphi 0, %s3336
                  %p3333 = scmp.ge.s32.totalorder %s3332, 1
                  %s3337 = sphi %s3134, %s3134
                  %s3338 = sphi %s3296, %s3296
                $region156: #{self_attention_forward.2} parent=152 // loop_header_branch
                  %3335 = sbr.rel (%p3333) target = $region160
                $region157: #{self_attention_forward.2} parent=152 // loop_body
                  _
                $region158: #{self_attention_forward.2} parent=152 // loop_footer
                  %s3336 = sadd.s32 1, %s3332
                $region159: #{self_attention_forward.2} parent=152 // loop_footer_branch
                  %3331 = sbr.rel target = $region155
                $region160: #{self_attention_forward.2} parent=152 // loop_exit
                  _
                %s3340 = ssub.s32 16, 1
                loop: start=0, step=1, limit=1
                $region161: #{self_attention_forward.2} parent=152 // loop_pre_header
                  _
                $region162: #{self_attention_forward.2} parent=152 // loop_header
                  %s3342 = sphi 0, %s3346
                  %p3343 = scmp.ge.s32.totalorder %s3342, 1
                  %s3347 = sphi %s3134, %s3134
                  %s3348 = sphi %s3296, %s3296
                $region163: #{self_attention_forward.2} parent=152 // loop_header_branch
                  %3345 = sbr.rel (%p3343) target = $region167
                $region164: #{self_attention_forward.2} parent=152 // loop_body
                  %v3349 = vld [vmem:[%s3347] sm:%s3340]
                  %3350 = vst [vmem:[%s3348] sm:%s3340] %v3349
                  %v3351 = vld [vmem:[%s3347 + $0x4] sm:%s3340]
                  %3352 = vst [vmem:[%s3348 + $0x4] sm:%s3340] %v3351
                  %v3353 = vld [vmem:[%s3347 + $0x8] sm:%s3340]
                  %3354 = vst [vmem:[%s3348 + $0x8] sm:%s3340] %v3353
                  %v3355 = vld [vmem:[%s3347 + $0xc] sm:%s3340]
                  %3356 = vst [vmem:[%s3348 + $0xc] sm:%s3340] %v3355
                  %v3357 = vld [vmem:[%s3347 + $0x10] sm:%s3340]
                  %3358 = vst [vmem:[%s3348 + $0x20] sm:%s3340] %v3357
                  %v3359 = vld [vmem:[%s3347 + $0x14] sm:%s3340]
                  %3360 = vst [vmem:[%s3348 + $0x24] sm:%s3340] %v3359
                  %v3361 = vld [vmem:[%s3347 + $0x18] sm:%s3340]
                  %3362 = vst [vmem:[%s3348 + $0x28] sm:%s3340] %v3361
                  %v3363 = vld [vmem:[%s3347 + $0x1c] sm:%s3340]
                  %3364 = vst [vmem:[%s3348 + $0x2c] sm:%s3340] %v3363
                $region165: #{self_attention_forward.2} parent=152 // loop_footer
                  %s3346 = sadd.s32 1, %s3342
                $region166: #{self_attention_forward.2} parent=152 // loop_footer_branch
                  %3341 = sbr.rel target = $region162
                $region167: #{self_attention_forward.2} parent=152 // loop_exit
                  _
              $region153: #{self_attention_forward.2} parent=137 // pred_fallthru
                _
            $region138: #{self_attention_forward.2} parent=133 // pred_fallthru
              _
            // Predicated region
            $region139: #{self_attention_forward.2} parent=133 // pred_check
              _
            $region140: #{self_attention_forward.2} parent=133 // pred_check_branch
              %3302 = sbr.rel (0) target = $region142
            $region141: #{self_attention_forward.2} parent=133 // pred_region
              %s3304 = ssub.s32 16, 1
              loop: start=0, step=1, limit=1
              $region143: #{self_attention_forward.2} parent=141 // loop_pre_header
                _
              $region144: #{self_attention_forward.2} parent=141 // loop_header
                %s3306 = sphi 0, %s3310
                %p3307 = scmp.ge.s32.totalorder %s3306, 1
                %s3311 = sphi %s3134, %s3134
                %s3312 = sphi %s3296, %s3296
              $region145: #{self_attention_forward.2} parent=141 // loop_header_branch
                %3309 = sbr.rel (%p3307) target = $region149
              $region146: #{self_attention_forward.2} parent=141 // loop_body
                %v3313 = vld [vmem:[%s3311] sm:%s3304]
                %3314 = vst [vmem:[%s3312] sm:%s3304] %v3313
                %v3315 = vld [vmem:[%s3311 + $0x4] sm:%s3304]
                %3316 = vst [vmem:[%s3312 + $0x4] sm:%s3304] %v3315
                %v3317 = vld [vmem:[%s3311 + $0x8] sm:%s3304]
                %3318 = vst [vmem:[%s3312 + $0x8] sm:%s3304] %v3317
                %v3319 = vld [vmem:[%s3311 + $0xc] sm:%s3304]
                %3320 = vst [vmem:[%s3312 + $0xc] sm:%s3304] %v3319
                %v3321 = vld [vmem:[%s3311 + $0x10] sm:%s3304]
                %3322 = vst [vmem:[%s3312 + $0x20] sm:%s3304] %v3321
                %v3323 = vld [vmem:[%s3311 + $0x14] sm:%s3304]
                %3324 = vst [vmem:[%s3312 + $0x24] sm:%s3304] %v3323
                %v3325 = vld [vmem:[%s3311 + $0x18] sm:%s3304]
                %3326 = vst [vmem:[%s3312 + $0x28] sm:%s3304] %v3325
                %v3327 = vld [vmem:[%s3311 + $0x1c] sm:%s3304]
                %3328 = vst [vmem:[%s3312 + $0x2c] sm:%s3304] %v3327
              $region147: #{self_attention_forward.2} parent=141 // loop_footer
                %s3310 = sadd.s32 1, %s3306
              $region148: #{self_attention_forward.2} parent=141 // loop_footer_branch
                %3305 = sbr.rel target = $region144
              $region149: #{self_attention_forward.2} parent=141 // loop_exit
                _
            $region142: #{self_attention_forward.2} parent=133 // pred_fallthru
              _
          $region134: #{self_attention_forward.2} parent=129 // pred_fallthru
            _
          %3365 = vnop
        $region130: #{self_attention_forward.2} parent=43 // pred_fallthru
          _
      $region44: #{self_attention_forward.2} parent=5 // pred_fallthru
        _
      %p3366 = scmp.le.s32.totalorder 2, %s15
      // Predicated region
      $region168: #{self_attention_forward.2} parent=5 // pred_check
        %p3367 = pneg %p3366
      $region169: #{self_attention_forward.2} parent=5 // pred_check_branch
        %3369 = sbr.rel (%p3367) target = $region171
      $region170: #{self_attention_forward.2} parent=5 // pred_region
        %s3370 = ssub.s32 %s15, 2
        // Predicated region
        $region172: #{self_attention_forward.2} parent=170 // pred_check
          %p3371 = pneg %p201
        $region173: #{self_attention_forward.2} parent=170 // pred_check_branch
          %3373 = sbr.rel (%p3371) target = $region175
        $region174: #{self_attention_forward.2} parent=170 // pred_region
          %s3374 = sand.u32 %s186, 1
          %s3375 = sand.u32 %s186, 1
          %s3376 = smul.addr %s3375, 32
          %s3377 = scalar_lea.vmem [#allocation2], %s3376
        $region175: #{self_attention_forward.2} parent=170 // pred_fallthru
          _
        // Predicated region
        $region176: #{self_attention_forward.2} parent=170 // pred_check
          %p3378 = pneg %p229
        $region177: #{self_attention_forward.2} parent=170 // pred_check_branch
          %3380 = sbr.rel (%p3378) target = $region179
        $region178: #{self_attention_forward.2} parent=170 // pred_region
          %s3381 = sand.u32 %s214, 1
          %s3382 = sand.u32 %s214, 1
          %s3383 = smul.addr %s3382, 32
          %s3384 = scalar_lea.vmem [#allocation3], %s3383
        $region179: #{self_attention_forward.2} parent=170 // pred_fallthru
          _
        // Predicated region
        $region180: #{self_attention_forward.2} parent=170 // pred_check
          %p3385 = pneg %p257
        $region181: #{self_attention_forward.2} parent=170 // pred_check_branch
          %3387 = sbr.rel (%p3385) target = $region183
        $region182: #{self_attention_forward.2} parent=170 // pred_region
          %s3388 = sand.u32 %s242, 1
          %s3389 = sand.u32 %s242, 1
          %s3390 = smul.addr %s3389, 32
          %s3391 = scalar_lea.vmem [#allocation4], %s3390
        $region183: #{self_attention_forward.2} parent=170 // pred_fallthru
          _
      $region171: #{self_attention_forward.2} parent=5 // pred_fallthru
        _
    $region6: #{self_attention_forward.2} parent=1 // loop_footer
      %s19 = sadd.s32 1, %s15
    $region7: #{self_attention_forward.2} parent=1 // loop_footer_branch
      %14 = sbr.rel target = $region3
    $region8: #{self_attention_forward.2} parent=1 // loop_exit
      _

// kernel: self_attention_forward.3
$region0: #{self_attention_forward.3}
  #allocation0 [shape = 'u32[]', space=smem, size = 0x4, offset = 0x4, fixed_abs, tag = 'smem constant byte address 0x4 - core index']
  #allocation1 [shape = 'u32[144,128]{1,0:T(1,128)}', space=vmem, size = 0x12000, scoped, tag = 'internal scratch']
  #allocation2 [shape = 'f32[2,32,1]{2,1,0:T(8,128)}', space=vmem, size = 0x8000, scoped, tag = 'scratch operand']
  #allocation3 [shape = 'f32[2,32,1]{2,1,0:T(8,128)}', space=vmem, size = 0x8000, scoped, tag = 'scratch operand']
  #allocation4 [shape = 'f32[2,32,128]{2,1,0:T(8,128)}', space=vmem, size = 0x8000, scoped, tag = 'scratch operand']
  #allocation5 [shape = 's32[1]{0}', space=sflag, size = 0x4, scoped, tag = 'scoped memory for self_attention_forward.3']
  #allocation6 [shape = 'u8[512]{0}', space=smem, size = 0x200, scoped, tag = 'prefetched SMEM operand 0']
  #allocation7 [shape = 'u8[512]{0}', space=smem, size = 0x200, scoped, tag = 'prefetched SMEM operand 1']
  %s0 = inlined_call_operand.vmem [shape: s32[3], index: 0, kind: input, shape index: {}]
  %s1 = inlined_call_operand.vmem [shape: s32[3], index: 1, kind: input, shape index: {}]
  %s2 = inlined_call_operand.vmem [shape: bf16[2,2,64,128], index: 2, kind: input, shape index: {}]
  %s3 = inlined_call_operand.vmem [shape: bf16[2,2,64,128], index: 3, kind: input, shape index: {}]
  %s4 = inlined_call_operand.vmem [shape: bf16[2,2,64,128], index: 4, kind: input, shape index: {}]
  %s5 = inlined_call_operand.vmem [shape: bf16[256,256], index: 5, kind: input, shape index: {}]
  %s6 = inlined_call_operand.hbm [shape: f32[2,64,256], index: 6, kind: output, shape index: {}]
  %s7 = sld [smem:[#allocation0]]
  $region188: #{self_attention_forward.3} parent=0
    _
  %s9 = ssub.s32 1, %s7
  %s10 = scalar_select 0, %s9, %s7
  %s11 = sshll.u32 %s0, 4
  %s12 = int_to_ptr.vmem [resolvable:$true] %s11
  %14 = dma.vmem_to_smem %s12, 16, [#allocation6], [#allocation5]
  %s15 = sshll.u32 %s1, 4
  %s16 = int_to_ptr.vmem [resolvable:$true] %s15
  %18 = dma.vmem_to_smem %s16, 16, [#allocation7], [#allocation5]
  %19 = dma.done [#allocation5], 32
  %20 = sfence
  $region1: #{self_attention_forward.3} parent=0
    #allocation8 [shape = 'u8[32768]{0}', space=vmem, size = 0x8000, scoped, tag = 'input window, operand 2']
    #allocation9 [shape = 'u8[32768]{0}', space=vmem, size = 0x8000, scoped, tag = 'input window, operand 3']
    #allocation10 [shape = 'u8[32768]{0}', space=vmem, size = 0x8000, scoped, tag = 'input window, operand 4']
    #allocation11 [shape = 'u8[65536]{0}', space=vmem, size = 0x10000, scoped, tag = 'output window, operand 0']
    #allocation12 [shape = 's32[2]{0}', space=sflag, size = 0x8, scoped, tag = 'scoped memory for self_attention_forward.3']
    %21 = vsyncpa [#allocation12], 0
    %s22 = scalar_lea.sflag [#allocation12], 1
    %23 = vsyncpa %s22, 0
    loop: start=0, step=1, limit=8
    $region2: #{self_attention_forward.3} parent=1 // loop_pre_header
      _
    $region3: #{self_attention_forward.3} parent=1 // loop_header
      %s25 = sphi 0, %s29
      %p26 = scmp.ge.s32.totalorder %s25, 8
      %s32 = sphi 0, %s44
      %s33 = sphi 0, %s40
      %s34 = sphi 0, %s32
      %s35 = sphi 0, %s33
      %s36 = sphi 0, %s34
      %s37 = sphi 0, %s35
      %s51 = sphi 0, %s53
      %s54 = sphi 0, %s51
      %s55 = sphi 0, %s54
      %s71 = sphi 0, %s55
      %s81 = sphi 0, %s83
      %s84 = sphi 0, %s81
      %s85 = sphi 0, %s84
      %s101 = sphi 0, %s85
      %s111 = sphi 0, %s113
      %s114 = sphi 0, %s111
      %s115 = sphi 0, %s114
      %s131 = sphi 0, %s115
      %s135 = sphi 0, %s135
      %s137 = sphi 0, %s135
      %s138 = sphi 0, %s137
      %s152 = sphi 0, %s138
      %s162 = sphi 0, %s164
      %s165 = sphi 0, %s162
      %s166 = sphi 0, %s165
      %s182 = sphi 0, %s166
    $region4: #{self_attention_forward.3} parent=1 // loop_header_branch
      %28 = sbr.rel (%p26) target = $region8
    $region5: #{self_attention_forward.3} parent=1 // loop_body
      %s30 = ssub.s32 %s25, 1
      %s31 = ssub.s32 %s25, 2
      %s38 = sadd.s32 1, %s33
      %p39 = scmp.ge.s32.totalorder %s38, 3
      %s40 = scalar_select %p39, 0, %s38
      %s41 = sadd.s32 1, %s32
      %s42 = scalar_select %p39, %s41, %s32
      %p43 = scmp.ge.s32.totalorder %s42, 2
      %s44 = scalar_select %p43, 0, %s42
      %s45 = sld [smem:[#allocation6 + %s33]]
      %s46 = sld [smem:[#allocation6 + %s40]]
      %s47 = ssub.s32 %s32, %s44
      %s48 = ssub.s32 %s45, %s46
      %s49 = sor.u32 %s47, %s48
      %p50 = scmp.eq.s32.totalorder %s49, 0
      %s52 = sadd.s32 %s51, 1
      %s53 = scalar_select %p50, %s51, %s52
      %p56 = pneg %p50
      %p57 = scmp.eq.s32.totalorder %s25, 5
      %p58 = por %p56, %p57
      %p59 = scmp.ne.s32.totalorder %s51, %s54
      %p60 = scmp.eq.s32.totalorder %s25, 0
      %p61 = por %p59, %p60
      %p62 = scmp.ne.s32.totalorder %s51, %s54
      %p63 = scmp.eq.s32.totalorder %s30, 5
      %p64 = por %p62, %p63
      %p65 = scmp.ne.s32.totalorder %s54, %s55
      %p66 = scmp.eq.s32.totalorder %s30, 0
      %p67 = por %p65, %p66
      %p68 = scmp.ne.s32.totalorder %s54, %s55
      %p69 = scmp.eq.s32.totalorder %s31, 5
      %p70 = por %p68, %p69
      %p72 = scmp.ne.s32.totalorder %s55, %s71
      %p73 = scmp.eq.s32.totalorder %s31, 0
      %p74 = por %p72, %p73
      %s75 = sld [smem:[#allocation7 + %s33]]
      %s76 = sld [smem:[#allocation7 + %s40]]
      %s77 = ssub.s32 %s32, %s44
      %s78 = ssub.s32 %s75, %s76
      %s79 = sor.u32 %s77, %s78
      %p80 = scmp.eq.s32.totalorder %s79, 0
      %s82 = sadd.s32 %s81, 1
      %s83 = scalar_select %p80, %s81, %s82
      %p86 = pneg %p80
      %p87 = scmp.eq.s32.totalorder %s25, 5
      %p88 = por %p86, %p87
      %p89 = scmp.ne.s32.totalorder %s81, %s84
      %p90 = scmp.eq.s32.totalorder %s25, 0
      %p91 = por %p89, %p90
      %p92 = scmp.ne.s32.totalorder %s81, %s84
      %p93 = scmp.eq.s32.totalorder %s30, 5
      %p94 = por %p92, %p93
      %p95 = scmp.ne.s32.totalorder %s84, %s85
      %p96 = scmp.eq.s32.totalorder %s30, 0
      %p97 = por %p95, %p96
      %p98 = scmp.ne.s32.totalorder %s84, %s85
      %p99 = scmp.eq.s32.totalorder %s31, 5
      %p100 = por %p98, %p99
      %p102 = scmp.ne.s32.totalorder %s85, %s101
      %p103 = scmp.eq.s32.totalorder %s31, 0
      %p104 = por %p102, %p103
      %s105 = sld [smem:[#allocation7 + %s33]]
      %s106 = sld [smem:[#allocation7 + %s40]]
      %s107 = ssub.s32 %s32, %s44
      %s108 = ssub.s32 %s105, %s106
      %s109 = sor.u32 %s107, %s108
      %p110 = scmp.eq.s32.totalorder %s109, 0
      %s112 = sadd.s32 %s111, 1
      %s113 = scalar_select %p110, %s111, %s112
      %p116 = pneg %p110
      %p117 = scmp.eq.s32.totalorder %s25, 5
      %p118 = por %p116, %p117
      %p119 = scmp.ne.s32.totalorder %s111, %s114
      %p120 = scmp.eq.s32.totalorder %s25, 0
      %p121 = por %p119, %p120
      %p122 = scmp.ne.s32.totalorder %s111, %s114
      %p123 = scmp.eq.s32.totalorder %s30, 5
      %p124 = por %p122, %p123
      %p125 = scmp.ne.s32.totalorder %s114, %s115
      %p126 = scmp.eq.s32.totalorder %s30, 0
      %p127 = por %p125, %p126
      %p128 = scmp.ne.s32.totalorder %s114, %s115
      %p129 = scmp.eq.s32.totalorder %s31, 5
      %p130 = por %p128, %p129
      %p132 = scmp.ne.s32.totalorder %s115, %s131
      %p133 = scmp.eq.s32.totalorder %s31, 0
      %p134 = por %p132, %p133
      %s136 = sadd.s32 %s135, 1
      %p139 = scmp.eq.s32.totalorder %s25, 5
      %p140 = scmp.ne.s32.totalorder %s135, %s137
      %p141 = scmp.eq.s32.totalorder %s25, 0
      %p142 = por %p140, %p141
      %p143 = scmp.ne.s32.totalorder %s135, %s137
      %p144 = scmp.eq.s32.totalorder %s30, 5
      %p145 = por %p143, %p144
      %p146 = scmp.ne.s32.totalorder %s137, %s138
      %p147 = scmp.eq.s32.totalorder %s30, 0
      %p148 = por %p146, %p147
      %p149 = scmp.ne.s32.totalorder %s137, %s138
      %p150 = scmp.eq.s32.totalorder %s31, 5
      %p151 = por %p149, %p150
      %p153 = scmp.ne.s32.totalorder %s138, %s152
      %p154 = scmp.eq.s32.totalorder %s31, 0
      %p155 = por %p153, %p154
      %s156 = sld [smem:[#allocation6 + %s33]]
      %s157 = sld [smem:[#allocation6 + %s40]]
      %s158 = ssub.s32 %s32, %s44
      %s159 = ssub.s32 %s156, %s157
      %s160 = sor.u32 %s158, %s159
      %p161 = scmp.eq.s32.totalorder %s160, 0
      %s163 = sadd.s32 %s162, 1
      %s164 = scalar_select %p161, %s162, %s163
      %p167 = pneg %p161
      %p168 = scmp.eq.s32.totalorder %s25, 5
      %p169 = por %p167, %p168
      %p170 = scmp.ne.s32.totalorder %s162, %s165
      %p171 = scmp.eq.s32.totalorder %s25, 0
      %p172 = por %p170, %p171
      %p173 = scmp.ne.s32.totalorder %s162, %s165
      %p174 = scmp.eq.s32.totalorder %s30, 5
      %p175 = por %p173, %p174
      %p176 = scmp.ne.s32.totalorder %s165, %s166
      %p177 = scmp.eq.s32.totalorder %s30, 0
      %p178 = por %p176, %p177
      %p179 = scmp.ne.s32.totalorder %s165, %s166
      %p180 = scmp.eq.s32.totalorder %s31, 5
      %p181 = por %p179, %p180
      %p183 = scmp.ne.s32.totalorder %s166, %s182
      %p184 = scmp.eq.s32.totalorder %s31, 0
      %p185 = por %p183, %p184
      %p186 = scmp.le.s32.totalorder 1, %s25
      %p187 = scmp.lt.s32.totalorder %s25, 7
      %p188 = pnand %p186, %p187
      %p189 = pneg %p188
      // Predicated region
      $region9: #{self_attention_forward.3} parent=5 // pred_check
        _
      $region10: #{self_attention_forward.3} parent=5 // pred_check_branch
        %191 = sbr.rel (%p188) target = $region12
      $region11: #{self_attention_forward.3} parent=5 // pred_region
        %s192 = ssub.s32 %s25, 1
        // Predicated region
        $region13: #{self_attention_forward.3} parent=11 // pred_check
          %p193 = pneg %p148
        $region14: #{self_attention_forward.3} parent=11 // pred_check_branch
          %195 = sbr.rel (%p193) target = $region16
        $region15: #{self_attention_forward.3} parent=11 // pred_region
          _
        $region16: #{self_attention_forward.3} parent=11 // pred_fallthru
          _
      $region12: #{self_attention_forward.3} parent=5 // pred_fallthru
        _
      %p196 = scmp.lt.s32.totalorder %s25, 6
      // Predicated region
      $region17: #{self_attention_forward.3} parent=5 // pred_check
        %p197 = pneg %p196
      $region18: #{self_attention_forward.3} parent=5 // pred_check_branch
        %199 = sbr.rel (%p197) target = $region20
      $region19: #{self_attention_forward.3} parent=5 // pred_region
        // Predicated region
        $region21: #{self_attention_forward.3} parent=19 // pred_check
          %p200 = pneg %p61
        $region22: #{self_attention_forward.3} parent=19 // pred_check_branch
          %202 = sbr.rel (%p200) target = $region24
        $region23: #{self_attention_forward.3} parent=19 // pred_region
          %s203 = sand.u32 %s51, 1
          %s204 = sand.u32 %s51, 1
          %s205 = smul.addr %s204, 32
          %s206 = scalar_lea.vmem [#allocation8], %s205
          %s207 = sld [smem:[#allocation6 + %s33]]
          %s208 = smul.u32 4, %s207
          %s209 = smul.addr %s32, 16
          %s210 = sadd.s32 %s208, %s209
          %s211 = smul.addr %s210, 4
          %s212 = scalar_lea.vmem %s2, %s211
          // Predicated region
          $region25: #{self_attention_forward.3} parent=23 // pred_check
            _
          $region26: #{self_attention_forward.3} parent=23 // pred_check_branch
            %214 = sbr.rel (0) target = $region28
          $region27: #{self_attention_forward.3} parent=23 // pred_region
            // Predicated region
            $region29: #{self_attention_forward.3} parent=27 // pred_check
              _
            $region30: #{self_attention_forward.3} parent=27 // pred_check_branch
              %216 = sbr.rel target = $region32
            $region31: #{self_attention_forward.3} parent=27 // pred_region
              // Predicated region
              $region44: #{self_attention_forward.3} parent=31 // pred_check
                _
              $region45: #{self_attention_forward.3} parent=31 // pred_check_branch
                %246 = sbr.rel (0) target = $region47
              $region46: #{self_attention_forward.3} parent=31 // pred_region
                loop: start=0, step=1, limit=1
                $region48: #{self_attention_forward.3} parent=46 // loop_pre_header
                  _
                $region49: #{self_attention_forward.3} parent=46 // loop_header
                  %s248 = sphi 0, %s252
                  %p249 = scmp.ge.s32.totalorder %s248, 1
                  %s253 = sphi %s212, %s212
                  %s254 = sphi %s206, %s206
                $region50: #{self_attention_forward.3} parent=46 // loop_header_branch
                  %251 = sbr.rel (%p249) target = $region54
                $region51: #{self_attention_forward.3} parent=46 // loop_body
                  _
                $region52: #{self_attention_forward.3} parent=46 // loop_footer
                  %s252 = sadd.s32 1, %s248
                $region53: #{self_attention_forward.3} parent=46 // loop_footer_branch
                  %247 = sbr.rel target = $region49
                $region54: #{self_attention_forward.3} parent=46 // loop_exit
                  _
                %s256 = ssub.s32 16, 1
                loop: start=0, step=1, limit=1
                $region55: #{self_attention_forward.3} parent=46 // loop_pre_header
                  _
                $region56: #{self_attention_forward.3} parent=46 // loop_header
                  %s258 = sphi 0, %s262
                  %p259 = scmp.ge.s32.totalorder %s258, 1
                  %s263 = sphi %s212, %s212
                  %s264 = sphi %s206, %s206
                $region57: #{self_attention_forward.3} parent=46 // loop_header_branch
                  %261 = sbr.rel (%p259) target = $region61
                $region58: #{self_attention_forward.3} parent=46 // loop_body
                  %v265 = vld [vmem:[%s263] sm:%s256]
                  %266 = vst [vmem:[%s264] sm:%s256] %v265
                  %v267 = vld [vmem:[%s263 + $0x4] sm:%s256]
                  %268 = vst [vmem:[%s264 + $0x4] sm:%s256] %v267
                  %v269 = vld [vmem:[%s263 + $0x8] sm:%s256]
                  %270 = vst [vmem:[%s264 + $0x8] sm:%s256] %v269
                  %v271 = vld [vmem:[%s263 + $0xc] sm:%s256]
                  %272 = vst [vmem:[%s264 + $0xc] sm:%s256] %v271
                  %v273 = vld [vmem:[%s263 + $0x20] sm:%s256]
                  %274 = vst [vmem:[%s264 + $0x10] sm:%s256] %v273
                  %v275 = vld [vmem:[%s263 + $0x24] sm:%s256]
                  %276 = vst [vmem:[%s264 + $0x14] sm:%s256] %v275
                  %v277 = vld [vmem:[%s263 + $0x28] sm:%s256]
                  %278 = vst [vmem:[%s264 + $0x18] sm:%s256] %v277
                  %v279 = vld [vmem:[%s263 + $0x2c] sm:%s256]
                  %280 = vst [vmem:[%s264 + $0x1c] sm:%s256] %v279
                $region59: #{self_attention_forward.3} parent=46 // loop_footer
                  %s262 = sadd.s32 1, %s258
                $region60: #{self_attention_forward.3} parent=46 // loop_footer_branch
                  %257 = sbr.rel target = $region56
                $region61: #{self_attention_forward.3} parent=46 // loop_exit
                  _
              $region47: #{self_attention_forward.3} parent=31 // pred_fallthru
                _
            $region32: #{self_attention_forward.3} parent=27 // pred_fallthru
              _
            // Predicated region
            $region33: #{self_attention_forward.3} parent=27 // pred_check
              _
            $region34: #{self_attention_forward.3} parent=27 // pred_check_branch
              %218 = sbr.rel (0) target = $region36
            $region35: #{self_attention_forward.3} parent=27 // pred_region
              %s220 = ssub.s32 16, 1
              loop: start=0, step=1, limit=1
              $region37: #{self_attention_forward.3} parent=35 // loop_pre_header
                _
              $region38: #{self_attention_forward.3} parent=35 // loop_header
                %s222 = sphi 0, %s226
                %p223 = scmp.ge.s32.totalorder %s222, 1
                %s227 = sphi %s212, %s212
                %s228 = sphi %s206, %s206
              $region39: #{self_attention_forward.3} parent=35 // loop_header_branch
                %225 = sbr.rel (%p223) target = $region43
              $region40: #{self_attention_forward.3} parent=35 // loop_body
                %v229 = vld [vmem:[%s227] sm:%s220]
                %230 = vst [vmem:[%s228] sm:%s220] %v229
                %v231 = vld [vmem:[%s227 + $0x4] sm:%s220]
                %232 = vst [vmem:[%s228 + $0x4] sm:%s220] %v231
                %v233 = vld [vmem:[%s227 + $0x8] sm:%s220]
                %234 = vst [vmem:[%s228 + $0x8] sm:%s220] %v233
                %v235 = vld [vmem:[%s227 + $0xc] sm:%s220]
                %236 = vst [vmem:[%s228 + $0xc] sm:%s220] %v235
                %v237 = vld [vmem:[%s227 + $0x20] sm:%s220]
                %238 = vst [vmem:[%s228 + $0x10] sm:%s220] %v237
                %v239 = vld [vmem:[%s227 + $0x24] sm:%s220]
                %240 = vst [vmem:[%s228 + $0x14] sm:%s220] %v239
                %v241 = vld [vmem:[%s227 + $0x28] sm:%s220]
                %242 = vst [vmem:[%s228 + $0x18] sm:%s220] %v241
                %v243 = vld [vmem:[%s227 + $0x2c] sm:%s220]
                %244 = vst [vmem:[%s228 + $0x1c] sm:%s220] %v243
              $region41: #{self_attention_forward.3} parent=35 // loop_footer
                %s226 = sadd.s32 1, %s222
              $region42: #{self_attention_forward.3} parent=35 // loop_footer_branch
                %221 = sbr.rel target = $region38
              $region43: #{self_attention_forward.3} parent=35 // loop_exit
                _
            $region36: #{self_attention_forward.3} parent=27 // pred_fallthru
              _
          $region28: #{self_attention_forward.3} parent=23 // pred_fallthru
            _
          %281 = vnop
        $region24: #{self_attention_forward.3} parent=19 // pred_fallthru
          _
        // Predicated region
        $region62: #{self_attention_forward.3} parent=19 // pred_check
          %p282 = pneg %p91
        $region63: #{self_attention_forward.3} parent=19 // pred_check_branch
          %284 = sbr.rel (%p282) target = $region65
        $region64: #{self_attention_forward.3} parent=19 // pred_region
          %s285 = sand.u32 %s81, 1
          %s286 = sand.u32 %s81, 1
          %s287 = smul.addr %s286, 32
          %s288 = scalar_lea.vmem [#allocation9], %s287
          %s289 = sld [smem:[#allocation7 + %s33]]
          %s290 = smul.u32 4, %s289
          %s291 = smul.addr %s32, 16
          %s292 = sadd.s32 %s290, %s291
          %s293 = smul.addr %s292, 4
          %s294 = scalar_lea.vmem %s3, %s293
          // Predicated region
          $region66: #{self_attention_forward.3} parent=64 // pred_check
            _
          $region67: #{self_attention_forward.3} parent=64 // pred_check_branch
            %296 = sbr.rel (0) target = $region69
          $region68: #{self_attention_forward.3} parent=64 // pred_region
            // Predicated region
            $region70: #{self_attention_forward.3} parent=68 // pred_check
              _
            $region71: #{self_attention_forward.3} parent=68 // pred_check_branch
              %298 = sbr.rel target = $region73
            $region72: #{self_attention_forward.3} parent=68 // pred_region
              // Predicated region
              $region85: #{self_attention_forward.3} parent=72 // pred_check
                _
              $region86: #{self_attention_forward.3} parent=72 // pred_check_branch
                %328 = sbr.rel (0) target = $region88
              $region87: #{self_attention_forward.3} parent=72 // pred_region
                loop: start=0, step=1, limit=1
                $region89: #{self_attention_forward.3} parent=87 // loop_pre_header
                  _
                $region90: #{self_attention_forward.3} parent=87 // loop_header
                  %s330 = sphi 0, %s334
                  %p331 = scmp.ge.s32.totalorder %s330, 1
                  %s335 = sphi %s294, %s294
                  %s336 = sphi %s288, %s288
                $region91: #{self_attention_forward.3} parent=87 // loop_header_branch
                  %333 = sbr.rel (%p331) target = $region95
                $region92: #{self_attention_forward.3} parent=87 // loop_body
                  _
                $region93: #{self_attention_forward.3} parent=87 // loop_footer
                  %s334 = sadd.s32 1, %s330
                $region94: #{self_attention_forward.3} parent=87 // loop_footer_branch
                  %329 = sbr.rel target = $region90
                $region95: #{self_attention_forward.3} parent=87 // loop_exit
                  _
                %s338 = ssub.s32 16, 1
                loop: start=0, step=1, limit=1
                $region96: #{self_attention_forward.3} parent=87 // loop_pre_header
                  _
                $region97: #{self_attention_forward.3} parent=87 // loop_header
                  %s340 = sphi 0, %s344
                  %p341 = scmp.ge.s32.totalorder %s340, 1
                  %s345 = sphi %s294, %s294
                  %s346 = sphi %s288, %s288
                $region98: #{self_attention_forward.3} parent=87 // loop_header_branch
                  %343 = sbr.rel (%p341) target = $region102
                $region99: #{self_attention_forward.3} parent=87 // loop_body
                  %v347 = vld [vmem:[%s345] sm:%s338]
                  %348 = vst [vmem:[%s346] sm:%s338] %v347
                  %v349 = vld [vmem:[%s345 + $0x4] sm:%s338]
                  %350 = vst [vmem:[%s346 + $0x4] sm:%s338] %v349
                  %v351 = vld [vmem:[%s345 + $0x8] sm:%s338]
                  %352 = vst [vmem:[%s346 + $0x8] sm:%s338] %v351
                  %v353 = vld [vmem:[%s345 + $0xc] sm:%s338]
                  %354 = vst [vmem:[%s346 + $0xc] sm:%s338] %v353
                  %v355 = vld [vmem:[%s345 + $0x20] sm:%s338]
                  %356 = vst [vmem:[%s346 + $0x10] sm:%s338] %v355
                  %v357 = vld [vmem:[%s345 + $0x24] sm:%s338]
                  %358 = vst [vmem:[%s346 + $0x14] sm:%s338] %v357
                  %v359 = vld [vmem:[%s345 + $0x28] sm:%s338]
                  %360 = vst [vmem:[%s346 + $0x18] sm:%s338] %v359
                  %v361 = vld [vmem:[%s345 + $0x2c] sm:%s338]
                  %362 = vst [vmem:[%s346 + $0x1c] sm:%s338] %v361
                $region100: #{self_attention_forward.3} parent=87 // loop_footer
                  %s344 = sadd.s32 1, %s340
                $region101: #{self_attention_forward.3} parent=87 // loop_footer_branch
                  %339 = sbr.rel target = $region97
                $region102: #{self_attention_forward.3} parent=87 // loop_exit
                  _
              $region88: #{self_attention_forward.3} parent=72 // pred_fallthru
                _
            $region73: #{self_attention_forward.3} parent=68 // pred_fallthru
              _
            // Predicated region
            $region74: #{self_attention_forward.3} parent=68 // pred_check
              _
            $region75: #{self_attention_forward.3} parent=68 // pred_check_branch
              %300 = sbr.rel (0) target = $region77
            $region76: #{self_attention_forward.3} parent=68 // pred_region
              %s302 = ssub.s32 16, 1
              loop: start=0, step=1, limit=1
              $region78: #{self_attention_forward.3} parent=76 // loop_pre_header
                _
              $region79: #{self_attention_forward.3} parent=76 // loop_header
                %s304 = sphi 0, %s308
                %p305 = scmp.ge.s32.totalorder %s304, 1
                %s309 = sphi %s294, %s294
                %s310 = sphi %s288, %s288
              $region80: #{self_attention_forward.3} parent=76 // loop_header_branch
                %307 = sbr.rel (%p305) target = $region84
              $region81: #{self_attention_forward.3} parent=76 // loop_body
                %v311 = vld [vmem:[%s309] sm:%s302]
                %312 = vst [vmem:[%s310] sm:%s302] %v311
                %v313 = vld [vmem:[%s309 + $0x4] sm:%s302]
                %314 = vst [vmem:[%s310 + $0x4] sm:%s302] %v313
                %v315 = vld [vmem:[%s309 + $0x8] sm:%s302]
                %316 = vst [vmem:[%s310 + $0x8] sm:%s302] %v315
                %v317 = vld [vmem:[%s309 + $0xc] sm:%s302]
                %318 = vst [vmem:[%s310 + $0xc] sm:%s302] %v317
                %v319 = vld [vmem:[%s309 + $0x20] sm:%s302]
                %320 = vst [vmem:[%s310 + $0x10] sm:%s302] %v319
                %v321 = vld [vmem:[%s309 + $0x24] sm:%s302]
                %322 = vst [vmem:[%s310 + $0x14] sm:%s302] %v321
                %v323 = vld [vmem:[%s309 + $0x28] sm:%s302]
                %324 = vst [vmem:[%s310 + $0x18] sm:%s302] %v323
                %v325 = vld [vmem:[%s309 + $0x2c] sm:%s302]
                %326 = vst [vmem:[%s310 + $0x1c] sm:%s302] %v325
              $region82: #{self_attention_forward.3} parent=76 // loop_footer
                %s308 = sadd.s32 1, %s304
              $region83: #{self_attention_forward.3} parent=76 // loop_footer_branch
                %303 = sbr.rel target = $region79
              $region84: #{self_attention_forward.3} parent=76 // loop_exit
                _
            $region77: #{self_attention_forward.3} parent=68 // pred_fallthru
              _
          $region69: #{self_attention_forward.3} parent=64 // pred_fallthru
            _
          %363 = vnop
        $region65: #{self_attention_forward.3} parent=19 // pred_fallthru
          _
        // Predicated region
        $region103: #{self_attention_forward.3} parent=19 // pred_check
          %p364 = pneg %p121
        $region104: #{self_attention_forward.3} parent=19 // pred_check_branch
          %366 = sbr.rel (%p364) target = $region106
        $region105: #{self_attention_forward.3} parent=19 // pred_region
          %s367 = sand.u32 %s111, 1
          %s368 = sand.u32 %s111, 1
          %s369 = smul.addr %s368, 32
          %s370 = scalar_lea.vmem [#allocation10], %s369
          %s371 = sld [smem:[#allocation7 + %s33]]
          %s372 = smul.u32 4, %s371
          %s373 = smul.addr %s32, 16
          %s374 = sadd.s32 %s372, %s373
          %s375 = smul.addr %s374, 4
          %s376 = scalar_lea.vmem %s4, %s375
          // Predicated region
          $region107: #{self_attention_forward.3} parent=105 // pred_check
            _
          $region108: #{self_attention_forward.3} parent=105 // pred_check_branch
            %378 = sbr.rel (0) target = $region110
          $region109: #{self_attention_forward.3} parent=105 // pred_region
            // Predicated region
            $region111: #{self_attention_forward.3} parent=109 // pred_check
              _
            $region112: #{self_attention_forward.3} parent=109 // pred_check_branch
              %380 = sbr.rel target = $region114
            $region113: #{self_attention_forward.3} parent=109 // pred_region
              // Predicated region
              $region126: #{self_attention_forward.3} parent=113 // pred_check
                _
              $region127: #{self_attention_forward.3} parent=113 // pred_check_branch
                %410 = sbr.rel (0) target = $region129
              $region128: #{self_attention_forward.3} parent=113 // pred_region
                loop: start=0, step=1, limit=1
                $region130: #{self_attention_forward.3} parent=128 // loop_pre_header
                  _
                $region131: #{self_attention_forward.3} parent=128 // loop_header
                  %s412 = sphi 0, %s416
                  %p413 = scmp.ge.s32.totalorder %s412, 1
                  %s417 = sphi %s376, %s376
                  %s418 = sphi %s370, %s370
                $region132: #{self_attention_forward.3} parent=128 // loop_header_branch
                  %415 = sbr.rel (%p413) target = $region136
                $region133: #{self_attention_forward.3} parent=128 // loop_body
                  _
                $region134: #{self_attention_forward.3} parent=128 // loop_footer
                  %s416 = sadd.s32 1, %s412
                $region135: #{self_attention_forward.3} parent=128 // loop_footer_branch
                  %411 = sbr.rel target = $region131
                $region136: #{self_attention_forward.3} parent=128 // loop_exit
                  _
                %s420 = ssub.s32 16, 1
                loop: start=0, step=1, limit=1
                $region137: #{self_attention_forward.3} parent=128 // loop_pre_header
                  _
                $region138: #{self_attention_forward.3} parent=128 // loop_header
                  %s422 = sphi 0, %s426
                  %p423 = scmp.ge.s32.totalorder %s422, 1
                  %s427 = sphi %s376, %s376
                  %s428 = sphi %s370, %s370
                $region139: #{self_attention_forward.3} parent=128 // loop_header_branch
                  %425 = sbr.rel (%p423) target = $region143
                $region140: #{self_attention_forward.3} parent=128 // loop_body
                  %v429 = vld [vmem:[%s427] sm:%s420]
                  %430 = vst [vmem:[%s428] sm:%s420] %v429
                  %v431 = vld [vmem:[%s427 + $0x4] sm:%s420]
                  %432 = vst [vmem:[%s428 + $0x4] sm:%s420] %v431
                  %v433 = vld [vmem:[%s427 + $0x8] sm:%s420]
                  %434 = vst [vmem:[%s428 + $0x8] sm:%s420] %v433
                  %v435 = vld [vmem:[%s427 + $0xc] sm:%s420]
                  %436 = vst [vmem:[%s428 + $0xc] sm:%s420] %v435
                  %v437 = vld [vmem:[%s427 + $0x20] sm:%s420]
                  %438 = vst [vmem:[%s428 + $0x10] sm:%s420] %v437
                  %v439 = vld [vmem:[%s427 + $0x24] sm:%s420]
                  %440 = vst [vmem:[%s428 + $0x14] sm:%s420] %v439
                  %v441 = vld [vmem:[%s427 + $0x28] sm:%s420]
                  %442 = vst [vmem:[%s428 + $0x18] sm:%s420] %v441
                  %v443 = vld [vmem:[%s427 + $0x2c] sm:%s420]
                  %444 = vst [vmem:[%s428 + $0x1c] sm:%s420] %v443
                $region141: #{self_attention_forward.3} parent=128 // loop_footer
                  %s426 = sadd.s32 1, %s422
                $region142: #{self_attention_forward.3} parent=128 // loop_footer_branch
                  %421 = sbr.rel target = $region138
                $region143: #{self_attention_forward.3} parent=128 // loop_exit
                  _
              $region129: #{self_attention_forward.3} parent=113 // pred_fallthru
                _
            $region114: #{self_attention_forward.3} parent=109 // pred_fallthru
              _
            // Predicated region
            $region115: #{self_attention_forward.3} parent=109 // pred_check
              _
            $region116: #{self_attention_forward.3} parent=109 // pred_check_branch
              %382 = sbr.rel (0) target = $region118
            $region117: #{self_attention_forward.3} parent=109 // pred_region
              %s384 = ssub.s32 16, 1
              loop: start=0, step=1, limit=1
              $region119: #{self_attention_forward.3} parent=117 // loop_pre_header
                _
              $region120: #{self_attention_forward.3} parent=117 // loop_header
                %s386 = sphi 0, %s390
                %p387 = scmp.ge.s32.totalorder %s386, 1
                %s391 = sphi %s376, %s376
                %s392 = sphi %s370, %s370
              $region121: #{self_attention_forward.3} parent=117 // loop_header_branch
                %389 = sbr.rel (%p387) target = $region125
              $region122: #{self_attention_forward.3} parent=117 // loop_body
                %v393 = vld [vmem:[%s391] sm:%s384]
                %394 = vst [vmem:[%s392] sm:%s384] %v393
                %v395 = vld [vmem:[%s391 + $0x4] sm:%s384]
                %396 = vst [vmem:[%s392 + $0x4] sm:%s384] %v395
                %v397 = vld [vmem:[%s391 + $0x8] sm:%s384]
                %398 = vst [vmem:[%s392 + $0x8] sm:%s384] %v397
                %v399 = vld [vmem:[%s391 + $0xc] sm:%s384]
                %400 = vst [vmem:[%s392 + $0xc] sm:%s384] %v399
                %v401 = vld [vmem:[%s391 + $0x20] sm:%s384]
                %402 = vst [vmem:[%s392 + $0x10] sm:%s384] %v401
                %v403 = vld [vmem:[%s391 + $0x24] sm:%s384]
                %404 = vst [vmem:[%s392 + $0x14] sm:%s384] %v403
                %v405 = vld [vmem:[%s391 + $0x28] sm:%s384]
                %406 = vst [vmem:[%s392 + $0x18] sm:%s384] %v405
                %v407 = vld [vmem:[%s391 + $0x2c] sm:%s384]
                %408 = vst [vmem:[%s392 + $0x1c] sm:%s384] %v407
              $region123: #{self_attention_forward.3} parent=117 // loop_footer
                %s390 = sadd.s32 1, %s386
              $region124: #{self_attention_forward.3} parent=117 // loop_footer_branch
                %385 = sbr.rel target = $region120
              $region125: #{self_attention_forward.3} parent=117 // loop_exit
                _
            $region118: #{self_attention_forward.3} parent=109 // pred_fallthru
              _
          $region110: #{self_attention_forward.3} parent=105 // pred_fallthru
            _
          %445 = vnop
        $region106: #{self_attention_forward.3} parent=19 // pred_fallthru
          _
      $region20: #{self_attention_forward.3} parent=5 // pred_fallthru
        _
      %p446 = scmp.le.s32.totalorder 1, %s25
      %p447 = scmp.lt.s32.totalorder %s25, 7
      %p448 = pnand %p446, %p447
      %p449 = pneg %p448
      // Predicated region
      $region144: #{self_attention_forward.3} parent=5 // pred_check
        _
      $region145: #{self_attention_forward.3} parent=5 // pred_check_branch
        %451 = sbr.rel (%p448) target = $region147
      $region146: #{self_attention_forward.3} parent=5 // pred_region
        %s452 = ssub.s32 %s25, 1
        %s453 = sand.u32 %s54, 1
        %s454 = sand.u32 %s54, 1
        %s455 = smul.addr %s454, 32
        %s456 = scalar_lea.vmem [#allocation8], %s455
        // Predicated region
        $region148: #{self_attention_forward.3} parent=146 // pred_check
          %p457 = pneg %p67
        $region149: #{self_attention_forward.3} parent=146 // pred_check_branch
          %459 = sbr.rel (%p457) target = $region151
        $region150: #{self_attention_forward.3} parent=146 // pred_region
          _
        $region151: #{self_attention_forward.3} parent=146 // pred_fallthru
          _
        %s460 = sand.u32 %s84, 1
        %s461 = sand.u32 %s84, 1
        %s462 = smul.addr %s461, 32
        %s463 = scalar_lea.vmem [#allocation9], %s462
        // Predicated region
        $region152: #{self_attention_forward.3} parent=146 // pred_check
          %p464 = pneg %p97
        $region153: #{self_attention_forward.3} parent=146 // pred_check_branch
          %466 = sbr.rel (%p464) target = $region155
        $region154: #{self_attention_forward.3} parent=146 // pred_region
          _
        $region155: #{self_attention_forward.3} parent=146 // pred_fallthru
          _
        %s467 = sand.u32 %s114, 1
        %s468 = sand.u32 %s114, 1
        %s469 = smul.addr %s468, 32
        %s470 = scalar_lea.vmem [#allocation10], %s469
        // Predicated region
        $region156: #{self_attention_forward.3} parent=146 // pred_check
          %p471 = pneg %p127
        $region157: #{self_attention_forward.3} parent=146 // pred_check_branch
          %473 = sbr.rel (%p471) target = $region159
        $region158: #{self_attention_forward.3} parent=146 // pred_region
          _
        $region159: #{self_attention_forward.3} parent=146 // pred_fallthru
          _
        %s474 = sand.u32 %s54, 1
        %s475 = sand.u32 %s54, 1
        %s476 = smul.addr %s475, 32
        %s477 = scalar_lea.vmem [#allocation8], %s476
        %p478 = pneg %p67
        %p479 = pneg %p64
        %s480 = sand.u32 %s84, 1
        %s481 = sand.u32 %s84, 1
        %s482 = smul.addr %s481, 32
        %s483 = scalar_lea.vmem [#allocation9], %s482
        %p484 = pneg %p97
        %p485 = pneg %p94
        %s486 = sand.u32 %s114, 1
        %s487 = sand.u32 %s114, 1
        %s488 = smul.addr %s487, 32
        %s489 = scalar_lea.vmem [#allocation10], %s488
        %p490 = pneg %p127
        %p491 = pneg %p124
        %p492 = pneg %p148
        %p493 = pneg %p145
        %p494 = pneg %p178
        %p495 = pneg %p175
        %s496 = sand.u32 %s165, 1
        %s497 = scalar_lea.sflag [#allocation12], %s496
        %s498 = sand.u32 %s165, 1
        %s499 = smul.addr %s498, 64
        %s500 = scalar_lea.vmem [#allocation11], %s499
        %s501 = sld [smem:[#allocation6 + %s35]]
        %s502 = smul.u32 4, %s501
        %s503 = sld [smem:[#allocation7 + %s35]]
        %s504 = smul.u32 4, %s503
        %s505 = sld [smem:[#allocation7 + %s35]]
        %s506 = smul.u32 4, %s505
        %s507 = sld [smem:[#allocation6 + %s35]]
        %s508 = smul.u32 4, %s507
        %s510 = sld [smem:[#allocation6 + %s35]]
        %s511 = sld [smem:[#allocation7 + %s35]]
        %s512 = smul.u32 %s510, 32
        %s513 = smul.u32 %s511, 32
        %p514 = scmp.eq.s32.totalorder %s511, 0
        %s515 = sadd.s32 %s513, 32
        %s516 = sadd.s32 %s512, 32
        %p517 = scmp.ge.s32.totalorder %s515, %s516
        %s518 = sadd.s32 %s513, 31
        %p519 = scmp.gt.s32.totalorder %s518, %s512
        // Predicated region
        $region160: #{self_attention_forward.3} parent=146 // pred_check
          %p520 = pneg %p514
        $region161: #{self_attention_forward.3} parent=146 // pred_check_branch
          %522 = sbr.rel (%p520) target = $region163
        $region162: #{self_attention_forward.3} parent=146 // pred_region
          %vm523 = vcmask 7168
          %524 = vst.msk [vmem:[#allocation2] sm:$0xff] %vm523, -1e+30
          %525 = vst.msk [vmem:[#allocation2 + $0x8] sm:$0xff] %vm523, -1e+30
          %526 = vst.msk [vmem:[#allocation2 + $0x10] sm:$0xff] %vm523, -1e+30
          %527 = vst.msk [vmem:[#allocation2 + $0x18] sm:$0xff] %vm523, -1e+30
          %528 = vst.msk [vmem:[#allocation2 + $0x20] sm:$0xff] %vm523, -1e+30
          %529 = vst.msk [vmem:[#allocation2 + $0x28] sm:$0xff] %vm523, -1e+30
          %530 = vst.msk [vmem:[#allocation2 + $0x30] sm:$0xff] %vm523, -1e+30
          %531 = vst.msk [vmem:[#allocation2 + $0x38] sm:$0xff] %vm523, -1e+30
          %532 = vst.msk [vmem:[#allocation3] sm:$0xff] %vm523, 0.0
          %533 = vst.msk [vmem:[#allocation3 + $0x8] sm:$0xff] %vm523, 0.0
          %534 = vst.msk [vmem:[#allocation3 + $0x10] sm:$0xff] %vm523, 0.0
          %535 = vst.msk [vmem:[#allocation3 + $0x18] sm:$0xff] %vm523, 0.0
          %536 = vst.msk [vmem:[#allocation3 + $0x20] sm:$0xff] %vm523, 0.0
          %537 = vst.msk [vmem:[#allocation3 + $0x28] sm:$0xff] %vm523, 0.0
          %538 = vst.msk [vmem:[#allocation3 + $0x30] sm:$0xff] %vm523, 0.0
          %539 = vst.msk [vmem:[#allocation3 + $0x38] sm:$0xff] %vm523, 0.0
          %540 = vst [vmem:[#allocation4] sm:$0xff] 0.0
          %541 = vst [vmem:[#allocation4 + $0x8] sm:$0xff] 0.0
          %542 = vst [vmem:[#allocation4 + $0x10] sm:$0xff] 0.0
          %543 = vst [vmem:[#allocation4 + $0x18] sm:$0xff] 0.0
          %544 = vst [vmem:[#allocation4 + $0x20] sm:$0xff] 0.0
          %545 = vst [vmem:[#allocation4 + $0x28] sm:$0xff] 0.0
          %546 = vst [vmem:[#allocation4 + $0x30] sm:$0xff] 0.0
          %547 = vst [vmem:[#allocation4 + $0x38] sm:$0xff] 0.0
        $region163: #{self_attention_forward.3} parent=146 // pred_fallthru
          _
        %v548 = vld [vmem:[%s456] sm:$0xf]
        %v549 = vld [vmem:[%s456 + $0x4] sm:$0xf]
        %v550 = vld [vmem:[%s456 + $0x8] sm:$0xf]
        %v551 = vld [vmem:[%s456 + $0xc] sm:$0xf]
        %v552 = vld [vmem:[%s456 + $0x10] sm:$0xf]
        %v553 = vld [vmem:[%s456 + $0x14] sm:$0xf]
        %v554 = vld [vmem:[%s456 + $0x18] sm:$0xf]
        %v555 = vld [vmem:[%s456 + $0x1c] sm:$0xf]
        %v556 = vld [vmem:[%s463] sm:$0xf]
        %v557 = vld [vmem:[%s463 + $0x4] sm:$0xf]
        %v558 = vld [vmem:[%s463 + $0x8] sm:$0xf]
        %v559 = vld [vmem:[%s463 + $0xc] sm:$0xf]
        %v560 = vld [vmem:[%s463 + $0x10] sm:$0xf]
        %v561 = vld [vmem:[%s463 + $0x14] sm:$0xf]
        %v562 = vld [vmem:[%s463 + $0x18] sm:$0xf]
        %v563 = vld [vmem:[%s463 + $0x1c] sm:$0xf]
        %v564 = vld [vmem:[%s470] sm:$0xf]
        %v565 = vld [vmem:[%s470 + $0x4] sm:$0xf]
        %v566 = vld [vmem:[%s470 + $0x8] sm:$0xf]
        %v567 = vld [vmem:[%s470 + $0xc] sm:$0xf]
        %v568 = vld [vmem:[%s470 + $0x10] sm:$0xf]
        %v569 = vld [vmem:[%s470 + $0x14] sm:$0xf]
        %v570 = vld [vmem:[%s470 + $0x18] sm:$0xf]
        %v571 = vld [vmem:[%s470 + $0x1c] sm:$0xf]
        %v576 = vunpack.c.l.b16 %v548
        %v577 = vunpack.c.l.b16 %v549
        %v578 = vunpack.c.l.b16 %v550
        %v579 = vunpack.c.l.b16 %v551
        %v580 = vpack.c.b16 %v577, %v576
        %v581 = vpack.c.b16 %v579, %v578
        %v588 = vunpack.c.l.b16 %v556
        %v589 = vunpack.c.l.b16 %v557
        %v590 = vunpack.c.l.b16 %v558
        %v591 = vunpack.c.l.b16 %v559
        %v592 = vpack.c.b16 %v589, %v588
        %v593 = vpack.c.b16 %v591, %v590
        %596 = vmatprep.subr.bf16.mxu0 0
        %597 = vmatpush1.bf16.xpose.msra.mxu0 0
        %598 = vmatprep.subr.bf16.mxu0 0
        %599 = vmatpush1.bf16.xpose.msra.mxu0 0
        %600 = vmatprep.subr.bf16.mxu0 0
        %601 = vmatpush1.bf16.xpose.msra.mxu0 0
        %602 = vmatprep.subr.bf16.mxu0 0
        %603 = vmatpush1.bf16.xpose.msra.mxu0 0
        %604 = vmatprep.subr.bf16.mxu0 0
        %605 = vmatpush1.bf16.xpose.msra.mxu0 0
        %606 = vmatprep.subr.bf16.mxu0 0
        %607 = vmatpush1.bf16.xpose.msra.mxu0 0
        %608 = vmatprep.subr.bf16.mxu0 0
        %609 = vmatpush1.bf16.xpose.msra.mxu0 %v593
        %610 = vmatprep.subr.bf16.mxu0 0
        %611 = vmatpush1.bf16.xpose.msra.mxu0 %v592
        %612 = vmatprep.subr.bf16.mxu0 0
        %613 = vmatpush2.bf16.xpose.msra.mxu0 0
        %614 = vmatprep.subr.bf16.mxu0 0
        %615 = vmatpush2.bf16.xpose.msra.mxu0 0
        %616 = vmatprep.subr.bf16.mxu0 0
        %617 = vmatpush2.bf16.xpose.msra.mxu0 0
        %618 = vmatprep.subr.bf16.mxu0 0
        %619 = vmatpush2.bf16.xpose.msra.mxu0 0
        %620 = vmatprep.subr.bf16.mxu0 0
        %621 = vmatpush2.bf16.xpose.msra.mxu0 0
        %622 = vmatprep.subr.bf16.mxu0 0
        %623 = vmatpush2.bf16.xpose.msra.mxu0 0
        %624 = vmatprep.subr.bf16.mxu0 0
        %625 = vmatpush2.bf16.xpose.msra.mxu0 0
        %626 = vmatprep.subr.bf16.mxu0 0
        %627 = vmatpush2.bf16.xpose.msra.mxu0 0
        %628 = vmatprep.mubr.bf16.mxu0 0
        %629 = vmatmul.mubr.bf16.gmra.mxu0 %v580
        %v630 = vpop.f32.mrf.mxu0
        %v631 = vadd.f32 0.0, %v630
        %v632 = vpop.f32.mrf.mxu0
        %v633 = vpop.f32.mrf.mxu0
        %v634 = vadd.f32 0.0, %v633
        %v635 = vpop.f32.mrf.mxu0
        %636 = vmatprep.mubr.bf16.mxu0 0
        %637 = vmatmul.mubr.bf16.gmra.mxu0 %v581
        %v638 = vpop.f32.mrf.mxu0
        %v639 = vadd.f32 0.0, %v638
        %v640 = vpop.f32.mrf.mxu0
        %v641 = vpop.f32.mrf.mxu0
        %v642 = vadd.f32 0.0, %v641
        %v643 = vpop.f32.mrf.mxu0
        %644 = vdwg.mxu0
        %v649 = vunpack.c.l.b16 %v552
        %v650 = vunpack.c.l.b16 %v553
        %v651 = vunpack.c.l.b16 %v554
        %v652 = vunpack.c.l.b16 %v555
        %v653 = vpack.c.b16 %v650, %v649
        %v654 = vpack.c.b16 %v652, %v651
        %v661 = vunpack.c.l.b16 %v560
        %v662 = vunpack.c.l.b16 %v561
        %v663 = vunpack.c.l.b16 %v562
        %v664 = vunpack.c.l.b16 %v563
        %v665 = vpack.c.b16 %v662, %v661
        %v666 = vpack.c.b16 %v664, %v663
        %669 = vmatprep.subr.bf16.mxu0 0
        %670 = vmatpush1.bf16.xpose.msra.mxu0 0
        %671 = vmatprep.subr.bf16.mxu0 0
        %672 = vmatpush1.bf16.xpose.msra.mxu0 0
        %673 = vmatprep.subr.bf16.mxu0 0
        %674 = vmatpush1.bf16.xpose.msra.mxu0 0
        %675 = vmatprep.subr.bf16.mxu0 0
        %676 = vmatpush1.bf16.xpose.msra.mxu0 0
        %677 = vmatprep.subr.bf16.mxu0 0
        %678 = vmatpush1.bf16.xpose.msra.mxu0 0
        %679 = vmatprep.subr.bf16.mxu0 0
        %680 = vmatpush1.bf16.xpose.msra.mxu0 0
        %681 = vmatprep.subr.bf16.mxu0 0
        %682 = vmatpush1.bf16.xpose.msra.mxu0 %v666
        %683 = vmatprep.subr.bf16.mxu0 0
        %684 = vmatpush1.bf16.xpose.msra.mxu0 %v665
        %685 = vmatprep.subr.bf16.mxu0 0
        %686 = vmatpush2.bf16.xpose.msra.mxu0 0
        %687 = vmatprep.subr.bf16.mxu0 0
        %688 = vmatpush2.bf16.xpose.msra.mxu0 0
        %689 = vmatprep.subr.bf16.mxu0 0
        %690 = vmatpush2.bf16.xpose.msra.mxu0 0
        %691 = vmatprep.subr.bf16.mxu0 0
        %692 = vmatpush2.bf16.xpose.msra.mxu0 0
        %693 = vmatprep.subr.bf16.mxu0 0
        %694 = vmatpush2.bf16.xpose.msra.mxu0 0
        %695 = vmatprep.subr.bf16.mxu0 0
        %696 = vmatpush2.bf16.xpose.msra.mxu0 0
        %697 = vmatprep.subr.bf16.mxu0 0
        %698 = vmatpush2.bf16.xpose.msra.mxu0 0
        %699 = vmatprep.subr.bf16.mxu0 0
        %700 = vmatpush2.bf16.xpose.msra.mxu0 0
        %701 = vmatprep.mubr.bf16.mxu0 0
        %702 = vmatmul.mubr.bf16.gmra.mxu0 %v653
        %v703 = vpop.f32.mrf.mxu0
        %v704 = vadd.f32 0.0, %v703
        %v705 = vpop.f32.mrf.mxu0
        %v706 = vpop.f32.mrf.mxu0
        %v707 = vadd.f32 0.0, %v706
        %v708 = vpop.f32.mrf.mxu0
        %709 = vmatprep.mubr.bf16.mxu0 0
        %710 = vmatmul.mubr.bf16.gmra.mxu0 %v654
        %v711 = vpop.f32.mrf.mxu0
        %v712 = vadd.f32 0.0, %v711
        %v713 = vpop.f32.mrf.mxu0
        %v714 = vpop.f32.mrf.mxu0
        %v715 = vadd.f32 0.0, %v714
        %v716 = vpop.f32.mrf.mxu0
        %717 = vdwg.mxu0
        // Predicated region
        $region164: #{self_attention_forward.3} parent=146 // pred_check
          %p718 = pneg %p519
        $region165: #{self_attention_forward.3} parent=146 // pred_check_branch
          %720 = sbr.rel (%p718) target = $region167
        $region166: #{self_attention_forward.3} parent=146 // pred_region
          %v721 = vlaneseq
          %v722 = vshrl.u32 %v721, 7
          %v723 = vadd.s32 %v722, 8
          %v724 = vadd.s32 %v722, 16
          %v725 = vadd.s32 %v722, 24
          %v726 = vstv %s512
          %v727 = vadd.s32 %v726, %v722
          %v728 = vadd.s32 %v726, %v723
          %v729 = vadd.s32 %v726, %v724
          %v730 = vadd.s32 %v726, %v725
          %v731 = vlaneseq
          %v732 = vand.u32 %v731, 127
          %v733 = vstv %s513
          %v734 = vadd.s32 %v733, %v732
          %vm735 = vcmp.ge.s32.totalorder %v727, %v734
          %vm736 = vcmp.ge.s32.totalorder %v728, %v734
          %vm737 = vcmp.ge.s32.totalorder %v729, %v734
          %vm738 = vcmp.ge.s32.totalorder %v730, %v734
          %v739 = vsel %vm735, 1, 0
          %v740 = vsel %vm736, 1, 0
          %v741 = vsel %vm737, 1, 0
          %v742 = vsel %vm738, 1, 0
          %vm743 = vcmp.eq.s32.totalorder %v739, 1
          %vm744 = vcmp.eq.s32.totalorder %v740, 1
          %vm745 = vcmp.eq.s32.totalorder %v741, 1
          %vm746 = vcmp.eq.s32.totalorder %v742, 1
          %v747 = vsel %vm743, %v631, -1e+30
          %v748 = vsel %vm744, %v634, -1e+30
          %v749 = vsel %vm745, %v639, -1e+30
          %v750 = vsel %vm746, %v642, -1e+30
          %v751 = vsel %vm743, %v704, -1e+30
          %v752 = vsel %vm744, %v707, -1e+30
          %v753 = vsel %vm745, %v712, -1e+30
          %v754 = vsel %vm746, %v715, -1e+30
          %v755 = vld [vmem:[#allocation2] sm:$0xff]
          %v756 = vld [vmem:[#allocation2 + $0x8] sm:$0xff]
          %v757 = vld [vmem:[#allocation2 + $0x10] sm:$0xff]
          %v758 = vld [vmem:[#allocation2 + $0x18] sm:$0xff]
          %v759 = vld [vmem:[#allocation2 + $0x20] sm:$0xff]
          %v760 = vld [vmem:[#allocation2 + $0x28] sm:$0xff]
          %v761 = vld [vmem:[#allocation2 + $0x30] sm:$0xff]
          %v762 = vld [vmem:[#allocation2 + $0x38] sm:$0xff]
          %vm763 = vcmask 261120
          %v764 = vsel %vm763, %v747, -inf
          %765 = vmax.xlane.f32.xlu0 %v764
          %v766 = vpop.xlane.xlu0 %765
          %v767 = vsel %vm763, %v748, -inf
          %768 = vmax.xlane.f32.xlu0 %v767
          %v769 = vpop.xlane.xlu0 %768
          %v770 = vsel %vm763, %v749, -inf
          %771 = vmax.xlane.f32.xlu0 %v770
          %v772 = vpop.xlane.xlu0 %771
          %v773 = vsel %vm763, %v750, -inf
          %774 = vmax.xlane.f32.xlu0 %v773
          %v775 = vpop.xlane.xlu0 %774
          %v776 = vsel %vm763, %v751, -inf
          %777 = vmax.xlane.f32.xlu0 %v776
          %v778 = vpop.xlane.xlu0 %777
          %v779 = vsel %vm763, %v752, -inf
          %780 = vmax.xlane.f32.xlu0 %v779
          %v781 = vpop.xlane.xlu0 %780
          %v782 = vsel %vm763, %v753, -inf
          %783 = vmax.xlane.f32.xlu0 %v782
          %v784 = vpop.xlane.xlu0 %783
          %v785 = vsel %vm763, %v754, -inf
          %786 = vmax.xlane.f32.xlu0 %v785
          %v787 = vpop.xlane.xlu0 %786
          %v788 = vmax.f32 %v755, %v766
          %v789 = vmax.f32 %v756, %v769
          %v790 = vmax.f32 %v757, %v772
          %v791 = vmax.f32 %v758, %v775
          %v792 = vmax.f32 %v759, %v778
          %v793 = vmax.f32 %v760, %v781
          %v794 = vmax.f32 %v761, %v784
          %v795 = vmax.f32 %v762, %v787
          %v796 = vsub.f32 %v755, %v788
          %v797 = vsub.f32 %v756, %v789
          %v798 = vsub.f32 %v757, %v790
          %v799 = vsub.f32 %v758, %v791
          %v800 = vsub.f32 %v759, %v792
          %v801 = vsub.f32 %v760, %v793
          %v802 = vsub.f32 %v761, %v794
          %v803 = vsub.f32 %v762, %v795
          %v804 = vmul.f32 %v796, 1.442695
          %v805 = vpow.pop %v804
          %v806 = vmul.f32 %v797, 1.442695
          %v807 = vpow.pop %v806
          %v808 = vmul.f32 %v798, 1.442695
          %v809 = vpow.pop %v808
          %v810 = vmul.f32 %v799, 1.442695
          %v811 = vpow.pop %v810
          %v812 = vmul.f32 %v800, 1.442695
          %v813 = vpow.pop %v812
          %v814 = vmul.f32 %v801, 1.442695
          %v815 = vpow.pop %v814
          %v816 = vmul.f32 %v802, 1.442695
          %v817 = vpow.pop %v816
          %v818 = vmul.f32 %v803, 1.442695
          %v819 = vpow.pop %v818
          %821 = vset.pattern.permute.xlu0 0
          %822 = vperm.xlu0 %821, %v788
          %v823 = vpop.permute.xlu0 %822
          %826 = vset.pattern.permute.xlu0 0
          %827 = vperm.xlu0 %826, %v789
          %v828 = vpop.permute.xlu0 %827
          %831 = vset.pattern.permute.xlu0 0
          %832 = vperm.xlu0 %831, %v790
          %v833 = vpop.permute.xlu0 %832
          %836 = vset.pattern.permute.xlu0 0
          %837 = vperm.xlu0 %836, %v791
          %v838 = vpop.permute.xlu0 %837
          %841 = vset.pattern.permute.xlu0 0
          %842 = vperm.xlu0 %841, %v792
          %v843 = vpop.permute.xlu0 %842
          %846 = vset.pattern.permute.xlu0 0
          %847 = vperm.xlu0 %846, %v793
          %v848 = vpop.permute.xlu0 %847
          %851 = vset.pattern.permute.xlu0 0
          %852 = vperm.xlu0 %851, %v794
          %v853 = vpop.permute.xlu0 %852
          %856 = vset.pattern.permute.xlu0 0
          %857 = vperm.xlu0 %856, %v795
          %v858 = vpop.permute.xlu0 %857
          %v860 = vsub.f32 %v747, %v823
          %v861 = vsub.f32 %v748, %v828
          %v862 = vsub.f32 %v749, %v833
          %v863 = vsub.f32 %v750, %v838
          %v864 = vsub.f32 %v751, %v843
          %v865 = vsub.f32 %v752, %v848
          %v866 = vsub.f32 %v753, %v853
          %v867 = vsub.f32 %v754, %v858
          %v868 = vmul.f32 %v860, 1.442695
          %v869 = vpow.pop %v868
          %v870 = vmul.f32 %v861, 1.442695
          %v871 = vpow.pop %v870
          %v872 = vmul.f32 %v862, 1.442695
          %v873 = vpow.pop %v872
          %v874 = vmul.f32 %v863, 1.442695
          %v875 = vpow.pop %v874
          %v876 = vmul.f32 %v864, 1.442695
          %v877 = vpow.pop %v876
          %v878 = vmul.f32 %v865, 1.442695
          %v879 = vpow.pop %v878
          %v880 = vmul.f32 %v866, 1.442695
          %v881 = vpow.pop %v880
          %v882 = vmul.f32 %v867, 1.442695
          %v883 = vpow.pop %v882
          %v884 = vld [vmem:[#allocation3] sm:$0xff]
          %v885 = vld [vmem:[#allocation3 + $0x8] sm:$0xff]
          %v886 = vld [vmem:[#allocation3 + $0x10] sm:$0xff]
          %v887 = vld [vmem:[#allocation3 + $0x18] sm:$0xff]
          %v888 = vld [vmem:[#allocation3 + $0x20] sm:$0xff]
          %v889 = vld [vmem:[#allocation3 + $0x28] sm:$0xff]
          %v890 = vld [vmem:[#allocation3 + $0x30] sm:$0xff]
          %v891 = vld [vmem:[#allocation3 + $0x38] sm:$0xff]
          %v892 = vmul.f32 %v805, %v884
          %v893 = vmul.f32 %v807, %v885
          %v894 = vmul.f32 %v809, %v886
          %v895 = vmul.f32 %v811, %v887
          %v896 = vmul.f32 %v813, %v888
          %v897 = vmul.f32 %v815, %v889
          %v898 = vmul.f32 %v817, %v890
          %v899 = vmul.f32 %v819, %v891
          %v900 = vsel %vm763, %v869, 0.0
          %901 = vadd.xlane.f32.xlu0 %v900
          %v902 = vpop.xlane.xlu0 %901
          %v903 = vsel %vm763, %v871, 0.0
          %904 = vadd.xlane.f32.xlu0 %v903
          %v905 = vpop.xlane.xlu0 %904
          %v906 = vsel %vm763, %v873, 0.0
          %907 = vadd.xlane.f32.xlu0 %v906
          %v908 = vpop.xlane.xlu0 %907
          %v909 = vsel %vm763, %v875, 0.0
          %910 = vadd.xlane.f32.xlu0 %v909
          %v911 = vpop.xlane.xlu0 %910
          %v912 = vsel %vm763, %v877, 0.0
          %913 = vadd.xlane.f32.xlu0 %v912
          %v914 = vpop.xlane.xlu0 %913
          %v915 = vsel %vm763, %v879, 0.0
          %916 = vadd.xlane.f32.xlu0 %v915
          %v917 = vpop.xlane.xlu0 %916
          %v918 = vsel %vm763, %v881, 0.0
          %919 = vadd.xlane.f32.xlu0 %v918
          %v920 = vpop.xlane.xlu0 %919
          %v921 = vsel %vm763, %v883, 0.0
          %922 = vadd.xlane.f32.xlu0 %v921
          %v923 = vpop.xlane.xlu0 %922
          %v924 = vadd.f32 %v892, %v902
          %v925 = vadd.f32 %v893, %v905
          %v926 = vadd.f32 %v894, %v908
          %v927 = vadd.f32 %v895, %v911
          %v928 = vadd.f32 %v896, %v914
          %v929 = vadd.f32 %v897, %v917
          %v930 = vadd.f32 %v898, %v920
          %v931 = vadd.f32 %v899, %v923
          %vm932 = vcmask 7168
          %933 = vst.msk [vmem:[#allocation3] sm:$0xff] %vm932, %v924
          %934 = vst.msk [vmem:[#allocation3 + $0x8] sm:$0xff] %vm932, %v925
          %935 = vst.msk [vmem:[#allocation3 + $0x10] sm:$0xff] %vm932, %v926
          %936 = vst.msk [vmem:[#allocation3 + $0x18] sm:$0xff] %vm932, %v927
          %937 = vst.msk [vmem:[#allocation3 + $0x20] sm:$0xff] %vm932, %v928
          %938 = vst.msk [vmem:[#allocation3 + $0x28] sm:$0xff] %vm932, %v929
          %939 = vst.msk [vmem:[#allocation3 + $0x30] sm:$0xff] %vm932, %v930
          %940 = vst.msk [vmem:[#allocation3 + $0x38] sm:$0xff] %vm932, %v931
          %v941 = vld [vmem:[#allocation4] sm:$0xff]
          %v942 = vld [vmem:[#allocation4 + $0x8] sm:$0xff]
          %v943 = vld [vmem:[#allocation4 + $0x10] sm:$0xff]
          %v944 = vld [vmem:[#allocation4 + $0x18] sm:$0xff]
          %v945 = vld [vmem:[#allocation4 + $0x20] sm:$0xff]
          %v946 = vld [vmem:[#allocation4 + $0x28] sm:$0xff]
          %v947 = vld [vmem:[#allocation4 + $0x30] sm:$0xff]
          %v948 = vld [vmem:[#allocation4 + $0x38] sm:$0xff]
          %950 = vset.pattern.permute.xlu0 0
          %951 = vperm.xlu0 %950, %v805
          %v952 = vpop.permute.xlu0 %951
          %955 = vset.pattern.permute.xlu0 0
          %956 = vperm.xlu0 %955, %v807
          %v957 = vpop.permute.xlu0 %956
          %960 = vset.pattern.permute.xlu0 0
          %961 = vperm.xlu0 %960, %v809
          %v962 = vpop.permute.xlu0 %961
          %965 = vset.pattern.permute.xlu0 0
          %966 = vperm.xlu0 %965, %v811
          %v967 = vpop.permute.xlu0 %966
          %970 = vset.pattern.permute.xlu0 0
          %971 = vperm.xlu0 %970, %v813
          %v972 = vpop.permute.xlu0 %971
          %975 = vset.pattern.permute.xlu0 0
          %976 = vperm.xlu0 %975, %v815
          %v977 = vpop.permute.xlu0 %976
          %980 = vset.pattern.permute.xlu0 0
          %981 = vperm.xlu0 %980, %v817
          %v982 = vpop.permute.xlu0 %981
          %985 = vset.pattern.permute.xlu0 0
          %986 = vperm.xlu0 %985, %v819
          %v987 = vpop.permute.xlu0 %986
          %v989 = vmul.f32 %v952, %v941
          %v990 = vmul.f32 %v957, %v942
          %v991 = vmul.f32 %v962, %v943
          %v992 = vmul.f32 %v967, %v944
          %v993 = vmul.f32 %v972, %v945
          %v994 = vmul.f32 %v977, %v946
          %v995 = vmul.f32 %v982, %v947
          %v996 = vmul.f32 %v987, %v948
          %v997 = vpack.c.bf16 %v871, %v869
          %v998 = vpack.c.bf16 %v875, %v873
          %v999 = vpack.c.bf16 %v879, %v877
          %v1000 = vpack.c.bf16 %v883, %v881
          %v1005 = vunpack.c.l.b16 %v564
          %v1006 = vunpack.c.l.b16 %v565
          %v1007 = vunpack.c.l.b16 %v566
          %v1008 = vunpack.c.l.b16 %v567
          %v1009 = vpack.c.b16 %v1006, %v1005
          %v1010 = vpack.c.b16 %v1008, %v1007
          %v1014 = vsel %vm763, %v997, 0
          %v1017 = vsel %vm763, %v998, 0
          %1019 = vmatprep.subr.bf16.mxu0 0
          %1020 = vmatpush1.bf16.msra.mxu0 0
          %1021 = vmatprep.subr.bf16.mxu0 0
          %1022 = vmatpush1.bf16.msra.mxu0 0
          %1023 = vmatprep.subr.bf16.mxu0 0
          %1024 = vmatpush1.bf16.msra.mxu0 0
          %1025 = vmatprep.subr.bf16.mxu0 0
          %1026 = vmatpush1.bf16.msra.mxu0 0
          %1027 = vmatprep.subr.bf16.mxu0 0
          %1028 = vmatpush1.bf16.msra.mxu0 0
          %1029 = vmatprep.subr.bf16.mxu0 0
          %1030 = vmatpush1.bf16.msra.mxu0 0
          %1031 = vmatprep.subr.bf16.mxu0 0
          %1032 = vmatpush1.bf16.msra.mxu0 %v1010
          %1033 = vmatprep.subr.bf16.mxu0 0
          %1034 = vmatpush1.bf16.msra.mxu0 %v1009
          %1035 = vmatprep.subr.bf16.mxu0 0
          %1036 = vmatpush2.bf16.msra.mxu0 0
          %1037 = vmatprep.subr.bf16.mxu0 0
          %1038 = vmatpush2.bf16.msra.mxu0 0
          %1039 = vmatprep.subr.bf16.mxu0 0
          %1040 = vmatpush2.bf16.msra.mxu0 0
          %1041 = vmatprep.subr.bf16.mxu0 0
          %1042 = vmatpush2.bf16.msra.mxu0 0
          %1043 = vmatprep.subr.bf16.mxu0 0
          %1044 = vmatpush2.bf16.msra.mxu0 0
          %1045 = vmatprep.subr.bf16.mxu0 0
          %1046 = vmatpush2.bf16.msra.mxu0 0
          %1047 = vmatprep.subr.bf16.mxu0 0
          %1048 = vmatpush2.bf16.msra.mxu0 0
          %1049 = vmatprep.subr.bf16.mxu0 0
          %1050 = vmatpush2.bf16.msra.mxu0 0
          %1051 = vmatprep.mubr.bf16.mxu0 0
          %1052 = vmatmul.mubr.bf16.gmra.mxu0 %v1014
          %v1053 = vpop.f32.mrf.mxu0
          %v1054 = vadd.f32 0.0, %v1053
          %v1055 = vpop.f32.mrf.mxu0
          %v1056 = vpop.f32.mrf.mxu0
          %v1057 = vadd.f32 0.0, %v1056
          %v1058 = vpop.f32.mrf.mxu0
          %1059 = vmatprep.mubr.bf16.mxu0 0
          %1060 = vmatmul.mubr.bf16.gmra.mxu0 %v1017
          %v1061 = vpop.f32.mrf.mxu0
          %v1062 = vadd.f32 0.0, %v1061
          %v1063 = vpop.f32.mrf.mxu0
          %v1064 = vpop.f32.mrf.mxu0
          %v1065 = vadd.f32 0.0, %v1064
          %v1066 = vpop.f32.mrf.mxu0
          %1067 = vdwg.mxu0
          %v1072 = vunpack.c.l.b16 %v568
          %v1073 = vunpack.c.l.b16 %v569
          %v1074 = vunpack.c.l.b16 %v570
          %v1075 = vunpack.c.l.b16 %v571
          %v1076 = vpack.c.b16 %v1073, %v1072
          %v1077 = vpack.c.b16 %v1075, %v1074
          %v1081 = vsel %vm763, %v999, 0
          %v1084 = vsel %vm763, %v1000, 0
          %1086 = vmatprep.subr.bf16.mxu0 0
          %1087 = vmatpush1.bf16.msra.mxu0 0
          %1088 = vmatprep.subr.bf16.mxu0 0
          %1089 = vmatpush1.bf16.msra.mxu0 0
          %1090 = vmatprep.subr.bf16.mxu0 0
          %1091 = vmatpush1.bf16.msra.mxu0 0
          %1092 = vmatprep.subr.bf16.mxu0 0
          %1093 = vmatpush1.bf16.msra.mxu0 0
          %1094 = vmatprep.subr.bf16.mxu0 0
          %1095 = vmatpush1.bf16.msra.mxu0 0
          %1096 = vmatprep.subr.bf16.mxu0 0
          %1097 = vmatpush1.bf16.msra.mxu0 0
          %1098 = vmatprep.subr.bf16.mxu0 0
          %1099 = vmatpush1.bf16.msra.mxu0 %v1077
          %1100 = vmatprep.subr.bf16.mxu0 0
          %1101 = vmatpush1.bf16.msra.mxu0 %v1076
          %1102 = vmatprep.subr.bf16.mxu0 0
          %1103 = vmatpush2.bf16.msra.mxu0 0
          %1104 = vmatprep.subr.bf16.mxu0 0
          %1105 = vmatpush2.bf16.msra.mxu0 0
          %1106 = vmatprep.subr.bf16.mxu0 0
          %1107 = vmatpush2.bf16.msra.mxu0 0
          %1108 = vmatprep.subr.bf16.mxu0 0
          %1109 = vmatpush2.bf16.msra.mxu0 0
          %1110 = vmatprep.subr.bf16.mxu0 0
          %1111 = vmatpush2.bf16.msra.mxu0 0
          %1112 = vmatprep.subr.bf16.mxu0 0
          %1113 = vmatpush2.bf16.msra.mxu0 0
          %1114 = vmatprep.subr.bf16.mxu0 0
          %1115 = vmatpush2.bf16.msra.mxu0 0
          %1116 = vmatprep.subr.bf16.mxu0 0
          %1117 = vmatpush2.bf16.msra.mxu0 0
          %1118 = vmatprep.mubr.bf16.mxu0 0
          %1119 = vmatmul.mubr.bf16.gmra.mxu0 %v1081
          %v1120 = vpop.f32.mrf.mxu0
          %v1121 = vadd.f32 0.0, %v1120
          %v1122 = vpop.f32.mrf.mxu0
          %v1123 = vpop.f32.mrf.mxu0
          %v1124 = vadd.f32 0.0, %v1123
          %v1125 = vpop.f32.mrf.mxu0
          %1126 = vmatprep.mubr.bf16.mxu0 0
          %1127 = vmatmul.mubr.bf16.gmra.mxu0 %v1084
          %v1128 = vpop.f32.mrf.mxu0
          %v1129 = vadd.f32 0.0, %v1128
          %v1130 = vpop.f32.mrf.mxu0
          %v1131 = vpop.f32.mrf.mxu0
          %v1132 = vadd.f32 0.0, %v1131
          %v1133 = vpop.f32.mrf.mxu0
          %1134 = vdwg.mxu0
          %v1135 = vadd.f32 %v989, %v1054
          %v1136 = vadd.f32 %v990, %v1057
          %v1137 = vadd.f32 %v991, %v1062
          %v1138 = vadd.f32 %v992, %v1065
          %v1139 = vadd.f32 %v993, %v1121
          %v1140 = vadd.f32 %v994, %v1124
          %v1141 = vadd.f32 %v995, %v1129
          %v1142 = vadd.f32 %v996, %v1132
          %1143 = vst [vmem:[#allocation4] sm:$0xff] %v1135
          %1144 = vst [vmem:[#allocation4 + $0x8] sm:$0xff] %v1136
          %1145 = vst [vmem:[#allocation4 + $0x10] sm:$0xff] %v1137
          %1146 = vst [vmem:[#allocation4 + $0x18] sm:$0xff] %v1138
          %1147 = vst [vmem:[#allocation4 + $0x20] sm:$0xff] %v1139
          %1148 = vst [vmem:[#allocation4 + $0x28] sm:$0xff] %v1140
          %1149 = vst [vmem:[#allocation4 + $0x30] sm:$0xff] %v1141
          %1150 = vst [vmem:[#allocation4 + $0x38] sm:$0xff] %v1142
          %1151 = vst.msk [vmem:[#allocation2] sm:$0xff] %vm932, %v788
          %1152 = vst.msk [vmem:[#allocation2 + $0x8] sm:$0xff] %vm932, %v789
          %1153 = vst.msk [vmem:[#allocation2 + $0x10] sm:$0xff] %vm932, %v790
          %1154 = vst.msk [vmem:[#allocation2 + $0x18] sm:$0xff] %vm932, %v791
          %1155 = vst.msk [vmem:[#allocation2 + $0x20] sm:$0xff] %vm932, %v792
          %1156 = vst.msk [vmem:[#allocation2 + $0x28] sm:$0xff] %vm932, %v793
          %1157 = vst.msk [vmem:[#allocation2 + $0x30] sm:$0xff] %vm932, %v794
          %1158 = vst.msk [vmem:[#allocation2 + $0x38] sm:$0xff] %vm932, %v795
        $region167: #{self_attention_forward.3} parent=146 // pred_fallthru
          _
        %p1159 = scmp.le.s32.totalorder %s518, %s512
        // Predicated region
        $region168: #{self_attention_forward.3} parent=146 // pred_check
          %p1160 = pneg %p1159
        $region169: #{self_attention_forward.3} parent=146 // pred_check_branch
          %1162 = sbr.rel (%p1160) target = $region171
        $region170: #{self_attention_forward.3} parent=146 // pred_region
          %v1163 = vld [vmem:[#allocation2] sm:$0xff]
          %v1164 = vld [vmem:[#allocation2 + $0x8] sm:$0xff]
          %v1165 = vld [vmem:[#allocation2 + $0x10] sm:$0xff]
          %v1166 = vld [vmem:[#allocation2 + $0x18] sm:$0xff]
          %v1167 = vld [vmem:[#allocation2 + $0x20] sm:$0xff]
          %v1168 = vld [vmem:[#allocation2 + $0x28] sm:$0xff]
          %v1169 = vld [vmem:[#allocation2 + $0x30] sm:$0xff]
          %v1170 = vld [vmem:[#allocation2 + $0x38] sm:$0xff]
          %vm1171 = vcmask 261120
          %v1172 = vsel %vm1171, %v631, -inf
          %1173 = vmax.xlane.f32.xlu0 %v1172
          %v1174 = vpop.xlane.xlu0 %1173
          %v1175 = vsel %vm1171, %v634, -inf
          %1176 = vmax.xlane.f32.xlu0 %v1175
          %v1177 = vpop.xlane.xlu0 %1176
          %v1178 = vsel %vm1171, %v639, -inf
          %1179 = vmax.xlane.f32.xlu0 %v1178
          %v1180 = vpop.xlane.xlu0 %1179
          %v1181 = vsel %vm1171, %v642, -inf
          %1182 = vmax.xlane.f32.xlu0 %v1181
          %v1183 = vpop.xlane.xlu0 %1182
          %v1184 = vsel %vm1171, %v704, -inf
          %1185 = vmax.xlane.f32.xlu0 %v1184
          %v1186 = vpop.xlane.xlu0 %1185
          %v1187 = vsel %vm1171, %v707, -inf
          %1188 = vmax.xlane.f32.xlu0 %v1187
          %v1189 = vpop.xlane.xlu0 %1188
          %v1190 = vsel %vm1171, %v712, -inf
          %1191 = vmax.xlane.f32.xlu0 %v1190
          %v1192 = vpop.xlane.xlu0 %1191
          %v1193 = vsel %vm1171, %v715, -inf
          %1194 = vmax.xlane.f32.xlu0 %v1193
          %v1195 = vpop.xlane.xlu0 %1194
          %v1196 = vmax.f32 %v1163, %v1174
          %v1197 = vmax.f32 %v1164, %v1177
          %v1198 = vmax.f32 %v1165, %v1180
          %v1199 = vmax.f32 %v1166, %v1183
          %v1200 = vmax.f32 %v1167, %v1186
          %v1201 = vmax.f32 %v1168, %v1189
          %v1202 = vmax.f32 %v1169, %v1192
          %v1203 = vmax.f32 %v1170, %v1195
          %v1204 = vsub.f32 %v1163, %v1196
          %v1205 = vsub.f32 %v1164, %v1197
          %v1206 = vsub.f32 %v1165, %v1198
          %v1207 = vsub.f32 %v1166, %v1199
          %v1208 = vsub.f32 %v1167, %v1200
          %v1209 = vsub.f32 %v1168, %v1201
          %v1210 = vsub.f32 %v1169, %v1202
          %v1211 = vsub.f32 %v1170, %v1203
          %v1212 = vmul.f32 %v1204, 1.442695
          %v1213 = vpow.pop %v1212
          %v1214 = vmul.f32 %v1205, 1.442695
          %v1215 = vpow.pop %v1214
          %v1216 = vmul.f32 %v1206, 1.442695
          %v1217 = vpow.pop %v1216
          %v1218 = vmul.f32 %v1207, 1.442695
          %v1219 = vpow.pop %v1218
          %v1220 = vmul.f32 %v1208, 1.442695
          %v1221 = vpow.pop %v1220
          %v1222 = vmul.f32 %v1209, 1.442695
          %v1223 = vpow.pop %v1222
          %v1224 = vmul.f32 %v1210, 1.442695
          %v1225 = vpow.pop %v1224
          %v1226 = vmul.f32 %v1211, 1.442695
          %v1227 = vpow.pop %v1226
          %1229 = vset.pattern.permute.xlu0 0
          %1230 = vperm.xlu0 %1229, %v1196
          %v1231 = vpop.permute.xlu0 %1230
          %1234 = vset.pattern.permute.xlu0 0
          %1235 = vperm.xlu0 %1234, %v1197
          %v1236 = vpop.permute.xlu0 %1235
          %1239 = vset.pattern.permute.xlu0 0
          %1240 = vperm.xlu0 %1239, %v1198
          %v1241 = vpop.permute.xlu0 %1240
          %1244 = vset.pattern.permute.xlu0 0
          %1245 = vperm.xlu0 %1244, %v1199
          %v1246 = vpop.permute.xlu0 %1245
          %1249 = vset.pattern.permute.xlu0 0
          %1250 = vperm.xlu0 %1249, %v1200
          %v1251 = vpop.permute.xlu0 %1250
          %1254 = vset.pattern.permute.xlu0 0
          %1255 = vperm.xlu0 %1254, %v1201
          %v1256 = vpop.permute.xlu0 %1255
          %1259 = vset.pattern.permute.xlu0 0
          %1260 = vperm.xlu0 %1259, %v1202
          %v1261 = vpop.permute.xlu0 %1260
          %1264 = vset.pattern.permute.xlu0 0
          %1265 = vperm.xlu0 %1264, %v1203
          %v1266 = vpop.permute.xlu0 %1265
          %v1268 = vsub.f32 %v631, %v1231
          %v1269 = vsub.f32 %v634, %v1236
          %v1270 = vsub.f32 %v639, %v1241
          %v1271 = vsub.f32 %v642, %v1246
          %v1272 = vsub.f32 %v704, %v1251
          %v1273 = vsub.f32 %v707, %v1256
          %v1274 = vsub.f32 %v712, %v1261
          %v1275 = vsub.f32 %v715, %v1266
          %v1276 = vmul.f32 %v1268, 1.442695
          %v1277 = vpow.pop %v1276
          %v1278 = vmul.f32 %v1269, 1.442695
          %v1279 = vpow.pop %v1278
          %v1280 = vmul.f32 %v1270, 1.442695
          %v1281 = vpow.pop %v1280
          %v1282 = vmul.f32 %v1271, 1.442695
          %v1283 = vpow.pop %v1282
          %v1284 = vmul.f32 %v1272, 1.442695
          %v1285 = vpow.pop %v1284
          %v1286 = vmul.f32 %v1273, 1.442695
          %v1287 = vpow.pop %v1286
          %v1288 = vmul.f32 %v1274, 1.442695
          %v1289 = vpow.pop %v1288
          %v1290 = vmul.f32 %v1275, 1.442695
          %v1291 = vpow.pop %v1290
          %v1292 = vld [vmem:[#allocation3] sm:$0xff]
          %v1293 = vld [vmem:[#allocation3 + $0x8] sm:$0xff]
          %v1294 = vld [vmem:[#allocation3 + $0x10] sm:$0xff]
          %v1295 = vld [vmem:[#allocation3 + $0x18] sm:$0xff]
          %v1296 = vld [vmem:[#allocation3 + $0x20] sm:$0xff]
          %v1297 = vld [vmem:[#allocation3 + $0x28] sm:$0xff]
          %v1298 = vld [vmem:[#allocation3 + $0x30] sm:$0xff]
          %v1299 = vld [vmem:[#allocation3 + $0x38] sm:$0xff]
          %v1300 = vmul.f32 %v1213, %v1292
          %v1301 = vmul.f32 %v1215, %v1293
          %v1302 = vmul.f32 %v1217, %v1294
          %v1303 = vmul.f32 %v1219, %v1295
          %v1304 = vmul.f32 %v1221, %v1296
          %v1305 = vmul.f32 %v1223, %v1297
          %v1306 = vmul.f32 %v1225, %v1298
          %v1307 = vmul.f32 %v1227, %v1299
          %v1308 = vsel %vm1171, %v1277, 0.0
          %1309 = vadd.xlane.f32.xlu0 %v1308
          %v1310 = vpop.xlane.xlu0 %1309
          %v1311 = vsel %vm1171, %v1279, 0.0
          %1312 = vadd.xlane.f32.xlu0 %v1311
          %v1313 = vpop.xlane.xlu0 %1312
          %v1314 = vsel %vm1171, %v1281, 0.0
          %1315 = vadd.xlane.f32.xlu0 %v1314
          %v1316 = vpop.xlane.xlu0 %1315
          %v1317 = vsel %vm1171, %v1283, 0.0
          %1318 = vadd.xlane.f32.xlu0 %v1317
          %v1319 = vpop.xlane.xlu0 %1318
          %v1320 = vsel %vm1171, %v1285, 0.0
          %1321 = vadd.xlane.f32.xlu0 %v1320
          %v1322 = vpop.xlane.xlu0 %1321
          %v1323 = vsel %vm1171, %v1287, 0.0
          %1324 = vadd.xlane.f32.xlu0 %v1323
          %v1325 = vpop.xlane.xlu0 %1324
          %v1326 = vsel %vm1171, %v1289, 0.0
          %1327 = vadd.xlane.f32.xlu0 %v1326
          %v1328 = vpop.xlane.xlu0 %1327
          %v1329 = vsel %vm1171, %v1291, 0.0
          %1330 = vadd.xlane.f32.xlu0 %v1329
          %v1331 = vpop.xlane.xlu0 %1330
          %v1332 = vadd.f32 %v1300, %v1310
          %v1333 = vadd.f32 %v1301, %v1313
          %v1334 = vadd.f32 %v1302, %v1316
          %v1335 = vadd.f32 %v1303, %v1319
          %v1336 = vadd.f32 %v1304, %v1322
          %v1337 = vadd.f32 %v1305, %v1325
          %v1338 = vadd.f32 %v1306, %v1328
          %v1339 = vadd.f32 %v1307, %v1331
          %vm1340 = vcmask 7168
          %1341 = vst.msk [vmem:[#allocation3] sm:$0xff] %vm1340, %v1332
          %1342 = vst.msk [vmem:[#allocation3 + $0x8] sm:$0xff] %vm1340, %v1333
          %1343 = vst.msk [vmem:[#allocation3 + $0x10] sm:$0xff] %vm1340, %v1334
          %1344 = vst.msk [vmem:[#allocation3 + $0x18] sm:$0xff] %vm1340, %v1335
          %1345 = vst.msk [vmem:[#allocation3 + $0x20] sm:$0xff] %vm1340, %v1336
          %1346 = vst.msk [vmem:[#allocation3 + $0x28] sm:$0xff] %vm1340, %v1337
          %1347 = vst.msk [vmem:[#allocation3 + $0x30] sm:$0xff] %vm1340, %v1338
          %1348 = vst.msk [vmem:[#allocation3 + $0x38] sm:$0xff] %vm1340, %v1339
          %v1349 = vld [vmem:[#allocation4] sm:$0xff]
          %v1350 = vld [vmem:[#allocation4 + $0x8] sm:$0xff]
          %v1351 = vld [vmem:[#allocation4 + $0x10] sm:$0xff]
          %v1352 = vld [vmem:[#allocation4 + $0x18] sm:$0xff]
          %v1353 = vld [vmem:[#allocation4 + $0x20] sm:$0xff]
          %v1354 = vld [vmem:[#allocation4 + $0x28] sm:$0xff]
          %v1355 = vld [vmem:[#allocation4 + $0x30] sm:$0xff]
          %v1356 = vld [vmem:[#allocation4 + $0x38] sm:$0xff]
          %1358 = vset.pattern.permute.xlu0 0
          %1359 = vperm.xlu0 %1358, %v1213
          %v1360 = vpop.permute.xlu0 %1359
          %1363 = vset.pattern.permute.xlu0 0
          %1364 = vperm.xlu0 %1363, %v1215
          %v1365 = vpop.permute.xlu0 %1364
          %1368 = vset.pattern.permute.xlu0 0
          %1369 = vperm.xlu0 %1368, %v1217
          %v1370 = vpop.permute.xlu0 %1369
          %1373 = vset.pattern.permute.xlu0 0
          %1374 = vperm.xlu0 %1373, %v1219
          %v1375 = vpop.permute.xlu0 %1374
          %1378 = vset.pattern.permute.xlu0 0
          %1379 = vperm.xlu0 %1378, %v1221
          %v1380 = vpop.permute.xlu0 %1379
          %1383 = vset.pattern.permute.xlu0 0
          %1384 = vperm.xlu0 %1383, %v1223
          %v1385 = vpop.permute.xlu0 %1384
          %1388 = vset.pattern.permute.xlu0 0
          %1389 = vperm.xlu0 %1388, %v1225
          %v1390 = vpop.permute.xlu0 %1389
          %1393 = vset.pattern.permute.xlu0 0
          %1394 = vperm.xlu0 %1393, %v1227
          %v1395 = vpop.permute.xlu0 %1394
          %v1397 = vmul.f32 %v1360, %v1349
          %v1398 = vmul.f32 %v1365, %v1350
          %v1399 = vmul.f32 %v1370, %v1351
          %v1400 = vmul.f32 %v1375, %v1352
          %v1401 = vmul.f32 %v1380, %v1353
          %v1402 = vmul.f32 %v1385, %v1354
          %v1403 = vmul.f32 %v1390, %v1355
          %v1404 = vmul.f32 %v1395, %v1356
          %v1405 = vpack.c.bf16 %v1279, %v1277
          %v1406 = vpack.c.bf16 %v1283, %v1281
          %v1407 = vpack.c.bf16 %v1287, %v1285
          %v1408 = vpack.c.bf16 %v1291, %v1289
          %v1413 = vunpack.c.l.b16 %v564
          %v1414 = vunpack.c.l.b16 %v565
          %v1415 = vunpack.c.l.b16 %v566
          %v1416 = vunpack.c.l.b16 %v567
          %v1417 = vpack.c.b16 %v1414, %v1413
          %v1418 = vpack.c.b16 %v1416, %v1415
          %v1422 = vsel %vm1171, %v1405, 0
          %v1425 = vsel %vm1171, %v1406, 0
          %1427 = vmatprep.subr.bf16.mxu0 0
          %1428 = vmatpush1.bf16.msra.mxu0 0
          %1429 = vmatprep.subr.bf16.mxu0 0
          %1430 = vmatpush1.bf16.msra.mxu0 0
          %1431 = vmatprep.subr.bf16.mxu0 0
          %1432 = vmatpush1.bf16.msra.mxu0 0
          %1433 = vmatprep.subr.bf16.mxu0 0
          %1434 = vmatpush1.bf16.msra.mxu0 0
          %1435 = vmatprep.subr.bf16.mxu0 0
          %1436 = vmatpush1.bf16.msra.mxu0 0
          %1437 = vmatprep.subr.bf16.mxu0 0
          %1438 = vmatpush1.bf16.msra.mxu0 0
          %1439 = vmatprep.subr.bf16.mxu0 0
          %1440 = vmatpush1.bf16.msra.mxu0 %v1418
          %1441 = vmatprep.subr.bf16.mxu0 0
          %1442 = vmatpush1.bf16.msra.mxu0 %v1417
          %1443 = vmatprep.subr.bf16.mxu0 0
          %1444 = vmatpush2.bf16.msra.mxu0 0
          %1445 = vmatprep.subr.bf16.mxu0 0
          %1446 = vmatpush2.bf16.msra.mxu0 0
          %1447 = vmatprep.subr.bf16.mxu0 0
          %1448 = vmatpush2.bf16.msra.mxu0 0
          %1449 = vmatprep.subr.bf16.mxu0 0
          %1450 = vmatpush2.bf16.msra.mxu0 0
          %1451 = vmatprep.subr.bf16.mxu0 0
          %1452 = vmatpush2.bf16.msra.mxu0 0
          %1453 = vmatprep.subr.bf16.mxu0 0
          %1454 = vmatpush2.bf16.msra.mxu0 0
          %1455 = vmatprep.subr.bf16.mxu0 0
          %1456 = vmatpush2.bf16.msra.mxu0 0
          %1457 = vmatprep.subr.bf16.mxu0 0
          %1458 = vmatpush2.bf16.msra.mxu0 0
          %1459 = vmatprep.mubr.bf16.mxu0 0
          %1460 = vmatmul.mubr.bf16.gmra.mxu0 %v1422
          %v1461 = vpop.f32.mrf.mxu0
          %v1462 = vadd.f32 0.0, %v1461
          %v1463 = vpop.f32.mrf.mxu0
          %v1464 = vpop.f32.mrf.mxu0
          %v1465 = vadd.f32 0.0, %v1464
          %v1466 = vpop.f32.mrf.mxu0
          %1467 = vmatprep.mubr.bf16.mxu0 0
          %1468 = vmatmul.mubr.bf16.gmra.mxu0 %v1425
          %v1469 = vpop.f32.mrf.mxu0
          %v1470 = vadd.f32 0.0, %v1469
          %v1471 = vpop.f32.mrf.mxu0
          %v1472 = vpop.f32.mrf.mxu0
          %v1473 = vadd.f32 0.0, %v1472
          %v1474 = vpop.f32.mrf.mxu0
          %1475 = vdwg.mxu0
          %v1480 = vunpack.c.l.b16 %v568
          %v1481 = vunpack.c.l.b16 %v569
          %v1482 = vunpack.c.l.b16 %v570
          %v1483 = vunpack.c.l.b16 %v571
          %v1484 = vpack.c.b16 %v1481, %v1480
          %v1485 = vpack.c.b16 %v1483, %v1482
          %v1489 = vsel %vm1171, %v1407, 0
          %v1492 = vsel %vm1171, %v1408, 0
          %1494 = vmatprep.subr.bf16.mxu0 0
          %1495 = vmatpush1.bf16.msra.mxu0 0
          %1496 = vmatprep.subr.bf16.mxu0 0
          %1497 = vmatpush1.bf16.msra.mxu0 0
          %1498 = vmatprep.subr.bf16.mxu0 0
          %1499 = vmatpush1.bf16.msra.mxu0 0
          %1500 = vmatprep.subr.bf16.mxu0 0
          %1501 = vmatpush1.bf16.msra.mxu0 0
          %1502 = vmatprep.subr.bf16.mxu0 0
          %1503 = vmatpush1.bf16.msra.mxu0 0
          %1504 = vmatprep.subr.bf16.mxu0 0
          %1505 = vmatpush1.bf16.msra.mxu0 0
          %1506 = vmatprep.subr.bf16.mxu0 0
          %1507 = vmatpush1.bf16.msra.mxu0 %v1485
          %1508 = vmatprep.subr.bf16.mxu0 0
          %1509 = vmatpush1.bf16.msra.mxu0 %v1484
          %1510 = vmatprep.subr.bf16.mxu0 0
          %1511 = vmatpush2.bf16.msra.mxu0 0
          %1512 = vmatprep.subr.bf16.mxu0 0
          %1513 = vmatpush2.bf16.msra.mxu0 0
          %1514 = vmatprep.subr.bf16.mxu0 0
          %1515 = vmatpush2.bf16.msra.mxu0 0
          %1516 = vmatprep.subr.bf16.mxu0 0
          %1517 = vmatpush2.bf16.msra.mxu0 0
          %1518 = vmatprep.subr.bf16.mxu0 0
          %1519 = vmatpush2.bf16.msra.mxu0 0
          %1520 = vmatprep.subr.bf16.mxu0 0
          %1521 = vmatpush2.bf16.msra.mxu0 0
          %1522 = vmatprep.subr.bf16.mxu0 0
          %1523 = vmatpush2.bf16.msra.mxu0 0
          %1524 = vmatprep.subr.bf16.mxu0 0
          %1525 = vmatpush2.bf16.msra.mxu0 0
          %1526 = vmatprep.mubr.bf16.mxu0 0
          %1527 = vmatmul.mubr.bf16.gmra.mxu0 %v1489
          %v1528 = vpop.f32.mrf.mxu0
          %v1529 = vadd.f32 0.0, %v1528
          %v1530 = vpop.f32.mrf.mxu0
          %v1531 = vpop.f32.mrf.mxu0
          %v1532 = vadd.f32 0.0, %v1531
          %v1533 = vpop.f32.mrf.mxu0
          %1534 = vmatprep.mubr.bf16.mxu0 0
          %1535 = vmatmul.mubr.bf16.gmra.mxu0 %v1492
          %v1536 = vpop.f32.mrf.mxu0
          %v1537 = vadd.f32 0.0, %v1536
          %v1538 = vpop.f32.mrf.mxu0
          %v1539 = vpop.f32.mrf.mxu0
          %v1540 = vadd.f32 0.0, %v1539
          %v1541 = vpop.f32.mrf.mxu0
          %1542 = vdwg.mxu0
          %v1543 = vadd.f32 %v1397, %v1462
          %v1544 = vadd.f32 %v1398, %v1465
          %v1545 = vadd.f32 %v1399, %v1470
          %v1546 = vadd.f32 %v1400, %v1473
          %v1547 = vadd.f32 %v1401, %v1529
          %v1548 = vadd.f32 %v1402, %v1532
          %v1549 = vadd.f32 %v1403, %v1537
          %v1550 = vadd.f32 %v1404, %v1540
          %1551 = vst [vmem:[#allocation4] sm:$0xff] %v1543
          %1552 = vst [vmem:[#allocation4 + $0x8] sm:$0xff] %v1544
          %1553 = vst [vmem:[#allocation4 + $0x10] sm:$0xff] %v1545
          %1554 = vst [vmem:[#allocation4 + $0x18] sm:$0xff] %v1546
          %1555 = vst [vmem:[#allocation4 + $0x20] sm:$0xff] %v1547
          %1556 = vst [vmem:[#allocation4 + $0x28] sm:$0xff] %v1548
          %1557 = vst [vmem:[#allocation4 + $0x30] sm:$0xff] %v1549
          %1558 = vst [vmem:[#allocation4 + $0x38] sm:$0xff] %v1550
          %1559 = vst.msk [vmem:[#allocation2] sm:$0xff] %vm1340, %v1196
          %1560 = vst.msk [vmem:[#allocation2 + $0x8] sm:$0xff] %vm1340, %v1197
          %1561 = vst.msk [vmem:[#allocation2 + $0x10] sm:$0xff] %vm1340, %v1198
          %1562 = vst.msk [vmem:[#allocation2 + $0x18] sm:$0xff] %vm1340, %v1199
          %1563 = vst.msk [vmem:[#allocation2 + $0x20] sm:$0xff] %vm1340, %v1200
          %1564 = vst.msk [vmem:[#allocation2 + $0x28] sm:$0xff] %vm1340, %v1201
          %1565 = vst.msk [vmem:[#allocation2 + $0x30] sm:$0xff] %vm1340, %v1202
          %1566 = vst.msk [vmem:[#allocation2 + $0x38] sm:$0xff] %vm1340, %v1203
        $region171: #{self_attention_forward.3} parent=146 // pred_fallthru
          _
        // Predicated region
        $region172: #{self_attention_forward.3} parent=146 // pred_check
          %p1567 = pneg %p517
        $region173: #{self_attention_forward.3} parent=146 // pred_check_branch
          %1569 = sbr.rel (%p1567) target = $region175
        $region174: #{self_attention_forward.3} parent=146 // pred_region
          %v1570 = vld [vmem:[#allocation4] sm:$0xff]
          %v1571 = vld [vmem:[#allocation4 + $0x8] sm:$0xff]
          %v1572 = vld [vmem:[#allocation4 + $0x10] sm:$0xff]
          %v1573 = vld [vmem:[#allocation4 + $0x18] sm:$0xff]
          %v1574 = vld [vmem:[#allocation4 + $0x20] sm:$0xff]
          %v1575 = vld [vmem:[#allocation4 + $0x28] sm:$0xff]
          %v1576 = vld [vmem:[#allocation4 + $0x30] sm:$0xff]
          %v1577 = vld [vmem:[#allocation4 + $0x38] sm:$0xff]
          %v1578 = vld [vmem:[#allocation3] sm:$0xff]
          %v1579 = vld [vmem:[#allocation3 + $0x8] sm:$0xff]
          %v1580 = vld [vmem:[#allocation3 + $0x10] sm:$0xff]
          %v1581 = vld [vmem:[#allocation3 + $0x18] sm:$0xff]
          %v1582 = vld [vmem:[#allocation3 + $0x20] sm:$0xff]
          %v1583 = vld [vmem:[#allocation3 + $0x28] sm:$0xff]
          %v1584 = vld [vmem:[#allocation3 + $0x30] sm:$0xff]
          %v1585 = vld [vmem:[#allocation3 + $0x38] sm:$0xff]
          %v1586 = vrcp.pop %v1578
          %v1587 = vrcp.pop %v1579
          %v1588 = vrcp.pop %v1580
          %v1589 = vrcp.pop %v1581
          %v1590 = vrcp.pop %v1582
          %v1591 = vrcp.pop %v1583
          %v1592 = vrcp.pop %v1584
          %v1593 = vrcp.pop %v1585
          %1595 = vset.pattern.permute.xlu0 0
          %1596 = vperm.xlu0 %1595, %v1586
          %v1597 = vpop.permute.xlu0 %1596
          %1600 = vset.pattern.permute.xlu0 0
          %1601 = vperm.xlu0 %1600, %v1587
          %v1602 = vpop.permute.xlu0 %1601
          %1605 = vset.pattern.permute.xlu0 0
          %1606 = vperm.xlu0 %1605, %v1588
          %v1607 = vpop.permute.xlu0 %1606
          %1610 = vset.pattern.permute.xlu0 0
          %1611 = vperm.xlu0 %1610, %v1589
          %v1612 = vpop.permute.xlu0 %1611
          %1615 = vset.pattern.permute.xlu0 0
          %1616 = vperm.xlu0 %1615, %v1590
          %v1617 = vpop.permute.xlu0 %1616
          %1620 = vset.pattern.permute.xlu0 0
          %1621 = vperm.xlu0 %1620, %v1591
          %v1622 = vpop.permute.xlu0 %1621
          %1625 = vset.pattern.permute.xlu0 0
          %1626 = vperm.xlu0 %1625, %v1592
          %v1627 = vpop.permute.xlu0 %1626
          %1630 = vset.pattern.permute.xlu0 0
          %1631 = vperm.xlu0 %1630, %v1593
          %v1632 = vpop.permute.xlu0 %1631
          %v1634 = vmul.f32 %v1570, %v1597
          %v1635 = vmul.f32 %v1571, %v1602
          %v1636 = vmul.f32 %v1572, %v1607
          %v1637 = vmul.f32 %v1573, %v1612
          %v1638 = vmul.f32 %v1574, %v1617
          %v1639 = vmul.f32 %v1575, %v1622
          %v1640 = vmul.f32 %v1576, %v1627
          %v1641 = vmul.f32 %v1577, %v1632
          %v1642 = vpack.c.bf16 %v1635, %v1634
          %v1643 = vpack.c.bf16 %v1637, %v1636
          %v1644 = vpack.c.bf16 %v1639, %v1638
          %v1645 = vpack.c.bf16 %v1641, %v1640
          %v1648 = vpack.i.b16 %v1644, %v1642
          %v1650 = vshrl.u32 %v1642, 16
          %v1651 = vshrl.u32 %v1644, 16
          %v1652 = vpack.i.b16 %v1651, %v1650
          %v1655 = vpack.i.b16 0, 0
          %v1657 = vshrl.u32 0, 16
          %v1658 = vpack.i.b16 %v1657, %v1657
          %v1662 = vpack.i.b16 %v1645, %v1643
          %v1664 = vshrl.u32 %v1643, 16
          %v1665 = vshrl.u32 %v1645, 16
          %v1666 = vpack.i.b16 %v1665, %v1664
          %v1668 = vcombine.high %v1648, %v1655
          %v1670 = vunpack.c.l.s4 1983009808
          %v1671 = vunpack.c.0.s8 %v1670
          %v1672 = vlaneseq
          %v1673 = vshrl.u32 %v1672, 7
          %v1674 = vsub.s32 %v1671, %v1673
          %v1675 = vrot.slane %v1648, %v1674
          %v1677 = vunpack.c.l.s4 1983009808
          %v1678 = vunpack.c.0.s8 %v1677
          %v1679 = vlaneseq
          %v1680 = vshrl.u32 %v1679, 7
          %v1681 = vsub.s32 %v1678, %v1680
          %v1682 = vrot.slane %v1668, %v1681
          %v1683 = vcombine.high %v1675, 0
          %v1685 = vunpack.c.l.s4 1934713408
          %v1686 = vunpack.c.0.s8 %v1685
          %v1687 = vlaneseq
          %v1688 = vshrl.u32 %v1687, 7
          %v1689 = vsub.s32 %v1686, %v1688
          %v1690 = vrot.slane %v1675, %v1689
          %v1692 = vunpack.c.l.s4 1934713408
          %v1693 = vunpack.c.0.s8 %v1692
          %v1694 = vlaneseq
          %v1695 = vshrl.u32 %v1694, 7
          %v1696 = vsub.s32 %v1693, %v1695
          %v1697 = vrot.slane %v1683, %v1696
          %v1698 = vcombine.high %v1682, 0
          %v1700 = vunpack.c.l.s4 1934713408
          %v1701 = vunpack.c.0.s8 %v1700
          %v1702 = vlaneseq
          %v1703 = vshrl.u32 %v1702, 7
          %v1704 = vsub.s32 %v1701, %v1703
          %v1705 = vrot.slane %v1682, %v1704
          %v1707 = vunpack.c.l.s4 1934713408
          %v1708 = vunpack.c.0.s8 %v1707
          %v1709 = vlaneseq
          %v1710 = vshrl.u32 %v1709, 7
          %v1711 = vsub.s32 %v1708, %v1710
          %v1712 = vrot.slane %v1698, %v1711
          %v1713 = vcombine.high %v1690, 0
          %v1714 = vcombine.high %v1697, 0
          %v1715 = vcombine.high %v1705, 0
          %v1716 = vcombine.high %v1712, 0
          %v1717 = vcombine.high %v1652, %v1658
          %v1719 = vunpack.c.l.s4 1983009808
          %v1720 = vunpack.c.0.s8 %v1719
          %v1721 = vlaneseq
          %v1722 = vshrl.u32 %v1721, 7
          %v1723 = vsub.s32 %v1720, %v1722
          %v1724 = vrot.slane %v1652, %v1723
          %v1726 = vunpack.c.l.s4 1983009808
          %v1727 = vunpack.c.0.s8 %v1726
          %v1728 = vlaneseq
          %v1729 = vshrl.u32 %v1728, 7
          %v1730 = vsub.s32 %v1727, %v1729
          %v1731 = vrot.slane %v1717, %v1730
          %v1732 = vcombine.high %v1724, 0
          %v1734 = vunpack.c.l.s4 1934713408
          %v1735 = vunpack.c.0.s8 %v1734
          %v1736 = vlaneseq
          %v1737 = vshrl.u32 %v1736, 7
          %v1738 = vsub.s32 %v1735, %v1737
          %v1739 = vrot.slane %v1724, %v1738
          %v1741 = vunpack.c.l.s4 1934713408
          %v1742 = vunpack.c.0.s8 %v1741
          %v1743 = vlaneseq
          %v1744 = vshrl.u32 %v1743, 7
          %v1745 = vsub.s32 %v1742, %v1744
          %v1746 = vrot.slane %v1732, %v1745
          %v1747 = vcombine.high %v1731, 0
          %v1749 = vunpack.c.l.s4 1934713408
          %v1750 = vunpack.c.0.s8 %v1749
          %v1751 = vlaneseq
          %v1752 = vshrl.u32 %v1751, 7
          %v1753 = vsub.s32 %v1750, %v1752
          %v1754 = vrot.slane %v1731, %v1753
          %v1756 = vunpack.c.l.s4 1934713408
          %v1757 = vunpack.c.0.s8 %v1756
          %v1758 = vlaneseq
          %v1759 = vshrl.u32 %v1758, 7
          %v1760 = vsub.s32 %v1757, %v1759
          %v1761 = vrot.slane %v1747, %v1760
          %v1762 = vcombine.high %v1739, 0
          %v1763 = vcombine.high %v1746, 0
          %v1764 = vcombine.high %v1754, 0
          %v1765 = vcombine.high %v1761, 0
          %v1766 = vcombine.high %v1662, %v1655
          %v1768 = vunpack.c.l.s4 1983009808
          %v1769 = vunpack.c.0.s8 %v1768
          %v1770 = vlaneseq
          %v1771 = vshrl.u32 %v1770, 7
          %v1772 = vsub.s32 %v1769, %v1771
          %v1773 = vrot.slane %v1662, %v1772
          %v1775 = vunpack.c.l.s4 1983009808
          %v1776 = vunpack.c.0.s8 %v1775
          %v1777 = vlaneseq
          %v1778 = vshrl.u32 %v1777, 7
          %v1779 = vsub.s32 %v1776, %v1778
          %v1780 = vrot.slane %v1766, %v1779
          %v1781 = vcombine.high %v1773, 0
          %v1783 = vunpack.c.l.s4 1934713408
          %v1784 = vunpack.c.0.s8 %v1783
          %v1785 = vlaneseq
          %v1786 = vshrl.u32 %v1785, 7
          %v1787 = vsub.s32 %v1784, %v1786
          %v1788 = vrot.slane %v1773, %v1787
          %v1790 = vunpack.c.l.s4 1934713408
          %v1791 = vunpack.c.0.s8 %v1790
          %v1792 = vlaneseq
          %v1793 = vshrl.u32 %v1792, 7
          %v1794 = vsub.s32 %v1791, %v1793
          %v1795 = vrot.slane %v1781, %v1794
          %v1796 = vcombine.high %v1780, 0
          %v1798 = vunpack.c.l.s4 1934713408
          %v1799 = vunpack.c.0.s8 %v1798
          %v1800 = vlaneseq
          %v1801 = vshrl.u32 %v1800, 7
          %v1802 = vsub.s32 %v1799, %v1801
          %v1803 = vrot.slane %v1780, %v1802
          %v1805 = vunpack.c.l.s4 1934713408
          %v1806 = vunpack.c.0.s8 %v1805
          %v1807 = vlaneseq
          %v1808 = vshrl.u32 %v1807, 7
          %v1809 = vsub.s32 %v1806, %v1808
          %v1810 = vrot.slane %v1796, %v1809
          %v1811 = vcombine.high %v1788, 0
          %v1812 = vcombine.high %v1795, 0
          %v1813 = vcombine.high %v1803, 0
          %v1814 = vcombine.high %v1810, 0
          %v1815 = vcombine.high %v1666, %v1658
          %v1817 = vunpack.c.l.s4 1983009808
          %v1818 = vunpack.c.0.s8 %v1817
          %v1819 = vlaneseq
          %v1820 = vshrl.u32 %v1819, 7
          %v1821 = vsub.s32 %v1818, %v1820
          %v1822 = vrot.slane %v1666, %v1821
          %v1824 = vunpack.c.l.s4 1983009808
          %v1825 = vunpack.c.0.s8 %v1824
          %v1826 = vlaneseq
          %v1827 = vshrl.u32 %v1826, 7
          %v1828 = vsub.s32 %v1825, %v1827
          %v1829 = vrot.slane %v1815, %v1828
          %v1830 = vcombine.high %v1822, 0
          %v1832 = vunpack.c.l.s4 1934713408
          %v1833 = vunpack.c.0.s8 %v1832
          %v1834 = vlaneseq
          %v1835 = vshrl.u32 %v1834, 7
          %v1836 = vsub.s32 %v1833, %v1835
          %v1837 = vrot.slane %v1822, %v1836
          %v1839 = vunpack.c.l.s4 1934713408
          %v1840 = vunpack.c.0.s8 %v1839
          %v1841 = vlaneseq
          %v1842 = vshrl.u32 %v1841, 7
          %v1843 = vsub.s32 %v1840, %v1842
          %v1844 = vrot.slane %v1830, %v1843
          %v1845 = vcombine.high %v1829, 0
          %v1847 = vunpack.c.l.s4 1934713408
          %v1848 = vunpack.c.0.s8 %v1847
          %v1849 = vlaneseq
          %v1850 = vshrl.u32 %v1849, 7
          %v1851 = vsub.s32 %v1848, %v1850
          %v1852 = vrot.slane %v1829, %v1851
          %v1854 = vunpack.c.l.s4 1934713408
          %v1855 = vunpack.c.0.s8 %v1854
          %v1856 = vlaneseq
          %v1857 = vshrl.u32 %v1856, 7
          %v1858 = vsub.s32 %v1855, %v1857
          %v1859 = vrot.slane %v1845, %v1858
          %v1860 = vcombine.high %v1837, 0
          %v1861 = vcombine.high %v1844, 0
          %v1862 = vcombine.high %v1852, 0
          %v1863 = vcombine.high %v1859, 0
          %v1864 = vcombine.low %v1690, %v1697
          %v1866 = vunpack.c.l.s4 1983009808
          %v1867 = vunpack.c.0.s8 %v1866
          %v1868 = vlaneseq
          %v1869 = vshrl.u32 %v1868, 7
          %v1870 = vsub.s32 %v1867, %v1869
          %v1871 = vrot.slane %v1864, %v1870
          %v1872 = vcombine.low %v1713, %v1714
          %v1874 = vunpack.c.l.s4 1983009808
          %v1875 = vunpack.c.0.s8 %v1874
          %v1876 = vlaneseq
          %v1877 = vshrl.u32 %v1876, 7
          %v1878 = vsub.s32 %v1875, %v1877
          %v1879 = vrot.slane %v1872, %v1878
          %v1880 = vcombine.low %v1705, %v1712
          %v1882 = vunpack.c.l.s4 1983009808
          %v1883 = vunpack.c.0.s8 %v1882
          %v1884 = vlaneseq
          %v1885 = vshrl.u32 %v1884, 7
          %v1886 = vsub.s32 %v1883, %v1885
          %v1887 = vrot.slane %v1880, %v1886
          %v1888 = vcombine.low %v1715, %v1716
          %v1890 = vunpack.c.l.s4 1983009808
          %v1891 = vunpack.c.0.s8 %v1890
          %v1892 = vlaneseq
          %v1893 = vshrl.u32 %v1892, 7
          %v1894 = vsub.s32 %v1891, %v1893
          %v1895 = vrot.slane %v1888, %v1894
          %v1896 = vcombine.low %v1871, %v1879
          %v1898 = vunpack.c.l.s4 1934713408
          %v1899 = vunpack.c.0.s8 %v1898
          %v1900 = vlaneseq
          %v1901 = vshrl.u32 %v1900, 7
          %v1902 = vsub.s32 %v1899, %v1901
          %v1903 = vrot.slane %v1896, %v1902
          %v1904 = vcombine.low %v1887, %v1895
          %v1906 = vunpack.c.l.s4 1934713408
          %v1907 = vunpack.c.0.s8 %v1906
          %v1908 = vlaneseq
          %v1909 = vshrl.u32 %v1908, 7
          %v1910 = vsub.s32 %v1907, %v1909
          %v1911 = vrot.slane %v1904, %v1910
          %v1912 = vcombine.low %v1903, %v1911
          %v1913 = vcombine.low %v1739, %v1746
          %v1915 = vunpack.c.l.s4 1983009808
          %v1916 = vunpack.c.0.s8 %v1915
          %v1917 = vlaneseq
          %v1918 = vshrl.u32 %v1917, 7
          %v1919 = vsub.s32 %v1916, %v1918
          %v1920 = vrot.slane %v1913, %v1919
          %v1921 = vcombine.low %v1762, %v1763
          %v1923 = vunpack.c.l.s4 1983009808
          %v1924 = vunpack.c.0.s8 %v1923
          %v1925 = vlaneseq
          %v1926 = vshrl.u32 %v1925, 7
          %v1927 = vsub.s32 %v1924, %v1926
          %v1928 = vrot.slane %v1921, %v1927
          %v1929 = vcombine.low %v1754, %v1761
          %v1931 = vunpack.c.l.s4 1983009808
          %v1932 = vunpack.c.0.s8 %v1931
          %v1933 = vlaneseq
          %v1934 = vshrl.u32 %v1933, 7
          %v1935 = vsub.s32 %v1932, %v1934
          %v1936 = vrot.slane %v1929, %v1935
          %v1937 = vcombine.low %v1764, %v1765
          %v1939 = vunpack.c.l.s4 1983009808
          %v1940 = vunpack.c.0.s8 %v1939
          %v1941 = vlaneseq
          %v1942 = vshrl.u32 %v1941, 7
          %v1943 = vsub.s32 %v1940, %v1942
          %v1944 = vrot.slane %v1937, %v1943
          %v1945 = vcombine.low %v1920, %v1928
          %v1947 = vunpack.c.l.s4 1934713408
          %v1948 = vunpack.c.0.s8 %v1947
          %v1949 = vlaneseq
          %v1950 = vshrl.u32 %v1949, 7
          %v1951 = vsub.s32 %v1948, %v1950
          %v1952 = vrot.slane %v1945, %v1951
          %v1953 = vcombine.low %v1936, %v1944
          %v1955 = vunpack.c.l.s4 1934713408
          %v1956 = vunpack.c.0.s8 %v1955
          %v1957 = vlaneseq
          %v1958 = vshrl.u32 %v1957, 7
          %v1959 = vsub.s32 %v1956, %v1958
          %v1960 = vrot.slane %v1953, %v1959
          %v1961 = vcombine.low %v1952, %v1960
          %v1962 = vcombine.low %v1788, %v1795
          %v1964 = vunpack.c.l.s4 1983009808
          %v1965 = vunpack.c.0.s8 %v1964
          %v1966 = vlaneseq
          %v1967 = vshrl.u32 %v1966, 7
          %v1968 = vsub.s32 %v1965, %v1967
          %v1969 = vrot.slane %v1962, %v1968
          %v1970 = vcombine.low %v1811, %v1812
          %v1972 = vunpack.c.l.s4 1983009808
          %v1973 = vunpack.c.0.s8 %v1972
          %v1974 = vlaneseq
          %v1975 = vshrl.u32 %v1974, 7
          %v1976 = vsub.s32 %v1973, %v1975
          %v1977 = vrot.slane %v1970, %v1976
          %v1978 = vcombine.low %v1803, %v1810
          %v1980 = vunpack.c.l.s4 1983009808
          %v1981 = vunpack.c.0.s8 %v1980
          %v1982 = vlaneseq
          %v1983 = vshrl.u32 %v1982, 7
          %v1984 = vsub.s32 %v1981, %v1983
          %v1985 = vrot.slane %v1978, %v1984
          %v1986 = vcombine.low %v1813, %v1814
          %v1988 = vunpack.c.l.s4 1983009808
          %v1989 = vunpack.c.0.s8 %v1988
          %v1990 = vlaneseq
          %v1991 = vshrl.u32 %v1990, 7
          %v1992 = vsub.s32 %v1989, %v1991
          %v1993 = vrot.slane %v1986, %v1992
          %v1994 = vcombine.low %v1969, %v1977
          %v1996 = vunpack.c.l.s4 1934713408
          %v1997 = vunpack.c.0.s8 %v1996
          %v1998 = vlaneseq
          %v1999 = vshrl.u32 %v1998, 7
          %v2000 = vsub.s32 %v1997, %v1999
          %v2001 = vrot.slane %v1994, %v2000
          %v2002 = vcombine.low %v1985, %v1993
          %v2004 = vunpack.c.l.s4 1934713408
          %v2005 = vunpack.c.0.s8 %v2004
          %v2006 = vlaneseq
          %v2007 = vshrl.u32 %v2006, 7
          %v2008 = vsub.s32 %v2005, %v2007
          %v2009 = vrot.slane %v2002, %v2008
          %v2010 = vcombine.low %v2001, %v2009
          %v2011 = vcombine.low %v1837, %v1844
          %v2013 = vunpack.c.l.s4 1983009808
          %v2014 = vunpack.c.0.s8 %v2013
          %v2015 = vlaneseq
          %v2016 = vshrl.u32 %v2015, 7
          %v2017 = vsub.s32 %v2014, %v2016
          %v2018 = vrot.slane %v2011, %v2017
          %v2019 = vcombine.low %v1860, %v1861
          %v2021 = vunpack.c.l.s4 1983009808
          %v2022 = vunpack.c.0.s8 %v2021
          %v2023 = vlaneseq
          %v2024 = vshrl.u32 %v2023, 7
          %v2025 = vsub.s32 %v2022, %v2024
          %v2026 = vrot.slane %v2019, %v2025
          %v2027 = vcombine.low %v1852, %v1859
          %v2029 = vunpack.c.l.s4 1983009808
          %v2030 = vunpack.c.0.s8 %v2029
          %v2031 = vlaneseq
          %v2032 = vshrl.u32 %v2031, 7
          %v2033 = vsub.s32 %v2030, %v2032
          %v2034 = vrot.slane %v2027, %v2033
          %v2035 = vcombine.low %v1862, %v1863
          %v2037 = vunpack.c.l.s4 1983009808
          %v2038 = vunpack.c.0.s8 %v2037
          %v2039 = vlaneseq
          %v2040 = vshrl.u32 %v2039, 7
          %v2041 = vsub.s32 %v2038, %v2040
          %v2042 = vrot.slane %v2035, %v2041
          %v2043 = vcombine.low %v2018, %v2026
          %v2045 = vunpack.c.l.s4 1934713408
          %v2046 = vunpack.c.0.s8 %v2045
          %v2047 = vlaneseq
          %v2048 = vshrl.u32 %v2047, 7
          %v2049 = vsub.s32 %v2046, %v2048
          %v2050 = vrot.slane %v2043, %v2049
          %v2051 = vcombine.low %v2034, %v2042
          %v2053 = vunpack.c.l.s4 1934713408
          %v2054 = vunpack.c.0.s8 %v2053
          %v2055 = vlaneseq
          %v2056 = vshrl.u32 %v2055, 7
          %v2057 = vsub.s32 %v2054, %v2056
          %v2058 = vrot.slane %v2051, %v2057
          %v2059 = vcombine.low %v2050, %v2058
          %v2062 = vpack.i.b16 %v1961, %v1912
          %v2064 = vshrl.u32 %v1912, 16
          %v2065 = vshrl.u32 %v1961, 16
          %v2066 = vpack.i.b16 %v2065, %v2064
          %v2070 = vpack.i.b16 %v2059, %v2010
          %v2072 = vshrl.u32 %v2010, 16
          %v2073 = vshrl.u32 %v2059, 16
          %v2074 = vpack.i.b16 %v2073, %v2072
          %v2076 = vld [vmem:[%s5] sm:$0xff]
          %v2077 = vld [vmem:[%s5 + $0x8] sm:$0xff]
          %v2078 = vld [vmem:[%s5 + $0x10] sm:$0xff]
          %v2079 = vld [vmem:[%s5 + $0x18] sm:$0xff]
          %v2080 = vld [vmem:[%s5 + $0x20] sm:$0xff]
          %v2081 = vld [vmem:[%s5 + $0x28] sm:$0xff]
          %v2082 = vld [vmem:[%s5 + $0x30] sm:$0xff]
          %v2083 = vld [vmem:[%s5 + $0x38] sm:$0xff]
          %v2084 = vld [vmem:[%s5 + $0x40] sm:$0xff]
          %v2085 = vld [vmem:[%s5 + $0x48] sm:$0xff]
          %v2086 = vld [vmem:[%s5 + $0x50] sm:$0xff]
          %v2087 = vld [vmem:[%s5 + $0x58] sm:$0xff]
          %v2088 = vld [vmem:[%s5 + $0x60] sm:$0xff]
          %v2089 = vld [vmem:[%s5 + $0x68] sm:$0xff]
          %v2090 = vld [vmem:[%s5 + $0x70] sm:$0xff]
          %v2091 = vld [vmem:[%s5 + $0x78] sm:$0xff]
          %v2092 = vld [vmem:[%s5 + $0x80] sm:$0xff]
          %v2093 = vld [vmem:[%s5 + $0x88] sm:$0xff]
          %v2094 = vld [vmem:[%s5 + $0x90] sm:$0xff]
          %v2095 = vld [vmem:[%s5 + $0x98] sm:$0xff]
          %v2096 = vld [vmem:[%s5 + $0xa0] sm:$0xff]
          %v2097 = vld [vmem:[%s5 + $0xa8] sm:$0xff]
          %v2098 = vld [vmem:[%s5 + $0xb0] sm:$0xff]
          %v2099 = vld [vmem:[%s5 + $0xb8] sm:$0xff]
          %v2100 = vld [vmem:[%s5 + $0xc0] sm:$0xff]
          %v2101 = vld [vmem:[%s5 + $0xc8] sm:$0xff]
          %v2102 = vld [vmem:[%s5 + $0xd0] sm:$0xff]
          %v2103 = vld [vmem:[%s5 + $0xd8] sm:$0xff]
          %v2104 = vld [vmem:[%s5 + $0xe0] sm:$0xff]
          %v2105 = vld [vmem:[%s5 + $0xe8] sm:$0xff]
          %v2106 = vld [vmem:[%s5 + $0xf0] sm:$0xff]
          %v2107 = vld [vmem:[%s5 + $0xf8] sm:$0xff]
          %v2140 = vunpack.c.l.b16 %v2076
          %v2141 = vunpack.c.h.b16 %v2076
          %v2142 = vunpack.c.l.b16 %v2077
          %v2143 = vunpack.c.h.b16 %v2077
          %v2144 = vunpack.c.l.b16 %v2078
          %v2145 = vunpack.c.h.b16 %v2078
          %v2146 = vunpack.c.l.b16 %v2079
          %v2147 = vunpack.c.h.b16 %v2079
          %v2148 = vunpack.c.l.b16 %v2080
          %v2149 = vunpack.c.h.b16 %v2080
          %v2150 = vunpack.c.l.b16 %v2081
          %v2151 = vunpack.c.h.b16 %v2081
          %v2152 = vunpack.c.l.b16 %v2082
          %v2153 = vunpack.c.h.b16 %v2082
          %v2154 = vunpack.c.l.b16 %v2083
          %v2155 = vunpack.c.h.b16 %v2083
          %v2156 = vunpack.c.l.b16 %v2084
          %v2157 = vunpack.c.h.b16 %v2084
          %v2158 = vunpack.c.l.b16 %v2085
          %v2159 = vunpack.c.h.b16 %v2085
          %v2160 = vunpack.c.l.b16 %v2086
          %v2161 = vunpack.c.h.b16 %v2086
          %v2162 = vunpack.c.l.b16 %v2087
          %v2163 = vunpack.c.h.b16 %v2087
          %v2164 = vunpack.c.l.b16 %v2088
          %v2165 = vunpack.c.h.b16 %v2088
          %v2166 = vunpack.c.l.b16 %v2089
          %v2167 = vunpack.c.h.b16 %v2089
          %v2168 = vunpack.c.l.b16 %v2090
          %v2169 = vunpack.c.h.b16 %v2090
          %v2170 = vunpack.c.l.b16 %v2091
          %v2171 = vunpack.c.h.b16 %v2091
          %v2172 = vunpack.c.l.b16 %v2092
          %v2173 = vunpack.c.h.b16 %v2092
          %v2174 = vunpack.c.l.b16 %v2093
          %v2175 = vunpack.c.h.b16 %v2093
          %v2176 = vunpack.c.l.b16 %v2094
          %v2177 = vunpack.c.h.b16 %v2094
          %v2178 = vunpack.c.l.b16 %v2095
          %v2179 = vunpack.c.h.b16 %v2095
          %v2180 = vunpack.c.l.b16 %v2096
          %v2181 = vunpack.c.h.b16 %v2096
          %v2182 = vunpack.c.l.b16 %v2097
          %v2183 = vunpack.c.h.b16 %v2097
          %v2184 = vunpack.c.l.b16 %v2098
          %v2185 = vunpack.c.h.b16 %v2098
          %v2186 = vunpack.c.l.b16 %v2099
          %v2187 = vunpack.c.h.b16 %v2099
          %v2188 = vunpack.c.l.b16 %v2100
          %v2189 = vunpack.c.h.b16 %v2100
          %v2190 = vunpack.c.l.b16 %v2101
          %v2191 = vunpack.c.h.b16 %v2101
          %v2192 = vunpack.c.l.b16 %v2102
          %v2193 = vunpack.c.h.b16 %v2102
          %v2194 = vunpack.c.l.b16 %v2103
          %v2195 = vunpack.c.h.b16 %v2103
          %v2196 = vunpack.c.l.b16 %v2104
          %v2197 = vunpack.c.h.b16 %v2104
          %v2198 = vunpack.c.l.b16 %v2105
          %v2199 = vunpack.c.h.b16 %v2105
          %v2200 = vunpack.c.l.b16 %v2106
          %v2201 = vunpack.c.h.b16 %v2106
          %v2202 = vunpack.c.l.b16 %v2107
          %v2203 = vunpack.c.h.b16 %v2107
          %v2204 = vpack.c.b16 %v2142, %v2140
          %v2205 = vpack.c.b16 %v2143, %v2141
          %v2206 = vpack.c.b16 %v2146, %v2144
          %v2207 = vpack.c.b16 %v2147, %v2145
          %v2208 = vpack.c.b16 %v2150, %v2148
          %v2209 = vpack.c.b16 %v2151, %v2149
          %v2210 = vpack.c.b16 %v2154, %v2152
          %v2211 = vpack.c.b16 %v2155, %v2153
          %v2212 = vpack.c.b16 %v2158, %v2156
          %v2213 = vpack.c.b16 %v2159, %v2157
          %v2214 = vpack.c.b16 %v2162, %v2160
          %v2215 = vpack.c.b16 %v2163, %v2161
          %v2216 = vpack.c.b16 %v2166, %v2164
          %v2217 = vpack.c.b16 %v2167, %v2165
          %v2218 = vpack.c.b16 %v2170, %v2168
          %v2219 = vpack.c.b16 %v2171, %v2169
          %v2220 = vpack.c.b16 %v2174, %v2172
          %v2221 = vpack.c.b16 %v2175, %v2173
          %v2222 = vpack.c.b16 %v2178, %v2176
          %v2223 = vpack.c.b16 %v2179, %v2177
          %v2224 = vpack.c.b16 %v2182, %v2180
          %v2225 = vpack.c.b16 %v2183, %v2181
          %v2226 = vpack.c.b16 %v2186, %v2184
          %v2227 = vpack.c.b16 %v2187, %v2185
          %v2228 = vpack.c.b16 %v2190, %v2188
          %v2229 = vpack.c.b16 %v2191, %v2189
          %v2230 = vpack.c.b16 %v2194, %v2192
          %v2231 = vpack.c.b16 %v2195, %v2193
          %v2232 = vpack.c.b16 %v2198, %v2196
          %v2233 = vpack.c.b16 %v2199, %v2197
          %v2234 = vpack.c.b16 %v2202, %v2200
          %v2235 = vpack.c.b16 %v2203, %v2201
          %2268 = vmatprep.subr.bf16.mxu0 %v2219
          %2269 = vmatpush1.bf16.msra.mxu0 %v2218
          %2270 = vmatprep.subr.bf16.mxu0 %v2217
          %2271 = vmatpush1.bf16.msra.mxu0 %v2216
          %2272 = vmatprep.subr.bf16.mxu0 %v2215
          %2273 = vmatpush1.bf16.msra.mxu0 %v2214
          %2274 = vmatprep.subr.bf16.mxu0 %v2213
          %2275 = vmatpush1.bf16.msra.mxu0 %v2212
          %2276 = vmatprep.subr.bf16.mxu0 %v2211
          %2277 = vmatpush1.bf16.msra.mxu0 %v2210
          %2278 = vmatprep.subr.bf16.mxu0 %v2209
          %2279 = vmatpush1.bf16.msra.mxu0 %v2208
          %2280 = vmatprep.subr.bf16.mxu0 %v2207
          %2281 = vmatpush1.bf16.msra.mxu0 %v2206
          %2282 = vmatprep.subr.bf16.mxu0 %v2205
          %2283 = vmatpush1.bf16.msra.mxu0 %v2204
          %2284 = vmatprep.subr.bf16.mxu0 %v2235
          %2285 = vmatpush2.bf16.msra.mxu0 %v2234
          %2286 = vmatprep.subr.bf16.mxu0 %v2233
          %2287 = vmatpush2.bf16.msra.mxu0 %v2232
          %2288 = vmatprep.subr.bf16.mxu0 %v2231
          %2289 = vmatpush2.bf16.msra.mxu0 %v2230
          %2290 = vmatprep.subr.bf16.mxu0 %v2229
          %2291 = vmatpush2.bf16.msra.mxu0 %v2228
          %2292 = vmatprep.subr.bf16.mxu0 %v2227
          %2293 = vmatpush2.bf16.msra.mxu0 %v2226
          %2294 = vmatprep.subr.bf16.mxu0 %v2225
          %2295 = vmatpush2.bf16.msra.mxu0 %v2224
          %2296 = vmatprep.subr.bf16.mxu0 %v2223
          %2297 = vmatpush2.bf16.msra.mxu0 %v2222
          %2298 = vmatprep.subr.bf16.mxu0 %v2221
          %2299 = vmatpush2.bf16.msra.mxu0 %v2220
          %2300 = vmatprep.mubr.bf16.mxu0 %v2066
          %2301 = vmatmul.mubr.bf16.gmra.mxu0 %v2062
          %v2302 = vpop.f32.mrf.mxu0
          %v2303 = vadd.f32 0.0, %v2302
          %v2304 = vpop.f32.mrf.mxu0
          %v2305 = vadd.f32 0.0, %v2304
          %v2306 = vpop.f32.mrf.mxu0
          %v2307 = vadd.f32 0.0, %v2306
          %v2308 = vpop.f32.mrf.mxu0
          %v2309 = vadd.f32 0.0, %v2308
          %2310 = vmatprep.mubr.bf16.mxu0 %v2074
          %2311 = vmatmul.mubr.bf16.gmra.mxu0 %v2070
          %v2312 = vpop.f32.mrf.mxu0
          %v2313 = vadd.f32 0.0, %v2312
          %v2314 = vpop.f32.mrf.mxu0
          %v2315 = vadd.f32 0.0, %v2314
          %v2316 = vpop.f32.mrf.mxu0
          %v2317 = vadd.f32 0.0, %v2316
          %v2318 = vpop.f32.mrf.mxu0
          %v2319 = vadd.f32 0.0, %v2318
          %2320 = vdwg.mxu0
          %2321 = vst [vmem:[%s500] sm:$0xff] %v2303
          %2322 = vst [vmem:[%s500 + $0x8] sm:$0xff] %v2305
          %2323 = vst [vmem:[%s500 + $0x10] sm:$0xff] %v2307
          %2324 = vst [vmem:[%s500 + $0x18] sm:$0xff] %v2309
          %2325 = vst [vmem:[%s500 + $0x20] sm:$0xff] %v2313
          %2326 = vst [vmem:[%s500 + $0x28] sm:$0xff] %v2315
          %2327 = vst [vmem:[%s500 + $0x30] sm:$0xff] %v2317
          %2328 = vst [vmem:[%s500 + $0x38] sm:$0xff] %v2319
        $region175: #{self_attention_forward.3} parent=146 // pred_fallthru
          _
        %s2329 = sand.u32 %s165, 1
        %s2330 = scalar_lea.sflag [#allocation12], %s2329
        %s2331 = sand.u32 %s165, 1
        %s2332 = smul.addr %s2331, 64
        %s2333 = scalar_lea.vmem [#allocation11], %s2332
        // Predicated region
        $region176: #{self_attention_forward.3} parent=146 // pred_check
          %p2334 = pneg %p175
        $region177: #{self_attention_forward.3} parent=146 // pred_check_branch
          %2336 = sbr.rel (%p2334) target = $region179
        $region178: #{self_attention_forward.3} parent=146 // pred_region
          %s2337 = sld [smem:[#allocation6 + %s35]]
          %s2338 = smul.u32 4, %s2337
          %s2340 = ssub.s32 1024, 1024
          %2341 = vsyncadd %s2330, %s2340
          %s2342 = smul.addr %s2338, 2
          %s2343 = smul.addr %s34, 16
          %s2344 = sadd.s32 %s2342, %s2343
          %s2345 = smul.addr %s2344, 128
          %s2346 = scalar_lea.hbm %s6, %s2345
          %s2347 = sshll.u32 %s2333, 4
          %s2348 = int_to_ptr.vmem [resolvable:$true] %s2347
          %2353 = dma.vmem_to_hbm [thread:$0]  %s2348, 1024, %s2346, %s2330, 256, 256, 16
        $region179: #{self_attention_forward.3} parent=146 // pred_fallthru
          _
      $region147: #{self_attention_forward.3} parent=5 // pred_fallthru
        _
      %p2354 = scmp.le.s32.totalorder 2, %s25
      // Predicated region
      $region180: #{self_attention_forward.3} parent=5 // pred_check
        %p2355 = pneg %p2354
      $region181: #{self_attention_forward.3} parent=5 // pred_check_branch
        %2357 = sbr.rel (%p2355) target = $region183
      $region182: #{self_attention_forward.3} parent=5 // pred_region
        %s2358 = ssub.s32 %s25, 2
        // Predicated region
        $region184: #{self_attention_forward.3} parent=182 // pred_check
          %p2359 = pneg %p181
        $region185: #{self_attention_forward.3} parent=182 // pred_check_branch
          %2361 = sbr.rel (%p2359) target = $region187
        $region186: #{self_attention_forward.3} parent=182 // pred_region
          %s2362 = sand.u32 %s166, 1
          %s2363 = scalar_lea.sflag [#allocation12], %s2362
          %s2364 = sand.u32 %s166, 1
          %s2365 = smul.addr %s2364, 64
          %s2366 = scalar_lea.vmem [#allocation11], %s2365
          %2367 = dma.done %s2363, 1024
        $region187: #{self_attention_forward.3} parent=182 // pred_fallthru
          _
      $region183: #{self_attention_forward.3} parent=5 // pred_fallthru
        _
    $region6: #{self_attention_forward.3} parent=1 // loop_footer
      %s29 = sadd.s32 1, %s25
    $region7: #{self_attention_forward.3} parent=1 // loop_footer_branch
      %24 = sbr.rel target = $region3
    $region8: #{self_attention_forward.3} parent=1 // loop_exit
      _
    %2368 = vsyncpa [#allocation12], 1
    %s2369 = scalar_lea.sflag [#allocation12], 1
    %2370 = vsyncpa %s2369, 1

</llo_original>
